<compile_context>
chip_gen: v5e
topology: v5e:2x2
jax: 0.10.0
libtpu: 0.0.40
codegen_flags: <defaults>
</compile_context>

<pallas_src>
import functools

import numpy as np
import jax
import jax.numpy as jnp
from jax.experimental import pallas as pl
from jax.experimental.pallas import tpu as pltpu


# ----------------------------------------------------------------------------
# Fused epilogues
# ----------------------------------------------------------------------------
def _epi_sig_mul(y, aux):
    # sigmoid(y) * aux   (aux = [hidden | ones]  ->  [reset_hidden | z])
    return pl.reciprocal(1.0 + jnp.exp(-y), approx=True) * aux


def _epi_gru_out(y, h, z):
    # (1 - z) * tanh(y) + z * h
    return (1.0 - z) * jnp.tanh(y) + z * h


_EPILOGUES = {
    "sig_mul": (_epi_sig_mul, 1),
    "gru_out": (_epi_gru_out, 2),
}


# ----------------------------------------------------------------------------
# Pallas GEMM kernels: acc = col_x @ Wx + col_h @ Wh  (+ bias, + epilogue)
# ----------------------------------------------------------------------------
def _make_kernel(epilogue, n_aux, single_k):
    if single_k:
        def kernel(*refs):
            ax, bx, ah, bh, bias = refs[:5]
            aux = refs[5:5 + n_aux]
            o_ref = refs[5 + n_aux]
            acc = jnp.dot(ax[...], bx[...], preferred_element_type=jnp.float32)
            acc = acc + jnp.dot(ah[...], bh[...],
                                preferred_element_type=jnp.float32)
            y = epilogue(acc + bias[...], *[r[...] for r in aux])
            o_ref[...] = y.astype(o_ref.dtype)
    else:
        def kernel(*refs):
            ax, bx, ah, bh, bias = refs[:5]
            aux = refs[5:5 + n_aux]
            o_ref = refs[5 + n_aux]
            acc_ref = refs[6 + n_aux]

            @pl.when(pl.program_id(2) == 0)
            def _():
                # x-part dot is done once (its blocks stay resident across k).
                acc_ref[...] = jnp.dot(ax[...], bx[...],
                                       preferred_element_type=jnp.float32)

            acc_ref[...] += jnp.dot(ah[...], bh[...],
                                    preferred_element_type=jnp.float32)

            @pl.when(pl.program_id(2) == pl.num_programs(2) - 1)
            def _():
                y = epilogue(acc_ref[...] + bias[...], *[r[...] for r in aux])
                o_ref[...] = y.astype(o_ref.dtype)
    return kernel


_KERNEL_CACHE = {}


def _get_kernel(name, single_k):
    key = (name, single_k)
    if key not in _KERNEL_CACHE:
        epi, n_aux = _EPILOGUES[name]
        _KERNEL_CACHE[key] = _make_kernel(epi, n_aux, single_k)
    return _KERNEL_CACHE[key]


def _rup(x, m):
    return ((x + m - 1) // m) * m


def fused_gru_gemm(ax, bx, ah, bh, bias, aux, epilogue):
    """out = epilogue(ax @ bx + ah @ bh + bias, *aux).

    ax: [M, Kx] bf16, bx: [Kx, N], ah: [M, Kh] bf16, bh: [Kh, N],
    bias: [N], aux: tuple of [M, N] f32 arrays.
    MXU inputs are bf16; accumulation and epilogue are f32.
    """
    M, Kx = ax.shape
    _, N = bx.shape
    Kh = ah.shape[1]
    n_aux = len(aux)

    # --- adaptive tiling -----------------------------------------------------
    Mp = _rup(M, 8)
    TM = Mp if Mp <= 256 else 256          # keep a parallel M axis when M is big
    Mp = _rup(M, TM)

    Np = _rup(N, 128)
    TN = 128 if Np <= 128 else 256         # lane-dense stores; wider N on big layers
    Np = _rup(N, TN)

    Kxp = _rup(Kx, 128)                    # x-part contraction stays untiled
    Khp = _rup(Kh, 128)
    single_k = Khp <= 512                  # single-K fast path when Kh fits
    if single_k:
        TKh = Khp
    else:
        TKh = 512
        Khp = _rup(Kh, TKh)

    # --- pad + cast ----------------------------------------------------------
    axp = jnp.pad(ax, ((0, Mp - M), (0, Kxp - Kx))).astype(jnp.bfloat16)
    ahp = jnp.pad(ah, ((0, Mp - M), (0, Khp - Kh))).astype(jnp.bfloat16)
    bxp = jnp.pad(bx, ((0, Kxp - Kx), (0, Np - N))).astype(jnp.bfloat16)
    bhp = jnp.pad(bh, ((0, Khp - Kh), (0, Np - N))).astype(jnp.bfloat16)
    bp = jnp.pad(bias.astype(jnp.float32), (0, Np - N)).reshape(1, Np)
    auxp = [jnp.pad(t.astype(jnp.float32), ((0, Mp - M), (0, Np - N)))
            for t in aux]

    kernel = _get_kernel(epilogue, single_k)

    if single_k:
        grid = (Mp // TM, Np // TN)
        in_specs = ([pl.BlockSpec((TM, Kxp), lambda i, j: (i, 0)),
                     pl.BlockSpec((Kxp, TN), lambda i, j: (0, j)),
                     pl.BlockSpec((TM, TKh), lambda i, j: (i, 0)),
                     pl.BlockSpec((TKh, TN), lambda i, j: (0, j)),
                     pl.BlockSpec((1, TN), lambda i, j: (0, j))]
                    + [pl.BlockSpec((TM, TN), lambda i, j: (i, j))] * n_aux)
        out_spec = pl.BlockSpec((TM, TN), lambda i, j: (i, j))
        scratch = []
        sem = ("parallel", "parallel")
    else:
        grid = (Mp // TM, Np // TN, Khp // TKh)
        in_specs = ([pl.BlockSpec((TM, Kxp), lambda i, j, k: (i, 0)),
                     pl.BlockSpec((Kxp, TN), lambda i, j, k: (0, j)),
                     pl.BlockSpec((TM, TKh), lambda i, j, k: (i, k)),
                     pl.BlockSpec((TKh, TN), lambda i, j, k: (k, j)),
                     pl.BlockSpec((1, TN), lambda i, j, k: (0, j))]
                    + [pl.BlockSpec((TM, TN), lambda i, j, k: (i, j))] * n_aux)
        out_spec = pl.BlockSpec((TM, TN), lambda i, j, k: (i, j))
        scratch = [pltpu.VMEM((TM, TN), jnp.float32)]
        sem = ("parallel", "parallel", "arbitrary")

    out = pl.pallas_call(
        kernel,
        out_shape=jax.ShapeDtypeStruct((Mp, Np), jnp.float32),
        grid_spec=pltpu.PrefetchScalarGridSpec(
            num_scalar_prefetch=0,
            grid=grid,
            in_specs=in_specs,
            out_specs=out_spec,
            scratch_shapes=scratch),
        compiler_params=pltpu.CompilerParams(dimension_semantics=sem),
    )(axp, bxp, ahp, bhp, bp, *auxp)
    return out[:M, :N]


# ----------------------------------------------------------------------------
# im2col glue on NHWC input (stride 1, padding = k // 2); column order is
# (channel, tap_i, tap_j) so it matches PyTorch weight.reshape(Cout, Cin*k*k).
# ----------------------------------------------------------------------------
def im2col_nhwc(x, k, pad):
    B, H, W, C = x.shape
    xp = jnp.pad(x, ((0, 0), (pad, pad), (pad, pad), (0, 0)))
    Ho = H + 2 * pad - k + 1
    Wo = W + 2 * pad - k + 1
    cols = [xp[:, i:i + Ho, j:j + Wo, :] for i in range(k) for j in range(k)]
    p = jnp.stack(cols, axis=-1)                      # [B, Ho, Wo, C, k*k]
    return p.reshape(B * Ho * Wo, C * k * k)


# ----------------------------------------------------------------------------
# BiConvGRUCell forward
# ----------------------------------------------------------------------------
@functools.partial(jax.jit, static_argnames=("kernel_size",))
def biconvgru_cell(x, hidden, params, kernel_size=3):
    """x: [B, Cin, H, W], hidden: [B, Ch, H, W] -> new hidden [B, Ch, H, W]."""
    B, Cin, H, W = x.shape
    Ch = hidden.shape[1]
    k = kernel_size
    pad = k // 2
    M = B * H * W

    x_nhwc = x.transpose(0, 2, 3, 1).astype(jnp.bfloat16)      # [B,H,W,Cin]
    h_nhwc4 = hidden.transpose(0, 2, 3, 1)                     # [B,H,W,Ch]
    h_flat = h_nhwc4.reshape(M, Ch).astype(jnp.float32)        # gating in f32

    col_x = im2col_nhwc(x_nhwc, k, pad)                        # [M, Cin*k*k] bf16
    col_h = im2col_nhwc(h_nhwc4.astype(jnp.bfloat16), k, pad)  # [M, Ch*k*k] bf16

    # Split each conv weight into x-part and h-part (conv(cat(x,h),W) =
    # conv(x, W[:, :Cin]) + conv(h, W[:, Cin:])).
    def split_w(w):
        wx = w[:, :Cin].reshape(Ch, Cin * k * k).T              # [Cin*k*k, Ch]
        wh = w[:, Cin:].reshape(Ch, Ch * k * k).T               # [Ch*k*k, Ch]
        return wx, wh

    wrx, wrh = split_w(params["wr"])
    wzx, wzh = split_w(params["wz"])
    wox, woh = split_w(params["wo"])

    # --- fused reset+update gates: one GEMM with N = 2*Ch -------------------
    bx_rz = jnp.concatenate([wrx, wzx], axis=1)                 # [Cin*k*k, 2Ch]
    bh_rz = jnp.concatenate([wrh, wzh], axis=1)                 # [Ch*k*k, 2Ch]
    b_rz = jnp.concatenate([params["br"], params["bz"]])
    aux_rz = jnp.concatenate([h_flat, jnp.ones_like(h_flat)], axis=1)   # [M, 2Ch]
    gz = fused_gru_gemm(col_x, bx_rz, col_h, bh_rz, b_rz, (aux_rz,), "sig_mul")
    reset_hidden = gz[:, :Ch]                                   # sigmoid(r) * h
    z = gz[:, Ch:]                                              # sigmoid(z)

    # --- output gate with fused GRU gating epilogue --------------------------
    rh_nhwc = reset_hidden.reshape(B, H, W, Ch).astype(jnp.bfloat16)
    col_rh = im2col_nhwc(rh_nhwc, k, pad)                       # [M, Ch*k*k] bf16
    new_h = fused_gru_gemm(col_x, wox, col_rh, woh, params["bo"],
                           (h_flat, z), "gru_out")              # [M, Ch]
    return new_h.reshape(B, H, W, Ch).transpose(0, 3, 1, 2)


def biconvgru_cell_forward(x, hidden, params, kernel_size=3):
    if hidden is None:                                          # zeros init, like PyTorch
        B, _, H, W = x.shape
        Ch = params["wr"].shape[0]
        hidden = jnp.zeros((B, Ch, H, W), x.dtype)
    return biconvgru_cell(x, hidden, params, kernel_size=kernel_size)


# ----------------------------------------------------------------------------
# Parameter init (deterministic, synthetic)
# ----------------------------------------------------------------------------
def init_biconvgru_cell(key, input_channels, hidden_channels, kernel_size=3):
    cin = input_channels + hidden_channels
    ks = jax.random.split(key, 6)

    def conv_w(kk):
        fan_out = hidden_channels * kernel_size * kernel_size
        return jax.random.normal(
            kk, (hidden_channels, cin, kernel_size, kernel_size),
            jnp.float32) * np.sqrt(2.0 / fan_out)

    def bias(kk):
        return jax.random.normal(kk, (hidden_channels,), jnp.float32) * 0.1

    return {
        "wr": conv_w(ks[0]), "br": bias(ks[1]),
        "wz": conv_w(ks[2]), "bz": bias(ks[3]),
        "wo": conv_w(ks[4]), "bo": bias(ks[5]),
    }


# ----------------------------------------------------------------------------
# Plain-XLA f32 reference (correctness sanity check)
# ----------------------------------------------------------------------------
def _ref_conv(x, w, b, pad):
    y = jax.lax.conv_general_dilated(
        x, w, window_strides=(1, 1), padding=[(pad, pad), (pad, pad)],
        dimension_numbers=("NCHW", "OIHW", "NCHW"),
        precision=jax.lax.Precision.HIGHEST)
    return y + b[None, :, None, None]


def ref_forward(x, hidden, params, kernel_size=3):
    pad = kernel_size // 2
    inp = jnp.concatenate([x, hidden], axis=1)
    r = jax.nn.sigmoid(_ref_conv(inp, params["wr"], params["br"], pad))
    z = jax.nn.sigmoid(_ref_conv(inp, params["wz"], params["bz"], pad))
    o = jnp.tanh(_ref_conv(jnp.concatenate([x, r * hidden], axis=1),
                           params["wo"], params["bo"], pad))
    return (1.0 - z) * o + z * hidden


# ----------------------------------------------------------------------------
if __name__ == "__main__":
    B, Cin, Ch, H, W = 2, 4, 32, 16, 16
    key = jax.random.PRNGKey(0)
    kx, kh, kp, kp2 = jax.random.split(key, 4)

    x = jax.random.normal(kx, (B, Cin, H, W), jnp.float32)
    hidden = jax.random.normal(kh, (B, Ch, H, W), jnp.float32)
    params = init_biconvgru_cell(kp, Cin, Ch, 3)

    # main path (single-K-step Pallas kernels)
    new_h = jax.block_until_ready(biconvgru_cell_forward(x, hidden, params))
    assert new_h.shape == (B, Ch, H, W), new_h.shape
    assert bool(jnp.all(jnp.isfinite(new_h)))

    ref = ref_forward(x, hidden, params)
    err = float(jnp.max(jnp.abs(new_h - ref)))
    assert err < 7.5e-2, f"max abs err vs f32 reference = {err}"

    # hidden=None path (zeros-initialized hidden, as in the PyTorch module)
    new_h0 = jax.block_until_ready(biconvgru_cell_forward(x, None, params))
    assert new_h0.shape == (B, Ch, H, W)
    assert bool(jnp.all(jnp.isfinite(new_h0)))

    # wider hidden exercises the multi-K accumulator kernel path (Kh > 512)
    B2, Ch2, H2, W2 = 1, 64, 8, 8
    x2 = jax.random.normal(kx, (B2, Cin, H2, W2), jnp.float32)
    h2 = jax.random.normal(kh, (B2, Ch2, H2, W2), jnp.float32)
    p2 = init_biconvgru_cell(kp2, Cin, Ch2, 3)
    out2 = jax.block_until_ready(biconvgru_cell_forward(x2, h2, p2))
    err2 = float(jnp.max(jnp.abs(out2 - ref_forward(x2, h2, p2))))
    assert err2 < 7.5e-2, f"max abs err (multi-K path) = {err2}"

    print("KERNEL_OK")
</pallas_src>

<mosaic_0001>
module attributes {stable_mosaic.version = 11 : i64} {
  func.func @kernel(%arg0: i32, %arg1: i32, %arg2: memref<256x128xbf16, #tpu.memory_space<vmem>>, %arg3: memref<128x128xbf16, #tpu.memory_space<vmem>>, %arg4: memref<256x384xbf16, #tpu.memory_space<vmem>>, %arg5: memref<384x128xbf16, #tpu.memory_space<vmem>>, %arg6: memref<1x128xf32, #tpu.memory_space<vmem>>, %arg7: memref<256x128xf32, #tpu.memory_space<vmem>>, %arg8: memref<256x128xf32, #tpu.memory_space<vmem>>) attributes {dimension_semantics = [#tpu.dimension_semantics<parallel>, #tpu.dimension_semantics<parallel>], iteration_bounds = array<i64: 2, 1>, scalar_prefetch = 0 : i64, scratch_operands = 0 : i64, tpu.core_type = #tpu.core_type<tc>, window_params = [{transform_indices = @transform_0, window_bounds = array<i64: 256, 128>}, {transform_indices = @transform_1, window_bounds = array<i64: 128, 128>}, {transform_indices = @transform_2, window_bounds = array<i64: 256, 384>}, {transform_indices = @transform_3, window_bounds = array<i64: 384, 128>}, {transform_indices = @transform_4, window_bounds = array<i64: 1, 128>}, {transform_indices = @transform_5, window_bounds = array<i64: 256, 128>}, {transform_indices = @transform_6, window_bounds = array<i64: 256, 128>}]} {
    %c0 = arith.constant 0 : index
    %c0_0 = arith.constant 0 : index
    %0 = vector.load %arg2[%c0, %c0_0] : memref<256x128xbf16, #tpu.memory_space<vmem>>, vector<256x128xbf16>
    %c0_1 = arith.constant 0 : index
    %c0_2 = arith.constant 0 : index
    %1 = vector.load %arg3[%c0_1, %c0_2] : memref<128x128xbf16, #tpu.memory_space<vmem>>, vector<128x128xbf16>
    %cst = arith.constant dense<0.000000e+00> : vector<256x128xf32>
    %2 = tpu.matmul %0, %1, %cst {dimension_numbers = #tpu.dot_dimension_numbers<[1], [0], [0], [1], [0, 0, 1, 1], [], []>} : vector<256x128xbf16>, vector<128x128xbf16>, vector<256x128xf32> -> vector<256x128xf32>
    %c0_3 = arith.constant 0 : index
    %c0_4 = arith.constant 0 : index
    %3 = vector.load %arg4[%c0_3, %c0_4] : memref<256x384xbf16, #tpu.memory_space<vmem>>, vector<256x384xbf16>
    %c0_5 = arith.constant 0 : index
    %c0_6 = arith.constant 0 : index
    %4 = vector.load %arg5[%c0_5, %c0_6] : memref<384x128xbf16, #tpu.memory_space<vmem>>, vector<384x128xbf16>
    %cst_7 = arith.constant dense<0.000000e+00> : vector<256x128xf32>
    %5 = tpu.matmul %3, %4, %cst_7 {dimension_numbers = #tpu.dot_dimension_numbers<[1], [0], [0], [1], [0, 0, 1, 1], [], []>} : vector<256x384xbf16>, vector<384x128xbf16>, vector<256x128xf32> -> vector<256x128xf32>
    %6 = arith.addf %2, %5 : vector<256x128xf32>
    %c0_8 = arith.constant 0 : index
    %c0_9 = arith.constant 0 : index
    %7 = vector.load %arg6[%c0_8, %c0_9] : memref<1x128xf32, #tpu.memory_space<vmem>>, vector<1x128xf32>
    %8 = vector.broadcast %7 : vector<1x128xf32> to vector<256x128xf32>
    %9 = arith.addf %6, %8 : vector<256x128xf32>
    %c0_10 = arith.constant 0 : index
    %c0_11 = arith.constant 0 : index
    %10 = vector.load %arg7[%c0_10, %c0_11] : memref<256x128xf32, #tpu.memory_space<vmem>>, vector<256x128xf32>
    %cst_12 = arith.constant 0.000000e+00 : f32
    %11 = vector.broadcast %cst_12 : f32 to vector<256x128xf32>
    %12 = arith.subf %11, %9 : vector<256x128xf32>
    %13 = math.exp %12 : vector<256x128xf32>
    %cst_13 = arith.constant 1.000000e+00 : f32
    %14 = vector.broadcast %cst_13 : f32 to vector<256x128xf32>
    %15 = arith.addf %14, %13 : vector<256x128xf32>
    %16 = tpu.reciprocal %15 {approx = true} : vector<256x128xf32> -> vector<256x128xf32>
    %17 = arith.mulf %16, %10 : vector<256x128xf32>
    %c0_14 = arith.constant 0 : index
    %c0_15 = arith.constant 0 : index
    %18 = vector.load %arg8[%c0_14, %c0_15] : memref<256x128xf32, #tpu.memory_space<vmem>>, vector<256x128xf32>
    tpu.vector_store %arg8[%c0_14, %c0_15], %17 {strides = array<i32>} : memref<256x128xf32, #tpu.memory_space<vmem>>, vector<256x128xf32>,
    return
  }
  func.func @transform_0(%arg0: i32, %arg1: i32) -> (i32, i32) {
    %c0_i32 = arith.constant 0 : i32
    %c0_i32_0 = arith.constant 0 : i32
    return %arg0, %c0_i32 : i32, i32
  }
  func.func @transform_1(%arg0: i32, %arg1: i32) -> (i32, i32) {
    %c0_i32 = arith.constant 0 : i32
    %c0_i32_0 = arith.constant 0 : i32
    return %c0_i32, %arg1 : i32, i32
  }
  func.func @transform_2(%arg0: i32, %arg1: i32) -> (i32, i32) {
    %c0_i32 = arith.constant 0 : i32
    %c0_i32_0 = arith.constant 0 : i32
    return %arg0, %c0_i32 : i32, i32
  }
  func.func @transform_3(%arg0: i32, %arg1: i32) -> (i32, i32) {
    %c0_i32 = arith.constant 0 : i32
    %c0_i32_0 = arith.constant 0 : i32
    return %c0_i32, %arg1 : i32, i32
  }
  func.func @transform_4(%arg0: i32, %arg1: i32) -> (i32, i32) {
    %c0_i32 = arith.constant 0 : i32
    %c0_i32_0 = arith.constant 0 : i32
    return %c0_i32, %arg1 : i32, i32
  }
  func.func @transform_5(%arg0: i32, %arg1: i32) -> (i32, i32) {
    %c0_i32 = arith.constant 0 : i32
    return %arg0, %arg1 : i32, i32
  }
  func.func @transform_6(%arg0: i32, %arg1: i32) -> (i32, i32) {
    %c0_i32 = arith.constant 0 : i32
    return %arg0, %arg1 : i32, i32
  }
}

module attributes {stable_mosaic.version = 11 : i64} {
  func.func @kernel(%arg0: i32, %arg1: i32, %arg2: memref<256x128xbf16, #tpu.memory_space<vmem>>, %arg3: memref<128x128xbf16, #tpu.memory_space<vmem>>, %arg4: memref<256x384xbf16, #tpu.memory_space<vmem>>, %arg5: memref<384x128xbf16, #tpu.memory_space<vmem>>, %arg6: memref<1x128xf32, #tpu.memory_space<vmem>>, %arg7: memref<256x128xf32, #tpu.memory_space<vmem>>, %arg8: memref<256x128xf32, #tpu.memory_space<vmem>>, %arg9: memref<256x128xf32, #tpu.memory_space<vmem>>) attributes {dimension_semantics = [#tpu.dimension_semantics<parallel>, #tpu.dimension_semantics<parallel>], iteration_bounds = array<i64: 2, 1>, scalar_prefetch = 0 : i64, scratch_operands = 0 : i64, tpu.core_type = #tpu.core_type<tc>, window_params = [{transform_indices = @transform_0, window_bounds = array<i64: 256, 128>}, {transform_indices = @transform_1, window_bounds = array<i64: 128, 128>}, {transform_indices = @transform_2, window_bounds = array<i64: 256, 384>}, {transform_indices = @transform_3, window_bounds = array<i64: 384, 128>}, {transform_indices = @transform_4, window_bounds = array<i64: 1, 128>}, {transform_indices = @transform_5, window_bounds = array<i64: 256, 128>}, {transform_indices = @transform_6, window_bounds = array<i64: 256, 128>}, {transform_indices = @transform_7, window_bounds = array<i64: 256, 128>}]} {
    %c0 = arith.constant 0 : index
    %c0_0 = arith.constant 0 : index
    %0 = vector.load %arg2[%c0, %c0_0] : memref<256x128xbf16, #tpu.memory_space<vmem>>, vector<256x128xbf16>
    %c0_1 = arith.constant 0 : index
    %c0_2 = arith.constant 0 : index
    %1 = vector.load %arg3[%c0_1, %c0_2] : memref<128x128xbf16, #tpu.memory_space<vmem>>, vector<128x128xbf16>
    %cst = arith.constant dense<0.000000e+00> : vector<256x128xf32>
    %2 = tpu.matmul %0, %1, %cst {dimension_numbers = #tpu.dot_dimension_numbers<[1], [0], [0], [1], [0, 0, 1, 1], [], []>} : vector<256x128xbf16>, vector<128x128xbf16>, vector<256x128xf32> -> vector<256x128xf32>
    %c0_3 = arith.constant 0 : index
    %c0_4 = arith.constant 0 : index
    %3 = vector.load %arg4[%c0_3, %c0_4] : memref<256x384xbf16, #tpu.memory_space<vmem>>, vector<256x384xbf16>
    %c0_5 = arith.constant 0 : index
    %c0_6 = arith.constant 0 : index
    %4 = vector.load %arg5[%c0_5, %c0_6] : memref<384x128xbf16, #tpu.memory_space<vmem>>, vector<384x128xbf16>
    %cst_7 = arith.constant dense<0.000000e+00> : vector<256x128xf32>
    %5 = tpu.matmul %3, %4, %cst_7 {dimension_numbers = #tpu.dot_dimension_numbers<[1], [0], [0], [1], [0, 0, 1, 1], [], []>} : vector<256x384xbf16>, vector<384x128xbf16>, vector<256x128xf32> -> vector<256x128xf32>
    %6 = arith.addf %2, %5 : vector<256x128xf32>
    %c0_8 = arith.constant 0 : index
    %c0_9 = arith.constant 0 : index
    %7 = vector.load %arg6[%c0_8, %c0_9] : memref<1x128xf32, #tpu.memory_space<vmem>>, vector<1x128xf32>
    %8 = vector.broadcast %7 : vector<1x128xf32> to vector<256x128xf32>
    %9 = arith.addf %6, %8 : vector<256x128xf32>
    %c0_10 = arith.constant 0 : index
    %c0_11 = arith.constant 0 : index
    %10 = vector.load %arg7[%c0_10, %c0_11] : memref<256x128xf32, #tpu.memory_space<vmem>>, vector<256x128xf32>
    %c0_12 = arith.constant 0 : index
    %c0_13 = arith.constant 0 : index
    %11 = vector.load %arg8[%c0_12, %c0_13] : memref<256x128xf32, #tpu.memory_space<vmem>>, vector<256x128xf32>
    %cst_14 = arith.constant 1.000000e+00 : f32
    %12 = vector.broadcast %cst_14 : f32 to vector<256x128xf32>
    %13 = arith.subf %12, %11 : vector<256x128xf32>
    %14 = math.tanh %9 : vector<256x128xf32>
    %15 = arith.mulf %13, %14 : vector<256x128xf32>
    %16 = arith.mulf %11, %10 : vector<256x128xf32>
    %17 = arith.addf %15, %16 : vector<256x128xf32>
    %c0_15 = arith.constant 0 : index
    %c0_16 = arith.constant 0 : index
    %18 = vector.load %arg9[%c0_15, %c0_16] : memref<256x128xf32, #tpu.memory_space<vmem>>, vector<256x128xf32>
    tpu.vector_store %arg9[%c0_15, %c0_16], %17 {strides = array<i32>} : memref<256x128xf32, #tpu.memory_space<vmem>>, vector<256x128xf32>,
    return
  }
  func.func @transform_0(%arg0: i32, %arg1: i32) -> (i32, i32) {
    %c0_i32 = arith.constant 0 : i32
    %c0_i32_0 = arith.constant 0 : i32
    return %arg0, %c0_i32 : i32, i32
  }
  func.func @transform_1(%arg0: i32, %arg1: i32) -> (i32, i32) {
    %c0_i32 = arith.constant 0 : i32
    %c0_i32_0 = arith.constant 0 : i32
    return %c0_i32, %arg1 : i32, i32
  }
  func.func @transform_2(%arg0: i32, %arg1: i32) -> (i32, i32) {
    %c0_i32 = arith.constant 0 : i32
    %c0_i32_0 = arith.constant 0 : i32
    return %arg0, %c0_i32 : i32, i32
  }
  func.func @transform_3(%arg0: i32, %arg1: i32) -> (i32, i32) {
    %c0_i32 = arith.constant 0 : i32
    %c0_i32_0 = arith.constant 0 : i32
    return %c0_i32, %arg1 : i32, i32
  }
  func.func @transform_4(%arg0: i32, %arg1: i32) -> (i32, i32) {
    %c0_i32 = arith.constant 0 : i32
    %c0_i32_0 = arith.constant 0 : i32
    return %c0_i32, %arg1 : i32, i32
  }
  func.func @transform_5(%arg0: i32, %arg1: i32) -> (i32, i32) {
    %c0_i32 = arith.constant 0 : i32
    return %arg0, %arg1 : i32, i32
  }
  func.func @transform_6(%arg0: i32, %arg1: i32) -> (i32, i32) {
    %c0_i32 = arith.constant 0 : i32
    return %arg0, %arg1 : i32, i32
  }
  func.func @transform_7(%arg0: i32, %arg1: i32) -> (i32, i32) {
    %c0_i32 = arith.constant 0 : i32
    return %arg0, %arg1 : i32, i32
  }
}

</mosaic_0001>

<llo_original>
// kernel: biconvgru_cell.2
$region0: #{biconvgru_cell.2}
  #allocation0 [shape = 'u32[]', space=smem, size = 0x4, offset = 0x4, fixed_abs, tag = 'smem constant byte address 0x4 - core index']
  #allocation1 [shape = 'u32[72,128]{1,0:T(1,128)}', space=vmem, size = 0x9000, scoped, tag = 'internal scratch']
  %s0 = inlined_call_operand.vmem [shape: bf16[512,128], index: 0, kind: input, shape index: {}]
  %s1 = inlined_call_operand.vmem [shape: bf16[128,128], index: 1, kind: input, shape index: {}]
  %s2 = inlined_call_operand.vmem [shape: bf16[512,384], index: 2, kind: input, shape index: {}]
  %s3 = inlined_call_operand.vmem [shape: bf16[384,128], index: 3, kind: input, shape index: {}]
  %s4 = inlined_call_operand.vmem [shape: f32[1,128], index: 4, kind: input, shape index: {}]
  %s5 = inlined_call_operand.vmem [shape: f32[512,128], index: 5, kind: input, shape index: {}]
  %s6 = inlined_call_operand.vmem [shape: f32[512,128], index: 6, kind: output, shape index: {}]
  %s7 = sld [smem:[#allocation0]]
  $region57: #{biconvgru_cell.2} parent=0
    _
  %s9 = ssub.s32 1, %s7
  %s10 = scalar_select 0, %s9, %s7
  loop: start=0, step=1, limit=4
  $region2: #{biconvgru_cell.2} parent=0 // loop_pre_header
    _
  $region3: #{biconvgru_cell.2} parent=0 // loop_header
    %s12 = sphi 0, %s16
    %p13 = scmp.ge.s32.totalorder %s12, 4
    %s19 = sphi 0, %s31
    %s20 = sphi 0, %s27
    %s21 = sphi 0, %s19
    %s22 = sphi 0, %s20
    %s23 = sphi 0, %s21
    %s24 = sphi 0, %s22
    %s34 = sphi 0, %s36
    %s37 = sphi 0, %s34
    %s38 = sphi 0, %s37
    %s54 = sphi 0, %s38
    %s60 = sphi 0, %s62
    %s63 = sphi 0, %s60
    %s64 = sphi 0, %s63
    %s80 = sphi 0, %s64
    %s86 = sphi 0, %s88
    %s89 = sphi 0, %s86
    %s90 = sphi 0, %s89
    %s106 = sphi 0, %s90
    %s112 = sphi 0, %s114
    %s115 = sphi 0, %s112
    %s116 = sphi 0, %s115
    %s132 = sphi 0, %s116
    %s138 = sphi 0, %s140
    %s141 = sphi 0, %s138
    %s142 = sphi 0, %s141
    %s158 = sphi 0, %s142
    %s166 = sphi 0, %s168
    %s169 = sphi 0, %s166
    %s170 = sphi 0, %s169
    %s186 = sphi 0, %s170
    %s194 = sphi 0, %s196
    %s197 = sphi 0, %s194
    %s198 = sphi 0, %s197
    %s214 = sphi 0, %s198
  $region4: #{biconvgru_cell.2} parent=0 // loop_header_branch
    %15 = sbr.rel (%p13) target = $region8
  $region5: #{biconvgru_cell.2} parent=0 // loop_body
    %s17 = ssub.s32 %s12, 1
    %s18 = ssub.s32 %s12, 2
    %s25 = sadd.s32 1, %s20
    %p26 = scmp.ge.s32.totalorder %s25, 1
    %s27 = scalar_select %p26, 0, %s25
    %s28 = sadd.s32 1, %s19
    %s29 = scalar_select %p26, %s28, %s19
    %p30 = scmp.ge.s32.totalorder %s29, 2
    %s31 = scalar_select %p30, 0, %s29
    %s32 = ssub.s32 %s19, %s31
    %p33 = scmp.eq.s32.totalorder %s32, 0
    %s35 = sadd.s32 %s34, 1
    %s36 = scalar_select %p33, %s34, %s35
    %p39 = pneg %p33
    %p40 = scmp.eq.s32.totalorder %s12, 1
    %p41 = por %p39, %p40
    %p42 = scmp.ne.s32.totalorder %s34, %s37
    %p43 = scmp.eq.s32.totalorder %s12, 0
    %p44 = por %p42, %p43
    %p45 = scmp.ne.s32.totalorder %s34, %s37
    %p46 = scmp.eq.s32.totalorder %s17, 1
    %p47 = por %p45, %p46
    %p48 = scmp.ne.s32.totalorder %s37, %s38
    %p49 = scmp.eq.s32.totalorder %s17, 0
    %p50 = por %p48, %p49
    %p51 = scmp.ne.s32.totalorder %s37, %s38
    %p52 = scmp.eq.s32.totalorder %s18, 1
    %p53 = por %p51, %p52
    %p55 = scmp.ne.s32.totalorder %s38, %s54
    %p56 = scmp.eq.s32.totalorder %s18, 0
    %p57 = por %p55, %p56
    %s58 = ssub.s32 %s20, %s27
    %p59 = scmp.eq.s32.totalorder %s58, 0
    %s61 = sadd.s32 %s60, 1
    %s62 = scalar_select %p59, %s60, %s61
    %p65 = pneg %p59
    %p66 = scmp.eq.s32.totalorder %s12, 1
    %p67 = por %p65, %p66
    %p68 = scmp.ne.s32.totalorder %s60, %s63
    %p69 = scmp.eq.s32.totalorder %s12, 0
    %p70 = por %p68, %p69
    %p71 = scmp.ne.s32.totalorder %s60, %s63
    %p72 = scmp.eq.s32.totalorder %s17, 1
    %p73 = por %p71, %p72
    %p74 = scmp.ne.s32.totalorder %s63, %s64
    %p75 = scmp.eq.s32.totalorder %s17, 0
    %p76 = por %p74, %p75
    %p77 = scmp.ne.s32.totalorder %s63, %s64
    %p78 = scmp.eq.s32.totalorder %s18, 1
    %p79 = por %p77, %p78
    %p81 = scmp.ne.s32.totalorder %s64, %s80
    %p82 = scmp.eq.s32.totalorder %s18, 0
    %p83 = por %p81, %p82
    %s84 = ssub.s32 %s19, %s31
    %p85 = scmp.eq.s32.totalorder %s84, 0
    %s87 = sadd.s32 %s86, 1
    %s88 = scalar_select %p85, %s86, %s87
    %p91 = pneg %p85
    %p92 = scmp.eq.s32.totalorder %s12, 1
    %p93 = por %p91, %p92
    %p94 = scmp.ne.s32.totalorder %s86, %s89
    %p95 = scmp.eq.s32.totalorder %s12, 0
    %p96 = por %p94, %p95
    %p97 = scmp.ne.s32.totalorder %s86, %s89
    %p98 = scmp.eq.s32.totalorder %s17, 1
    %p99 = por %p97, %p98
    %p100 = scmp.ne.s32.totalorder %s89, %s90
    %p101 = scmp.eq.s32.totalorder %s17, 0
    %p102 = por %p100, %p101
    %p103 = scmp.ne.s32.totalorder %s89, %s90
    %p104 = scmp.eq.s32.totalorder %s18, 1
    %p105 = por %p103, %p104
    %p107 = scmp.ne.s32.totalorder %s90, %s106
    %p108 = scmp.eq.s32.totalorder %s18, 0
    %p109 = por %p107, %p108
    %s110 = ssub.s32 %s20, %s27
    %p111 = scmp.eq.s32.totalorder %s110, 0
    %s113 = sadd.s32 %s112, 1
    %s114 = scalar_select %p111, %s112, %s113
    %p117 = pneg %p111
    %p118 = scmp.eq.s32.totalorder %s12, 1
    %p119 = por %p117, %p118
    %p120 = scmp.ne.s32.totalorder %s112, %s115
    %p121 = scmp.eq.s32.totalorder %s12, 0
    %p122 = por %p120, %p121
    %p123 = scmp.ne.s32.totalorder %s112, %s115
    %p124 = scmp.eq.s32.totalorder %s17, 1
    %p125 = por %p123, %p124
    %p126 = scmp.ne.s32.totalorder %s115, %s116
    %p127 = scmp.eq.s32.totalorder %s17, 0
    %p128 = por %p126, %p127
    %p129 = scmp.ne.s32.totalorder %s115, %s116
    %p130 = scmp.eq.s32.totalorder %s18, 1
    %p131 = por %p129, %p130
    %p133 = scmp.ne.s32.totalorder %s116, %s132
    %p134 = scmp.eq.s32.totalorder %s18, 0
    %p135 = por %p133, %p134
    %s136 = ssub.s32 %s20, %s27
    %p137 = scmp.eq.s32.totalorder %s136, 0
    %s139 = sadd.s32 %s138, 1
    %s140 = scalar_select %p137, %s138, %s139
    %p143 = pneg %p137
    %p144 = scmp.eq.s32.totalorder %s12, 1
    %p145 = por %p143, %p144
    %p146 = scmp.ne.s32.totalorder %s138, %s141
    %p147 = scmp.eq.s32.totalorder %s12, 0
    %p148 = por %p146, %p147
    %p149 = scmp.ne.s32.totalorder %s138, %s141
    %p150 = scmp.eq.s32.totalorder %s17, 1
    %p151 = por %p149, %p150
    %p152 = scmp.ne.s32.totalorder %s141, %s142
    %p153 = scmp.eq.s32.totalorder %s17, 0
    %p154 = por %p152, %p153
    %p155 = scmp.ne.s32.totalorder %s141, %s142
    %p156 = scmp.eq.s32.totalorder %s18, 1
    %p157 = por %p155, %p156
    %p159 = scmp.ne.s32.totalorder %s142, %s158
    %p160 = scmp.eq.s32.totalorder %s18, 0
    %p161 = por %p159, %p160
    %s162 = ssub.s32 %s19, %s31
    %s163 = ssub.s32 %s20, %s27
    %s164 = sor.u32 %s162, %s163
    %p165 = scmp.eq.s32.totalorder %s164, 0
    %s167 = sadd.s32 %s166, 1
    %s168 = scalar_select %p165, %s166, %s167
    %p171 = pneg %p165
    %p172 = scmp.eq.s32.totalorder %s12, 1
    %p173 = por %p171, %p172
    %p174 = scmp.ne.s32.totalorder %s166, %s169
    %p175 = scmp.eq.s32.totalorder %s12, 0
    %p176 = por %p174, %p175
    %p177 = scmp.ne.s32.totalorder %s166, %s169
    %p178 = scmp.eq.s32.totalorder %s17, 1
    %p179 = por %p177, %p178
    %p180 = scmp.ne.s32.totalorder %s169, %s170
    %p181 = scmp.eq.s32.totalorder %s17, 0
    %p182 = por %p180, %p181
    %p183 = scmp.ne.s32.totalorder %s169, %s170
    %p184 = scmp.eq.s32.totalorder %s18, 1
    %p185 = por %p183, %p184
    %p187 = scmp.ne.s32.totalorder %s170, %s186
    %p188 = scmp.eq.s32.totalorder %s18, 0
    %p189 = por %p187, %p188
    %s190 = ssub.s32 %s19, %s31
    %s191 = ssub.s32 %s20, %s27
    %s192 = sor.u32 %s190, %s191
    %p193 = scmp.eq.s32.totalorder %s192, 0
    %s195 = sadd.s32 %s194, 1
    %s196 = scalar_select %p193, %s194, %s195
    %p199 = pneg %p193
    %p200 = scmp.eq.s32.totalorder %s12, 1
    %p201 = por %p199, %p200
    %p202 = scmp.ne.s32.totalorder %s194, %s197
    %p203 = scmp.eq.s32.totalorder %s12, 0
    %p204 = por %p202, %p203
    %p205 = scmp.ne.s32.totalorder %s194, %s197
    %p206 = scmp.eq.s32.totalorder %s17, 1
    %p207 = por %p205, %p206
    %p208 = scmp.ne.s32.totalorder %s197, %s198
    %p209 = scmp.eq.s32.totalorder %s17, 0
    %p210 = por %p208, %p209
    %p211 = scmp.ne.s32.totalorder %s197, %s198
    %p212 = scmp.eq.s32.totalorder %s18, 1
    %p213 = por %p211, %p212
    %p215 = scmp.ne.s32.totalorder %s198, %s214
    %p216 = scmp.eq.s32.totalorder %s18, 0
    %p217 = por %p215, %p216
    %p218 = scmp.le.s32.totalorder 1, %s12
    %p219 = scmp.lt.s32.totalorder %s12, 3
    %p220 = pnand %p218, %p219
    %p221 = pneg %p220
    // Predicated region
    $region9: #{biconvgru_cell.2} parent=5 // pred_check
      _
    $region10: #{biconvgru_cell.2} parent=5 // pred_check_branch
      %223 = sbr.rel (%p220) target = $region12
    $region11: #{biconvgru_cell.2} parent=5 // pred_region
      %s224 = ssub.s32 %s12, 1
      // Predicated region
      $region13: #{biconvgru_cell.2} parent=11 // pred_check
        %p225 = pneg %p76
      $region14: #{biconvgru_cell.2} parent=11 // pred_check_branch
        %227 = sbr.rel (%p225) target = $region16
      $region15: #{biconvgru_cell.2} parent=11 // pred_region
        %p228 = scmp.lt.s32.totalorder %s22, 0
        %s229 = scalar_select %p228, %s22, 0
        %s230 = smul.addr %s229, 4
        %s231 = scalar_lea.vmem %s1, %s230
      $region16: #{biconvgru_cell.2} parent=11 // pred_fallthru
        _
      // Predicated region
      $region17: #{biconvgru_cell.2} parent=11 // pred_check
        %p232 = pneg %p128
      $region18: #{biconvgru_cell.2} parent=11 // pred_check_branch
        %234 = sbr.rel (%p232) target = $region20
      $region19: #{biconvgru_cell.2} parent=11 // pred_region
        %p235 = scmp.lt.s32.totalorder %s22, 0
        %s236 = scalar_select %p235, %s22, 0
        %s237 = smul.addr %s236, 4
        %s238 = scalar_lea.vmem %s3, %s237
      $region20: #{biconvgru_cell.2} parent=11 // pred_fallthru
        _
      // Predicated region
      $region21: #{biconvgru_cell.2} parent=11 // pred_check
        %p239 = pneg %p154
      $region22: #{biconvgru_cell.2} parent=11 // pred_check_branch
        %241 = sbr.rel (%p239) target = $region24
      $region23: #{biconvgru_cell.2} parent=11 // pred_region
        %p242 = scmp.lt.s32.totalorder %s22, 0
        %s243 = scalar_select %p242, %s22, 0
        %s244 = scalar_lea.vmem %s4, %s243
      $region24: #{biconvgru_cell.2} parent=11 // pred_fallthru
        _
    $region12: #{biconvgru_cell.2} parent=5 // pred_fallthru
      _
    %p245 = scmp.lt.s32.totalorder %s12, 2
    // Predicated region
    $region25: #{biconvgru_cell.2} parent=5 // pred_check
      %p246 = pneg %p245
    $region26: #{biconvgru_cell.2} parent=5 // pred_check_branch
      %248 = sbr.rel (%p246) target = $region28
    $region27: #{biconvgru_cell.2} parent=5 // pred_region
      // Predicated region
      $region29: #{biconvgru_cell.2} parent=27 // pred_check
        %p249 = pneg %p44
      $region30: #{biconvgru_cell.2} parent=27 // pred_check_branch
        %251 = sbr.rel (%p249) target = $region32
      $region31: #{biconvgru_cell.2} parent=27 // pred_region
        %s252 = smul.u32 32, %s19
        %p253 = scmp.lt.s32.totalorder %s252, 63
        %s254 = scalar_select %p253, %s252, 63
        %s255 = smul.addr %s254, 4
        %s256 = scalar_lea.vmem %s0, %s255
        %s257 = smul.u32 32, %s19
      $region32: #{biconvgru_cell.2} parent=27 // pred_fallthru
        _
      // Predicated region
      $region33: #{biconvgru_cell.2} parent=27 // pred_check
        %p258 = pneg %p96
      $region34: #{biconvgru_cell.2} parent=27 // pred_check_branch
        %260 = sbr.rel (%p258) target = $region36
      $region35: #{biconvgru_cell.2} parent=27 // pred_region
        %s261 = smul.u32 32, %s19
        %p262 = scmp.lt.s32.totalorder %s261, 63
        %s263 = scalar_select %p262, %s261, 63
        %s264 = smul.addr %s263, 3
        %s265 = smul.addr %s264, 4
        %s266 = scalar_lea.vmem %s2, %s265
        %s267 = smul.u32 32, %s19
      $region36: #{biconvgru_cell.2} parent=27 // pred_fallthru
        _
      // Predicated region
      $region37: #{biconvgru_cell.2} parent=27 // pred_check
        %p268 = pneg %p176
      $region38: #{biconvgru_cell.2} parent=27 // pred_check_branch
        %270 = sbr.rel (%p268) target = $region40
      $region39: #{biconvgru_cell.2} parent=27 // pred_region
        %s271 = smul.u32 32, %s19
        %p272 = scmp.lt.s32.totalorder %s271, 63
        %s273 = scalar_select %p272, %s271, 63
        %p274 = scmp.lt.s32.totalorder %s20, 0
        %s275 = scalar_select %p274, %s20, 0
        %s276 = sadd.s32 %s275, %s273
        %s277 = smul.addr %s276, 8
        %s278 = scalar_lea.vmem %s5, %s277
        %s279 = smul.u32 32, %s19
      $region40: #{biconvgru_cell.2} parent=27 // pred_fallthru
        _
    $region28: #{biconvgru_cell.2} parent=5 // pred_fallthru
      _
    %p280 = scmp.le.s32.totalorder 1, %s12
    %p281 = scmp.lt.s32.totalorder %s12, 3
    %p282 = pnand %p280, %p281
    %p283 = pneg %p282
    // Predicated region
    $region41: #{biconvgru_cell.2} parent=5 // pred_check
      _
    $region42: #{biconvgru_cell.2} parent=5 // pred_check_branch
      %285 = sbr.rel (%p282) target = $region44
    $region43: #{biconvgru_cell.2} parent=5 // pred_region
      %s286 = ssub.s32 %s12, 1
      %s287 = smul.u32 32, %s21
      %p288 = scmp.lt.s32.totalorder %s287, 63
      %s289 = scalar_select %p288, %s287, 63
      %s290 = smul.addr %s289, 4
      %s291 = scalar_lea.vmem %s0, %s290
      %p292 = pneg %p50
      %p293 = pneg %p47
      %p294 = scmp.lt.s32.totalorder %s22, 0
      %s295 = scalar_select %p294, %s22, 0
      %s296 = smul.addr %s295, 4
      %s297 = scalar_lea.vmem %s1, %s296
      %p298 = pneg %p76
      %p299 = pneg %p73
      %s300 = smul.u32 32, %s21
      %p301 = scmp.lt.s32.totalorder %s300, 63
      %s302 = scalar_select %p301, %s300, 63
      %s303 = smul.addr %s302, 3
      %s304 = smul.addr %s303, 4
      %s305 = scalar_lea.vmem %s2, %s304
      %p306 = pneg %p102
      %p307 = pneg %p99
      %p308 = scmp.lt.s32.totalorder %s22, 0
      %s309 = scalar_select %p308, %s22, 0
      %s310 = smul.addr %s309, 4
      %s311 = scalar_lea.vmem %s3, %s310
      %p312 = pneg %p128
      %p313 = pneg %p125
      %p314 = scmp.lt.s32.totalorder %s22, 0
      %s315 = scalar_select %p314, %s22, 0
      %s316 = scalar_lea.vmem %s4, %s315
      %p317 = pneg %p154
      %p318 = pneg %p151
      %s319 = smul.u32 32, %s21
      %p320 = scmp.lt.s32.totalorder %s319, 63
      %s321 = scalar_select %p320, %s319, 63
      %p322 = scmp.lt.s32.totalorder %s22, 0
      %s323 = scalar_select %p322, %s22, 0
      %s324 = sadd.s32 %s323, %s321
      %s325 = smul.addr %s324, 8
      %s326 = scalar_lea.vmem %s5, %s325
      %p327 = pneg %p182
      %p328 = pneg %p179
      %p329 = pneg %p210
      %p330 = pneg %p207
      %s331 = smul.u32 32, %s21
      %p332 = scmp.lt.s32.totalorder %s331, 63
      %s333 = scalar_select %p332, %s331, 63
      %p334 = scmp.lt.s32.totalorder %s22, 0
      %s335 = scalar_select %p334, %s22, 0
      %s336 = sadd.s32 %s335, %s333
      %s337 = smul.addr %s336, 8
      %s338 = scalar_lea.vmem %s6, %s337
      %s339 = smul.u32 32, %s21
      %p340 = scmp.lt.s32.totalorder %s339, 63
      %s341 = scalar_select %p340, %s339, 63
      %s342 = smul.addr %s341, 4
      %s343 = scalar_lea.vmem %s0, %s342
      %s344 = smul.u32 32, %s21
      %p345 = scmp.lt.s32.totalorder %s22, 0
      %s346 = scalar_select %p345, %s22, 0
      %s347 = smul.addr %s346, 4
      %s348 = scalar_lea.vmem %s1, %s347
      %s349 = smul.u32 32, %s21
      %p350 = scmp.lt.s32.totalorder %s349, 63
      %s351 = scalar_select %p350, %s349, 63
      %s352 = smul.addr %s351, 3
      %s353 = smul.addr %s352, 4
      %s354 = scalar_lea.vmem %s2, %s353
      %s355 = smul.u32 32, %s21
      %p356 = scmp.lt.s32.totalorder %s22, 0
      %s357 = scalar_select %p356, %s22, 0
      %s358 = smul.addr %s357, 4
      %s359 = scalar_lea.vmem %s3, %s358
      %p360 = scmp.lt.s32.totalorder %s22, 0
      %s361 = scalar_select %p360, %s22, 0
      %s362 = scalar_lea.vmem %s4, %s361
      %s363 = smul.u32 32, %s21
      %p364 = scmp.lt.s32.totalorder %s363, 63
      %s365 = scalar_select %p364, %s363, 63
      %p366 = scmp.lt.s32.totalorder %s22, 0
      %s367 = scalar_select %p366, %s22, 0
      %s368 = sadd.s32 %s367, %s365
      %s369 = smul.addr %s368, 8
      %s370 = scalar_lea.vmem %s5, %s369
      %s371 = smul.u32 32, %s21
      %s372 = smul.u32 32, %s21
      %p373 = scmp.lt.s32.totalorder %s372, 63
      %s374 = scalar_select %p373, %s372, 63
      %p375 = scmp.lt.s32.totalorder %s22, 0
      %s376 = scalar_select %p375, %s22, 0
      %s377 = sadd.s32 %s376, %s374
      %s378 = smul.addr %s377, 8
      %s379 = scalar_lea.vmem %s6, %s378
      %s380 = smul.u32 32, %s21
      %v381 = vld [vmem:[%s343] sm:$0xf]
      %v382 = vld [vmem:[%s343 + $0x4] sm:$0xf]
      %v383 = vld [vmem:[%s343 + $0x8] sm:$0xf]
      %v384 = vld [vmem:[%s343 + $0xc] sm:$0xf]
      %v385 = vld [vmem:[%s343 + $0x10] sm:$0xf]
      %v386 = vld [vmem:[%s343 + $0x14] sm:$0xf]
      %v387 = vld [vmem:[%s343 + $0x18] sm:$0xf]
      %v388 = vld [vmem:[%s343 + $0x1c] sm:$0xf]
      %v389 = vld [vmem:[%s343 + $0x20] sm:$0xf]
      %v390 = vld [vmem:[%s343 + $0x24] sm:$0xf]
      %v391 = vld [vmem:[%s343 + $0x28] sm:$0xf]
      %v392 = vld [vmem:[%s343 + $0x2c] sm:$0xf]
      %v393 = vld [vmem:[%s343 + $0x30] sm:$0xf]
      %v394 = vld [vmem:[%s343 + $0x34] sm:$0xf]
      %v395 = vld [vmem:[%s343 + $0x38] sm:$0xf]
      %v396 = vld [vmem:[%s343 + $0x3c] sm:$0xf]
      %v397 = vld [vmem:[%s343 + $0x40] sm:$0xf]
      %v398 = vld [vmem:[%s343 + $0x44] sm:$0xf]
      %v399 = vld [vmem:[%s343 + $0x48] sm:$0xf]
      %v400 = vld [vmem:[%s343 + $0x4c] sm:$0xf]
      %v401 = vld [vmem:[%s343 + $0x50] sm:$0xf]
      %v402 = vld [vmem:[%s343 + $0x54] sm:$0xf]
      %v403 = vld [vmem:[%s343 + $0x58] sm:$0xf]
      %v404 = vld [vmem:[%s343 + $0x5c] sm:$0xf]
      %v405 = vld [vmem:[%s343 + $0x60] sm:$0xf]
      %v406 = vld [vmem:[%s343 + $0x64] sm:$0xf]
      %v407 = vld [vmem:[%s343 + $0x68] sm:$0xf]
      %v408 = vld [vmem:[%s343 + $0x6c] sm:$0xf]
      %v409 = vld [vmem:[%s343 + $0x70] sm:$0xf]
      %v410 = vld [vmem:[%s343 + $0x74] sm:$0xf]
      %v411 = vld [vmem:[%s343 + $0x78] sm:$0xf]
      %v412 = vld [vmem:[%s343 + $0x7c] sm:$0xf]
      %v413 = vld [vmem:[%s348] sm:$0xf]
      %v414 = vld [vmem:[%s348 + $0x4] sm:$0xf]
      %v415 = vld [vmem:[%s348 + $0x8] sm:$0xf]
      %v416 = vld [vmem:[%s348 + $0xc] sm:$0xf]
      %v417 = vld [vmem:[%s348 + $0x10] sm:$0xf]
      %v418 = vld [vmem:[%s348 + $0x14] sm:$0xf]
      %v419 = vld [vmem:[%s348 + $0x18] sm:$0xf]
      %v420 = vld [vmem:[%s348 + $0x1c] sm:$0xf]
      %v421 = vld [vmem:[%s348 + $0x20] sm:$0xf]
      %v422 = vld [vmem:[%s348 + $0x24] sm:$0xf]
      %v423 = vld [vmem:[%s348 + $0x28] sm:$0xf]
      %v424 = vld [vmem:[%s348 + $0x2c] sm:$0xf]
      %v425 = vld [vmem:[%s348 + $0x30] sm:$0xf]
      %v426 = vld [vmem:[%s348 + $0x34] sm:$0xf]
      %v427 = vld [vmem:[%s348 + $0x38] sm:$0xf]
      %v428 = vld [vmem:[%s348 + $0x3c] sm:$0xf]
      %v429 = vld [vmem:[%s354] sm:$0xff]
      %v430 = vld [vmem:[%s354 + $0x8] sm:$0xf]
      %v431 = vld [vmem:[%s354 + $0xc] sm:$0xff]
      %v432 = vld [vmem:[%s354 + $0x14] sm:$0xf]
      %v433 = vld [vmem:[%s354 + $0x18] sm:$0xff]
      %v434 = vld [vmem:[%s354 + $0x20] sm:$0xf]
      %v435 = vld [vmem:[%s354 + $0x24] sm:$0xff]
      %v436 = vld [vmem:[%s354 + $0x2c] sm:$0xf]
      %v437 = vld [vmem:[%s354 + $0x30] sm:$0xff]
      %v438 = vld [vmem:[%s354 + $0x38] sm:$0xf]
      %v439 = vld [vmem:[%s354 + $0x3c] sm:$0xff]
      %v440 = vld [vmem:[%s354 + $0x44] sm:$0xf]
      %v441 = vld [vmem:[%s354 + $0x48] sm:$0xff]
      %v442 = vld [vmem:[%s354 + $0x50] sm:$0xf]
      %v443 = vld [vmem:[%s354 + $0x54] sm:$0xff]
      %v444 = vld [vmem:[%s354 + $0x5c] sm:$0xf]
      %v445 = vld [vmem:[%s354 + $0x60] sm:$0xff]
      %v446 = vld [vmem:[%s354 + $0x68] sm:$0xf]
      %v447 = vld [vmem:[%s354 + $0x6c] sm:$0xff]
      %v448 = vld [vmem:[%s354 + $0x74] sm:$0xf]
      %v449 = vld [vmem:[%s354 + $0x78] sm:$0xff]
      %v450 = vld [vmem:[%s354 + $0x80] sm:$0xf]
      %v451 = vld [vmem:[%s354 + $0x84] sm:$0xff]
      %v452 = vld [vmem:[%s354 + $0x8c] sm:$0xf]
      %v453 = vld [vmem:[%s354 + $0x90] sm:$0xff]
      %v454 = vld [vmem:[%s354 + $0x98] sm:$0xf]
      %v455 = vld [vmem:[%s354 + $0x9c] sm:$0xff]
      %v456 = vld [vmem:[%s354 + $0xa4] sm:$0xf]
      %v457 = vld [vmem:[%s354 + $0xa8] sm:$0xff]
      %v458 = vld [vmem:[%s354 + $0xb0] sm:$0xf]
      %v459 = vld [vmem:[%s354 + $0xb4] sm:$0xff]
      %v460 = vld [vmem:[%s354 + $0xbc] sm:$0xf]
      %v461 = vld [vmem:[%s354 + $0xc0] sm:$0xff]
      %v462 = vld [vmem:[%s354 + $0xc8] sm:$0xf]
      %v463 = vld [vmem:[%s354 + $0xcc] sm:$0xff]
      %v464 = vld [vmem:[%s354 + $0xd4] sm:$0xf]
      %v465 = vld [vmem:[%s354 + $0xd8] sm:$0xff]
      %v466 = vld [vmem:[%s354 + $0xe0] sm:$0xf]
      %v467 = vld [vmem:[%s354 + $0xe4] sm:$0xff]
      %v468 = vld [vmem:[%s354 + $0xec] sm:$0xf]
      %v469 = vld [vmem:[%s354 + $0xf0] sm:$0xff]
      %v470 = vld [vmem:[%s354 + $0xf8] sm:$0xf]
      %v471 = vld [vmem:[%s354 + $0xfc] sm:$0xff]
      %v472 = vld [vmem:[%s354 + $0x104] sm:$0xf]
      %v473 = vld [vmem:[%s354 + $0x108] sm:$0xff]
      %v474 = vld [vmem:[%s354 + $0x110] sm:$0xf]
      %v475 = vld [vmem:[%s354 + $0x114] sm:$0xff]
      %v476 = vld [vmem:[%s354 + $0x11c] sm:$0xf]
      %v477 = vld [vmem:[%s354 + $0x120] sm:$0xff]
      %v478 = vld [vmem:[%s354 + $0x128] sm:$0xf]
      %v479 = vld [vmem:[%s354 + $0x12c] sm:$0xff]
      %v480 = vld [vmem:[%s354 + $0x134] sm:$0xf]
      %v481 = vld [vmem:[%s354 + $0x138] sm:$0xff]
      %v482 = vld [vmem:[%s354 + $0x140] sm:$0xf]
      %v483 = vld [vmem:[%s354 + $0x144] sm:$0xff]
      %v484 = vld [vmem:[%s354 + $0x14c] sm:$0xf]
      %v485 = vld [vmem:[%s354 + $0x150] sm:$0xff]
      %v486 = vld [vmem:[%s354 + $0x158] sm:$0xf]
      %v487 = vld [vmem:[%s354 + $0x15c] sm:$0xff]
      %v488 = vld [vmem:[%s354 + $0x164] sm:$0xf]
      %v489 = vld [vmem:[%s354 + $0x168] sm:$0xff]
      %v490 = vld [vmem:[%s354 + $0x170] sm:$0xf]
      %v491 = vld [vmem:[%s354 + $0x174] sm:$0xff]
      %v492 = vld [vmem:[%s354 + $0x17c] sm:$0xf]
      %v493 = vld [vmem:[%s359] sm:$0xf]
      %v494 = vld [vmem:[%s359 + $0x4] sm:$0xf]
      %v495 = vld [vmem:[%s359 + $0x8] sm:$0xf]
      %v496 = vld [vmem:[%s359 + $0xc] sm:$0xf]
      %v497 = vld [vmem:[%s359 + $0x10] sm:$0xf]
      %v498 = vld [vmem:[%s359 + $0x14] sm:$0xf]
      %v499 = vld [vmem:[%s359 + $0x18] sm:$0xf]
      %v500 = vld [vmem:[%s359 + $0x1c] sm:$0xf]
      %v501 = vld [vmem:[%s359 + $0x20] sm:$0xf]
      %v502 = vld [vmem:[%s359 + $0x24] sm:$0xf]
      %v503 = vld [vmem:[%s359 + $0x28] sm:$0xf]
      %v504 = vld [vmem:[%s359 + $0x2c] sm:$0xf]
      %v505 = vld [vmem:[%s359 + $0x30] sm:$0xf]
      %v506 = vld [vmem:[%s359 + $0x34] sm:$0xf]
      %v507 = vld [vmem:[%s359 + $0x38] sm:$0xf]
      %v508 = vld [vmem:[%s359 + $0x3c] sm:$0xf]
      %v509 = vld [vmem:[%s359 + $0x40] sm:$0xf]
      %v510 = vld [vmem:[%s359 + $0x44] sm:$0xf]
      %v511 = vld [vmem:[%s359 + $0x48] sm:$0xf]
      %v512 = vld [vmem:[%s359 + $0x4c] sm:$0xf]
      %v513 = vld [vmem:[%s359 + $0x50] sm:$0xf]
      %v514 = vld [vmem:[%s359 + $0x54] sm:$0xf]
      %v515 = vld [vmem:[%s359 + $0x58] sm:$0xf]
      %v516 = vld [vmem:[%s359 + $0x5c] sm:$0xf]
      %v517 = vld [vmem:[%s359 + $0x60] sm:$0xf]
      %v518 = vld [vmem:[%s359 + $0x64] sm:$0xf]
      %v519 = vld [vmem:[%s359 + $0x68] sm:$0xf]
      %v520 = vld [vmem:[%s359 + $0x6c] sm:$0xf]
      %v521 = vld [vmem:[%s359 + $0x70] sm:$0xf]
      %v522 = vld [vmem:[%s359 + $0x74] sm:$0xf]
      %v523 = vld [vmem:[%s359 + $0x78] sm:$0xf]
      %v524 = vld [vmem:[%s359 + $0x7c] sm:$0xf]
      %v525 = vld [vmem:[%s359 + $0x80] sm:$0xf]
      %v526 = vld [vmem:[%s359 + $0x84] sm:$0xf]
      %v527 = vld [vmem:[%s359 + $0x88] sm:$0xf]
      %v528 = vld [vmem:[%s359 + $0x8c] sm:$0xf]
      %v529 = vld [vmem:[%s359 + $0x90] sm:$0xf]
      %v530 = vld [vmem:[%s359 + $0x94] sm:$0xf]
      %v531 = vld [vmem:[%s359 + $0x98] sm:$0xf]
      %v532 = vld [vmem:[%s359 + $0x9c] sm:$0xf]
      %v533 = vld [vmem:[%s359 + $0xa0] sm:$0xf]
      %v534 = vld [vmem:[%s359 + $0xa4] sm:$0xf]
      %v535 = vld [vmem:[%s359 + $0xa8] sm:$0xf]
      %v536 = vld [vmem:[%s359 + $0xac] sm:$0xf]
      %v537 = vld [vmem:[%s359 + $0xb0] sm:$0xf]
      %v538 = vld [vmem:[%s359 + $0xb4] sm:$0xf]
      %v539 = vld [vmem:[%s359 + $0xb8] sm:$0xf]
      %v540 = vld [vmem:[%s359 + $0xbc] sm:$0xf]
      %v605 = vunpack.c.l.b16 %v429
      %v606 = vunpack.c.h.b16 %v429
      %v607 = vunpack.c.l.b16 %v430
      %v608 = vunpack.c.l.b16 %v431
      %v609 = vunpack.c.h.b16 %v431
      %v610 = vunpack.c.l.b16 %v432
      %v611 = vunpack.c.l.b16 %v433
      %v612 = vunpack.c.h.b16 %v433
      %v613 = vunpack.c.l.b16 %v434
      %v614 = vunpack.c.l.b16 %v435
      %v615 = vunpack.c.h.b16 %v435
      %v616 = vunpack.c.l.b16 %v436
      %v617 = vunpack.c.l.b16 %v437
      %v618 = vunpack.c.h.b16 %v437
      %v619 = vunpack.c.l.b16 %v438
      %v620 = vunpack.c.l.b16 %v439
      %v621 = vunpack.c.h.b16 %v439
      %v622 = vunpack.c.l.b16 %v440
      %v623 = vunpack.c.l.b16 %v441
      %v624 = vunpack.c.h.b16 %v441
      %v625 = vunpack.c.l.b16 %v442
      %v626 = vunpack.c.l.b16 %v443
      %v627 = vunpack.c.h.b16 %v443
      %v628 = vunpack.c.l.b16 %v444
      %v629 = vunpack.c.l.b16 %v445
      %v630 = vunpack.c.h.b16 %v445
      %v631 = vunpack.c.l.b16 %v446
      %v632 = vunpack.c.l.b16 %v447
      %v633 = vunpack.c.h.b16 %v447
      %v634 = vunpack.c.l.b16 %v448
      %v635 = vunpack.c.l.b16 %v449
      %v636 = vunpack.c.h.b16 %v449
      %v637 = vunpack.c.l.b16 %v450
      %v638 = vunpack.c.l.b16 %v451
      %v639 = vunpack.c.h.b16 %v451
      %v640 = vunpack.c.l.b16 %v452
      %v641 = vunpack.c.l.b16 %v453
      %v642 = vunpack.c.h.b16 %v453
      %v643 = vunpack.c.l.b16 %v454
      %v644 = vunpack.c.l.b16 %v455
      %v645 = vunpack.c.h.b16 %v455
      %v646 = vunpack.c.l.b16 %v456
      %v647 = vunpack.c.l.b16 %v457
      %v648 = vunpack.c.h.b16 %v457
      %v649 = vunpack.c.l.b16 %v458
      %v650 = vunpack.c.l.b16 %v459
      %v651 = vunpack.c.h.b16 %v459
      %v652 = vunpack.c.l.b16 %v460
      %v653 = vunpack.c.l.b16 %v461
      %v654 = vunpack.c.h.b16 %v461
      %v655 = vunpack.c.l.b16 %v462
      %v656 = vunpack.c.l.b16 %v463
      %v657 = vunpack.c.h.b16 %v463
      %v658 = vunpack.c.l.b16 %v464
      %v659 = vunpack.c.l.b16 %v465
      %v660 = vunpack.c.h.b16 %v465
      %v661 = vunpack.c.l.b16 %v466
      %v662 = vunpack.c.l.b16 %v467
      %v663 = vunpack.c.h.b16 %v467
      %v664 = vunpack.c.l.b16 %v468
      %v665 = vunpack.c.l.b16 %v469
      %v666 = vunpack.c.h.b16 %v469
      %v667 = vunpack.c.l.b16 %v470
      %v668 = vunpack.c.l.b16 %v471
      %v669 = vunpack.c.h.b16 %v471
      %v670 = vunpack.c.l.b16 %v472
      %v671 = vunpack.c.l.b16 %v473
      %v672 = vunpack.c.h.b16 %v473
      %v673 = vunpack.c.l.b16 %v474
      %v674 = vunpack.c.l.b16 %v475
      %v675 = vunpack.c.h.b16 %v475
      %v676 = vunpack.c.l.b16 %v476
      %v677 = vunpack.c.l.b16 %v477
      %v678 = vunpack.c.h.b16 %v477
      %v679 = vunpack.c.l.b16 %v478
      %v680 = vunpack.c.l.b16 %v479
      %v681 = vunpack.c.h.b16 %v479
      %v682 = vunpack.c.l.b16 %v480
      %v683 = vunpack.c.l.b16 %v481
      %v684 = vunpack.c.h.b16 %v481
      %v685 = vunpack.c.l.b16 %v482
      %v686 = vunpack.c.l.b16 %v483
      %v687 = vunpack.c.h.b16 %v483
      %v688 = vunpack.c.l.b16 %v484
      %v689 = vunpack.c.l.b16 %v485
      %v690 = vunpack.c.h.b16 %v485
      %v691 = vunpack.c.l.b16 %v486
      %v692 = vunpack.c.l.b16 %v487
      %v693 = vunpack.c.h.b16 %v487
      %v694 = vunpack.c.l.b16 %v488
      %v695 = vunpack.c.l.b16 %v489
      %v696 = vunpack.c.h.b16 %v489
      %v697 = vunpack.c.l.b16 %v490
      %v698 = vunpack.c.l.b16 %v491
      %v699 = vunpack.c.h.b16 %v491
      %v700 = vunpack.c.l.b16 %v492
      %v701 = vpack.c.b16 %v608, %v605
      %v702 = vpack.c.b16 %v609, %v606
      %v703 = vpack.c.b16 %v610, %v607
      %v704 = vpack.c.b16 %v614, %v611
      %v705 = vpack.c.b16 %v615, %v612
      %v706 = vpack.c.b16 %v616, %v613
      %v707 = vpack.c.b16 %v620, %v617
      %v708 = vpack.c.b16 %v621, %v618
      %v709 = vpack.c.b16 %v622, %v619
      %v710 = vpack.c.b16 %v626, %v623
      %v711 = vpack.c.b16 %v627, %v624
      %v712 = vpack.c.b16 %v628, %v625
      %v713 = vpack.c.b16 %v632, %v629
      %v714 = vpack.c.b16 %v633, %v630
      %v715 = vpack.c.b16 %v634, %v631
      %v716 = vpack.c.b16 %v638, %v635
      %v717 = vpack.c.b16 %v639, %v636
      %v718 = vpack.c.b16 %v640, %v637
      %v719 = vpack.c.b16 %v644, %v641
      %v720 = vpack.c.b16 %v645, %v642
      %v721 = vpack.c.b16 %v646, %v643
      %v722 = vpack.c.b16 %v650, %v647
      %v723 = vpack.c.b16 %v651, %v648
      %v724 = vpack.c.b16 %v652, %v649
      %v725 = vpack.c.b16 %v656, %v653
      %v726 = vpack.c.b16 %v657, %v654
      %v727 = vpack.c.b16 %v658, %v655
      %v728 = vpack.c.b16 %v662, %v659
      %v729 = vpack.c.b16 %v663, %v660
      %v730 = vpack.c.b16 %v664, %v661
      %v731 = vpack.c.b16 %v668, %v665
      %v732 = vpack.c.b16 %v669, %v666
      %v733 = vpack.c.b16 %v670, %v667
      %v734 = vpack.c.b16 %v674, %v671
      %v735 = vpack.c.b16 %v675, %v672
      %v736 = vpack.c.b16 %v676, %v673
      %v737 = vpack.c.b16 %v680, %v677
      %v738 = vpack.c.b16 %v681, %v678
      %v739 = vpack.c.b16 %v682, %v679
      %v740 = vpack.c.b16 %v686, %v683
      %v741 = vpack.c.b16 %v687, %v684
      %v742 = vpack.c.b16 %v688, %v685
      %v743 = vpack.c.b16 %v692, %v689
      %v744 = vpack.c.b16 %v693, %v690
      %v745 = vpack.c.b16 %v694, %v691
      %v746 = vpack.c.b16 %v698, %v695
      %v747 = vpack.c.b16 %v699, %v696
      %v748 = vpack.c.b16 %v700, %v697
      %v845 = vunpack.c.l.b16 %v493
      %v846 = vunpack.c.l.b16 %v494
      %v847 = vunpack.c.l.b16 %v495
      %v848 = vunpack.c.l.b16 %v496
      %v849 = vunpack.c.l.b16 %v497
      %v850 = vunpack.c.l.b16 %v498
      %v851 = vunpack.c.l.b16 %v499
      %v852 = vunpack.c.l.b16 %v500
      %v853 = vunpack.c.l.b16 %v501
      %v854 = vunpack.c.l.b16 %v502
      %v855 = vunpack.c.l.b16 %v503
      %v856 = vunpack.c.l.b16 %v504
      %v857 = vunpack.c.l.b16 %v505
      %v858 = vunpack.c.l.b16 %v506
      %v859 = vunpack.c.l.b16 %v507
      %v860 = vunpack.c.l.b16 %v508
      %v861 = vunpack.c.l.b16 %v509
      %v862 = vunpack.c.l.b16 %v510
      %v863 = vunpack.c.l.b16 %v511
      %v864 = vunpack.c.l.b16 %v512
      %v865 = vunpack.c.l.b16 %v513
      %v866 = vunpack.c.l.b16 %v514
      %v867 = vunpack.c.l.b16 %v515
      %v868 = vunpack.c.l.b16 %v516
      %v869 = vunpack.c.l.b16 %v517
      %v870 = vunpack.c.l.b16 %v518
      %v871 = vunpack.c.l.b16 %v519
      %v872 = vunpack.c.l.b16 %v520
      %v873 = vunpack.c.l.b16 %v521
      %v874 = vunpack.c.l.b16 %v522
      %v875 = vunpack.c.l.b16 %v523
      %v876 = vunpack.c.l.b16 %v524
      %v877 = vunpack.c.l.b16 %v525
      %v878 = vunpack.c.l.b16 %v526
      %v879 = vunpack.c.l.b16 %v527
      %v880 = vunpack.c.l.b16 %v528
      %v881 = vunpack.c.l.b16 %v529
      %v882 = vunpack.c.l.b16 %v530
      %v883 = vunpack.c.l.b16 %v531
      %v884 = vunpack.c.l.b16 %v532
      %v885 = vunpack.c.l.b16 %v533
      %v886 = vunpack.c.l.b16 %v534
      %v887 = vunpack.c.l.b16 %v535
      %v888 = vunpack.c.l.b16 %v536
      %v889 = vunpack.c.l.b16 %v537
      %v890 = vunpack.c.l.b16 %v538
      %v891 = vunpack.c.l.b16 %v539
      %v892 = vunpack.c.l.b16 %v540
      %v893 = vpack.c.b16 %v846, %v845
      %v894 = vpack.c.b16 %v848, %v847
      %v895 = vpack.c.b16 %v850, %v849
      %v896 = vpack.c.b16 %v852, %v851
      %v897 = vpack.c.b16 %v854, %v853
      %v898 = vpack.c.b16 %v856, %v855
      %v899 = vpack.c.b16 %v858, %v857
      %v900 = vpack.c.b16 %v860, %v859
      %v901 = vpack.c.b16 %v862, %v861
      %v902 = vpack.c.b16 %v864, %v863
      %v903 = vpack.c.b16 %v866, %v865
      %v904 = vpack.c.b16 %v868, %v867
      %v905 = vpack.c.b16 %v870, %v869
      %v906 = vpack.c.b16 %v872, %v871
      %v907 = vpack.c.b16 %v874, %v873
      %v908 = vpack.c.b16 %v876, %v875
      %v909 = vpack.c.b16 %v878, %v877
      %v910 = vpack.c.b16 %v880, %v879
      %v911 = vpack.c.b16 %v882, %v881
      %v912 = vpack.c.b16 %v884, %v883
      %v913 = vpack.c.b16 %v886, %v885
      %v914 = vpack.c.b16 %v888, %v887
      %v915 = vpack.c.b16 %v890, %v889
      %v916 = vpack.c.b16 %v892, %v891
      %941 = vmatpush.bf16.msra.mxu0 %v900
      %942 = vmatpush.bf16.msra.mxu0 %v899
      %943 = vmatpush.bf16.msra.mxu0 %v898
      %944 = vmatpush.bf16.msra.mxu0 %v897
      %945 = vmatpush.bf16.msra.mxu0 %v896
      %946 = vmatpush.bf16.msra.mxu0 %v895
      %947 = vmatpush.bf16.msra.mxu0 %v894
      %948 = vmatpush.bf16.msra.mxu0 %v893
      %949 = vmatmul.bf16.gmra.mxu0 %v701
      %v950 = vpop.f32.mrf.mxu0
      %v951 = vadd.f32 0.0, %v950
      %v952 = vpop.f32.mrf.mxu0
      %v953 = vadd.f32 0.0, %v952
      %954 = vmatmul.bf16.gmra.mxu0 %v704
      %v955 = vpop.f32.mrf.mxu0
      %v956 = vadd.f32 0.0, %v955
      %v957 = vpop.f32.mrf.mxu0
      %v958 = vadd.f32 0.0, %v957
      %959 = vmatmul.bf16.gmra.mxu0 %v707
      %v960 = vpop.f32.mrf.mxu0
      %v961 = vadd.f32 0.0, %v960
      %v962 = vpop.f32.mrf.mxu0
      %v963 = vadd.f32 0.0, %v962
      %964 = vmatmul.bf16.gmra.mxu0 %v710
      %v965 = vpop.f32.mrf.mxu0
      %v966 = vadd.f32 0.0, %v965
      %v967 = vpop.f32.mrf.mxu0
      %v968 = vadd.f32 0.0, %v967
      %969 = vmatmul.bf16.gmra.mxu0 %v713
      %v970 = vpop.f32.mrf.mxu0
      %v971 = vadd.f32 0.0, %v970
      %v972 = vpop.f32.mrf.mxu0
      %v973 = vadd.f32 0.0, %v972
      %974 = vmatmul.bf16.gmra.mxu0 %v716
      %v975 = vpop.f32.mrf.mxu0
      %v976 = vadd.f32 0.0, %v975
      %v977 = vpop.f32.mrf.mxu0
      %v978 = vadd.f32 0.0, %v977
      %979 = vmatmul.bf16.gmra.mxu0 %v719
      %v980 = vpop.f32.mrf.mxu0
      %v981 = vadd.f32 0.0, %v980
      %v982 = vpop.f32.mrf.mxu0
      %v983 = vadd.f32 0.0, %v982
      %984 = vmatmul.bf16.gmra.mxu0 %v722
      %v985 = vpop.f32.mrf.mxu0
      %v986 = vadd.f32 0.0, %v985
      %v987 = vpop.f32.mrf.mxu0
      %v988 = vadd.f32 0.0, %v987
      %989 = vmatmul.bf16.gmra.mxu0 %v725
      %v990 = vpop.f32.mrf.mxu0
      %v991 = vadd.f32 0.0, %v990
      %v992 = vpop.f32.mrf.mxu0
      %v993 = vadd.f32 0.0, %v992
      %994 = vmatmul.bf16.gmra.mxu0 %v728
      %v995 = vpop.f32.mrf.mxu0
      %v996 = vadd.f32 0.0, %v995
      %v997 = vpop.f32.mrf.mxu0
      %v998 = vadd.f32 0.0, %v997
      %999 = vmatmul.bf16.gmra.mxu0 %v731
      %v1000 = vpop.f32.mrf.mxu0
      %v1001 = vadd.f32 0.0, %v1000
      %v1002 = vpop.f32.mrf.mxu0
      %v1003 = vadd.f32 0.0, %v1002
      %1004 = vmatmul.bf16.gmra.mxu0 %v734
      %v1005 = vpop.f32.mrf.mxu0
      %v1006 = vadd.f32 0.0, %v1005
      %v1007 = vpop.f32.mrf.mxu0
      %v1008 = vadd.f32 0.0, %v1007
      %1009 = vmatmul.bf16.gmra.mxu0 %v737
      %v1010 = vpop.f32.mrf.mxu0
      %v1011 = vadd.f32 0.0, %v1010
      %v1012 = vpop.f32.mrf.mxu0
      %v1013 = vadd.f32 0.0, %v1012
      %1014 = vmatmul.bf16.gmra.mxu0 %v740
      %v1015 = vpop.f32.mrf.mxu0
      %v1016 = vadd.f32 0.0, %v1015
      %v1017 = vpop.f32.mrf.mxu0
      %v1018 = vadd.f32 0.0, %v1017
      %1019 = vmatmul.bf16.gmra.mxu0 %v743
      %v1020 = vpop.f32.mrf.mxu0
      %v1021 = vadd.f32 0.0, %v1020
      %v1022 = vpop.f32.mrf.mxu0
      %v1023 = vadd.f32 0.0, %v1022
      %1024 = vmatmul.bf16.gmra.mxu0 %v746
      %v1025 = vpop.f32.mrf.mxu0
      %v1026 = vadd.f32 0.0, %v1025
      %v1027 = vpop.f32.mrf.mxu0
      %v1028 = vadd.f32 0.0, %v1027
      %1029 = vdwg.mxu0
      %1030 = vmatpush.bf16.msra.mxu0 %v908
      %1031 = vmatpush.bf16.msra.mxu0 %v907
      %1032 = vmatpush.bf16.msra.mxu0 %v906
      %1033 = vmatpush.bf16.msra.mxu0 %v905
      %1034 = vmatpush.bf16.msra.mxu0 %v904
      %1035 = vmatpush.bf16.msra.mxu0 %v903
      %1036 = vmatpush.bf16.msra.mxu0 %v902
      %1037 = vmatpush.bf16.msra.mxu0 %v901
      %1038 = vmatmul.bf16.gmra.mxu0 %v702
      %v1039 = vpop.f32.mrf.mxu0
      %v1040 = vadd.f32 %v951, %v1039
      %v1041 = vpop.f32.mrf.mxu0
      %v1042 = vadd.f32 %v953, %v1041
      %1043 = vmatmul.bf16.gmra.mxu0 %v705
      %v1044 = vpop.f32.mrf.mxu0
      %v1045 = vadd.f32 %v956, %v1044
      %v1046 = vpop.f32.mrf.mxu0
      %v1047 = vadd.f32 %v958, %v1046
      %1048 = vmatmul.bf16.gmra.mxu0 %v708
      %v1049 = vpop.f32.mrf.mxu0
      %v1050 = vadd.f32 %v961, %v1049
      %v1051 = vpop.f32.mrf.mxu0
      %v1052 = vadd.f32 %v963, %v1051
      %1053 = vmatmul.bf16.gmra.mxu0 %v711
      %v1054 = vpop.f32.mrf.mxu0
      %v1055 = vadd.f32 %v966, %v1054
      %v1056 = vpop.f32.mrf.mxu0
      %v1057 = vadd.f32 %v968, %v1056
      %1058 = vmatmul.bf16.gmra.mxu0 %v714
      %v1059 = vpop.f32.mrf.mxu0
      %v1060 = vadd.f32 %v971, %v1059
      %v1061 = vpop.f32.mrf.mxu0
      %v1062 = vadd.f32 %v973, %v1061
      %1063 = vmatmul.bf16.gmra.mxu0 %v717
      %v1064 = vpop.f32.mrf.mxu0
      %v1065 = vadd.f32 %v976, %v1064
      %v1066 = vpop.f32.mrf.mxu0
      %v1067 = vadd.f32 %v978, %v1066
      %1068 = vmatmul.bf16.gmra.mxu0 %v720
      %v1069 = vpop.f32.mrf.mxu0
      %v1070 = vadd.f32 %v981, %v1069
      %v1071 = vpop.f32.mrf.mxu0
      %v1072 = vadd.f32 %v983, %v1071
      %1073 = vmatmul.bf16.gmra.mxu0 %v723
      %v1074 = vpop.f32.mrf.mxu0
      %v1075 = vadd.f32 %v986, %v1074
      %v1076 = vpop.f32.mrf.mxu0
      %v1077 = vadd.f32 %v988, %v1076
      %1078 = vmatmul.bf16.gmra.mxu0 %v726
      %v1079 = vpop.f32.mrf.mxu0
      %v1080 = vadd.f32 %v991, %v1079
      %v1081 = vpop.f32.mrf.mxu0
      %v1082 = vadd.f32 %v993, %v1081
      %1083 = vmatmul.bf16.gmra.mxu0 %v729
      %v1084 = vpop.f32.mrf.mxu0
      %v1085 = vadd.f32 %v996, %v1084
      %v1086 = vpop.f32.mrf.mxu0
      %v1087 = vadd.f32 %v998, %v1086
      %1088 = vmatmul.bf16.gmra.mxu0 %v732
      %v1089 = vpop.f32.mrf.mxu0
      %v1090 = vadd.f32 %v1001, %v1089
      %v1091 = vpop.f32.mrf.mxu0
      %v1092 = vadd.f32 %v1003, %v1091
      %1093 = vmatmul.bf16.gmra.mxu0 %v735
      %v1094 = vpop.f32.mrf.mxu0
      %v1095 = vadd.f32 %v1006, %v1094
      %v1096 = vpop.f32.mrf.mxu0
      %v1097 = vadd.f32 %v1008, %v1096
      %1098 = vmatmul.bf16.gmra.mxu0 %v738
      %v1099 = vpop.f32.mrf.mxu0
      %v1100 = vadd.f32 %v1011, %v1099
      %v1101 = vpop.f32.mrf.mxu0
      %v1102 = vadd.f32 %v1013, %v1101
      %1103 = vmatmul.bf16.gmra.mxu0 %v741
      %v1104 = vpop.f32.mrf.mxu0
      %v1105 = vadd.f32 %v1016, %v1104
      %v1106 = vpop.f32.mrf.mxu0
      %v1107 = vadd.f32 %v1018, %v1106
      %1108 = vmatmul.bf16.gmra.mxu0 %v744
      %v1109 = vpop.f32.mrf.mxu0
      %v1110 = vadd.f32 %v1021, %v1109
      %v1111 = vpop.f32.mrf.mxu0
      %v1112 = vadd.f32 %v1023, %v1111
      %1113 = vmatmul.bf16.gmra.mxu0 %v747
      %v1114 = vpop.f32.mrf.mxu0
      %v1115 = vadd.f32 %v1026, %v1114
      %v1116 = vpop.f32.mrf.mxu0
      %v1117 = vadd.f32 %v1028, %v1116
      %1118 = vdwg.mxu0
      %1119 = vmatpush.bf16.msra.mxu0 %v916
      %1120 = vmatpush.bf16.msra.mxu0 %v915
      %1121 = vmatpush.bf16.msra.mxu0 %v914
      %1122 = vmatpush.bf16.msra.mxu0 %v913
      %1123 = vmatpush.bf16.msra.mxu0 %v912
      %1124 = vmatpush.bf16.msra.mxu0 %v911
      %1125 = vmatpush.bf16.msra.mxu0 %v910
      %1126 = vmatpush.bf16.msra.mxu0 %v909
      %1127 = vmatmul.bf16.gmra.mxu0 %v703
      %v1128 = vpop.f32.mrf.mxu0
      %v1129 = vadd.f32 %v1040, %v1128
      %v1130 = vpop.f32.mrf.mxu0
      %v1131 = vadd.f32 %v1042, %v1130
      %1132 = vmatmul.bf16.gmra.mxu0 %v706
      %v1133 = vpop.f32.mrf.mxu0
      %v1134 = vadd.f32 %v1045, %v1133
      %v1135 = vpop.f32.mrf.mxu0
      %v1136 = vadd.f32 %v1047, %v1135
      %1137 = vmatmul.bf16.gmra.mxu0 %v709
      %v1138 = vpop.f32.mrf.mxu0
      %v1139 = vadd.f32 %v1050, %v1138
      %v1140 = vpop.f32.mrf.mxu0
      %v1141 = vadd.f32 %v1052, %v1140
      %1142 = vmatmul.bf16.gmra.mxu0 %v712
      %v1143 = vpop.f32.mrf.mxu0
      %v1144 = vadd.f32 %v1055, %v1143
      %v1145 = vpop.f32.mrf.mxu0
      %v1146 = vadd.f32 %v1057, %v1145
      %1147 = vmatmul.bf16.gmra.mxu0 %v715
      %v1148 = vpop.f32.mrf.mxu0
      %v1149 = vadd.f32 %v1060, %v1148
      %v1150 = vpop.f32.mrf.mxu0
      %v1151 = vadd.f32 %v1062, %v1150
      %1152 = vmatmul.bf16.gmra.mxu0 %v718
      %v1153 = vpop.f32.mrf.mxu0
      %v1154 = vadd.f32 %v1065, %v1153
      %v1155 = vpop.f32.mrf.mxu0
      %v1156 = vadd.f32 %v1067, %v1155
      %1157 = vmatmul.bf16.gmra.mxu0 %v721
      %v1158 = vpop.f32.mrf.mxu0
      %v1159 = vadd.f32 %v1070, %v1158
      %v1160 = vpop.f32.mrf.mxu0
      %v1161 = vadd.f32 %v1072, %v1160
      %1162 = vmatmul.bf16.gmra.mxu0 %v724
      %v1163 = vpop.f32.mrf.mxu0
      %v1164 = vadd.f32 %v1075, %v1163
      %v1165 = vpop.f32.mrf.mxu0
      %v1166 = vadd.f32 %v1077, %v1165
      %1167 = vmatmul.bf16.gmra.mxu0 %v727
      %v1168 = vpop.f32.mrf.mxu0
      %v1169 = vadd.f32 %v1080, %v1168
      %v1170 = vpop.f32.mrf.mxu0
      %v1171 = vadd.f32 %v1082, %v1170
      %1172 = vmatmul.bf16.gmra.mxu0 %v730
      %v1173 = vpop.f32.mrf.mxu0
      %v1174 = vadd.f32 %v1085, %v1173
      %v1175 = vpop.f32.mrf.mxu0
      %v1176 = vadd.f32 %v1087, %v1175
      %1177 = vmatmul.bf16.gmra.mxu0 %v733
      %v1178 = vpop.f32.mrf.mxu0
      %v1179 = vadd.f32 %v1090, %v1178
      %v1180 = vpop.f32.mrf.mxu0
      %v1181 = vadd.f32 %v1092, %v1180
      %1182 = vmatmul.bf16.gmra.mxu0 %v736
      %v1183 = vpop.f32.mrf.mxu0
      %v1184 = vadd.f32 %v1095, %v1183
      %v1185 = vpop.f32.mrf.mxu0
      %v1186 = vadd.f32 %v1097, %v1185
      %1187 = vmatmul.bf16.gmra.mxu0 %v739
      %v1188 = vpop.f32.mrf.mxu0
      %v1189 = vadd.f32 %v1100, %v1188
      %v1190 = vpop.f32.mrf.mxu0
      %v1191 = vadd.f32 %v1102, %v1190
      %1192 = vmatmul.bf16.gmra.mxu0 %v742
      %v1193 = vpop.f32.mrf.mxu0
      %v1194 = vadd.f32 %v1105, %v1193
      %v1195 = vpop.f32.mrf.mxu0
      %v1196 = vadd.f32 %v1107, %v1195
      %1197 = vmatmul.bf16.gmra.mxu0 %v745
      %v1198 = vpop.f32.mrf.mxu0
      %v1199 = vadd.f32 %v1110, %v1198
      %v1200 = vpop.f32.mrf.mxu0
      %v1201 = vadd.f32 %v1112, %v1200
      %1202 = vmatmul.bf16.gmra.mxu0 %v748
      %v1203 = vpop.f32.mrf.mxu0
      %v1204 = vadd.f32 %v1115, %v1203
      %v1205 = vpop.f32.mrf.mxu0
      %v1206 = vadd.f32 %v1117, %v1205
      %1207 = vdwg.mxu0
      %v1240 = vunpack.c.l.b16 %v381
      %v1241 = vunpack.c.l.b16 %v382
      %v1242 = vunpack.c.l.b16 %v383
      %v1243 = vunpack.c.l.b16 %v384
      %v1244 = vunpack.c.l.b16 %v385
      %v1245 = vunpack.c.l.b16 %v386
      %v1246 = vunpack.c.l.b16 %v387
      %v1247 = vunpack.c.l.b16 %v388
      %v1248 = vunpack.c.l.b16 %v389
      %v1249 = vunpack.c.l.b16 %v390
      %v1250 = vunpack.c.l.b16 %v391
      %v1251 = vunpack.c.l.b16 %v392
      %v1252 = vunpack.c.l.b16 %v393
      %v1253 = vunpack.c.l.b16 %v394
      %v1254 = vunpack.c.l.b16 %v395
      %v1255 = vunpack.c.l.b16 %v396
      %v1256 = vunpack.c.l.b16 %v397
      %v1257 = vunpack.c.l.b16 %v398
      %v1258 = vunpack.c.l.b16 %v399
      %v1259 = vunpack.c.l.b16 %v400
      %v1260 = vunpack.c.l.b16 %v401
      %v1261 = vunpack.c.l.b16 %v402
      %v1262 = vunpack.c.l.b16 %v403
      %v1263 = vunpack.c.l.b16 %v404
      %v1264 = vunpack.c.l.b16 %v405
      %v1265 = vunpack.c.l.b16 %v406
      %v1266 = vunpack.c.l.b16 %v407
      %v1267 = vunpack.c.l.b16 %v408
      %v1268 = vunpack.c.l.b16 %v409
      %v1269 = vunpack.c.l.b16 %v410
      %v1270 = vunpack.c.l.b16 %v411
      %v1271 = vunpack.c.l.b16 %v412
      %v1272 = vpack.c.b16 %v1241, %v1240
      %v1273 = vpack.c.b16 %v1243, %v1242
      %v1274 = vpack.c.b16 %v1245, %v1244
      %v1275 = vpack.c.b16 %v1247, %v1246
      %v1276 = vpack.c.b16 %v1249, %v1248
      %v1277 = vpack.c.b16 %v1251, %v1250
      %v1278 = vpack.c.b16 %v1253, %v1252
      %v1279 = vpack.c.b16 %v1255, %v1254
      %v1280 = vpack.c.b16 %v1257, %v1256
      %v1281 = vpack.c.b16 %v1259, %v1258
      %v1282 = vpack.c.b16 %v1261, %v1260
      %v1283 = vpack.c.b16 %v1263, %v1262
      %v1284 = vpack.c.b16 %v1265, %v1264
      %v1285 = vpack.c.b16 %v1267, %v1266
      %v1286 = vpack.c.b16 %v1269, %v1268
      %v1287 = vpack.c.b16 %v1271, %v1270
      %v1320 = vunpack.c.l.b16 %v413
      %v1321 = vunpack.c.l.b16 %v414
      %v1322 = vunpack.c.l.b16 %v415
      %v1323 = vunpack.c.l.b16 %v416
      %v1324 = vunpack.c.l.b16 %v417
      %v1325 = vunpack.c.l.b16 %v418
      %v1326 = vunpack.c.l.b16 %v419
      %v1327 = vunpack.c.l.b16 %v420
      %v1328 = vunpack.c.l.b16 %v421
      %v1329 = vunpack.c.l.b16 %v422
      %v1330 = vunpack.c.l.b16 %v423
      %v1331 = vunpack.c.l.b16 %v424
      %v1332 = vunpack.c.l.b16 %v425
      %v1333 = vunpack.c.l.b16 %v426
      %v1334 = vunpack.c.l.b16 %v427
      %v1335 = vunpack.c.l.b16 %v428
      %v1336 = vpack.c.b16 %v1321, %v1320
      %v1337 = vpack.c.b16 %v1323, %v1322
      %v1338 = vpack.c.b16 %v1325, %v1324
      %v1339 = vpack.c.b16 %v1327, %v1326
      %v1340 = vpack.c.b16 %v1329, %v1328
      %v1341 = vpack.c.b16 %v1331, %v1330
      %v1342 = vpack.c.b16 %v1333, %v1332
      %v1343 = vpack.c.b16 %v1335, %v1334
      %1352 = vmatpush.bf16.msra.mxu0 %v1343
      %1353 = vmatpush.bf16.msra.mxu0 %v1342
      %1354 = vmatpush.bf16.msra.mxu0 %v1341
      %1355 = vmatpush.bf16.msra.mxu0 %v1340
      %1356 = vmatpush.bf16.msra.mxu0 %v1339
      %1357 = vmatpush.bf16.msra.mxu0 %v1338
      %1358 = vmatpush.bf16.msra.mxu0 %v1337
      %1359 = vmatpush.bf16.msra.mxu0 %v1336
      %1360 = vmatmul.bf16.gmra.mxu0 %v1272
      %v1361 = vpop.f32.mrf.mxu0
      %v1362 = vadd.f32 %v1129, %v1361
      %v1363 = vpop.f32.mrf.mxu0
      %v1364 = vadd.f32 %v1131, %v1363
      %1365 = vmatmul.bf16.gmra.mxu0 %v1273
      %v1366 = vpop.f32.mrf.mxu0
      %v1367 = vadd.f32 %v1134, %v1366
      %v1368 = vpop.f32.mrf.mxu0
      %v1369 = vadd.f32 %v1136, %v1368
      %1370 = vmatmul.bf16.gmra.mxu0 %v1274
      %v1371 = vpop.f32.mrf.mxu0
      %v1372 = vadd.f32 %v1139, %v1371
      %v1373 = vpop.f32.mrf.mxu0
      %v1374 = vadd.f32 %v1141, %v1373
      %1375 = vmatmul.bf16.gmra.mxu0 %v1275
      %v1376 = vpop.f32.mrf.mxu0
      %v1377 = vadd.f32 %v1144, %v1376
      %v1378 = vpop.f32.mrf.mxu0
      %v1379 = vadd.f32 %v1146, %v1378
      %1380 = vmatmul.bf16.gmra.mxu0 %v1276
      %v1381 = vpop.f32.mrf.mxu0
      %v1382 = vadd.f32 %v1149, %v1381
      %v1383 = vpop.f32.mrf.mxu0
      %v1384 = vadd.f32 %v1151, %v1383
      %1385 = vmatmul.bf16.gmra.mxu0 %v1277
      %v1386 = vpop.f32.mrf.mxu0
      %v1387 = vadd.f32 %v1154, %v1386
      %v1388 = vpop.f32.mrf.mxu0
      %v1389 = vadd.f32 %v1156, %v1388
      %1390 = vmatmul.bf16.gmra.mxu0 %v1278
      %v1391 = vpop.f32.mrf.mxu0
      %v1392 = vadd.f32 %v1159, %v1391
      %v1393 = vpop.f32.mrf.mxu0
      %v1394 = vadd.f32 %v1161, %v1393
      %1395 = vmatmul.bf16.gmra.mxu0 %v1279
      %v1396 = vpop.f32.mrf.mxu0
      %v1397 = vadd.f32 %v1164, %v1396
      %v1398 = vpop.f32.mrf.mxu0
      %v1399 = vadd.f32 %v1166, %v1398
      %1400 = vmatmul.bf16.gmra.mxu0 %v1280
      %v1401 = vpop.f32.mrf.mxu0
      %v1402 = vadd.f32 %v1169, %v1401
      %v1403 = vpop.f32.mrf.mxu0
      %v1404 = vadd.f32 %v1171, %v1403
      %1405 = vmatmul.bf16.gmra.mxu0 %v1281
      %v1406 = vpop.f32.mrf.mxu0
      %v1407 = vadd.f32 %v1174, %v1406
      %v1408 = vpop.f32.mrf.mxu0
      %v1409 = vadd.f32 %v1176, %v1408
      %1410 = vmatmul.bf16.gmra.mxu0 %v1282
      %v1411 = vpop.f32.mrf.mxu0
      %v1412 = vadd.f32 %v1179, %v1411
      %v1413 = vpop.f32.mrf.mxu0
      %v1414 = vadd.f32 %v1181, %v1413
      %1415 = vmatmul.bf16.gmra.mxu0 %v1283
      %v1416 = vpop.f32.mrf.mxu0
      %v1417 = vadd.f32 %v1184, %v1416
      %v1418 = vpop.f32.mrf.mxu0
      %v1419 = vadd.f32 %v1186, %v1418
      %1420 = vmatmul.bf16.gmra.mxu0 %v1284
      %v1421 = vpop.f32.mrf.mxu0
      %v1422 = vadd.f32 %v1189, %v1421
      %v1423 = vpop.f32.mrf.mxu0
      %v1424 = vadd.f32 %v1191, %v1423
      %1425 = vmatmul.bf16.gmra.mxu0 %v1285
      %v1426 = vpop.f32.mrf.mxu0
      %v1427 = vadd.f32 %v1194, %v1426
      %v1428 = vpop.f32.mrf.mxu0
      %v1429 = vadd.f32 %v1196, %v1428
      %1430 = vmatmul.bf16.gmra.mxu0 %v1286
      %v1431 = vpop.f32.mrf.mxu0
      %v1432 = vadd.f32 %v1199, %v1431
      %v1433 = vpop.f32.mrf.mxu0
      %v1434 = vadd.f32 %v1201, %v1433
      %1435 = vmatmul.bf16.gmra.mxu0 %v1287
      %v1436 = vpop.f32.mrf.mxu0
      %v1437 = vadd.f32 %v1204, %v1436
      %v1438 = vpop.f32.mrf.mxu0
      %v1439 = vadd.f32 %v1206, %v1438
      %1440 = vdwg.mxu0
      %v1441 = vld [vmem:[%s362] sm:$0x1]
      %v1443 = vperm.slane %v1441, 0
      %v1445 = vadd.f32 %v1362, %v1443
      %v1446 = vadd.f32 %v1364, %v1443
      %v1447 = vadd.f32 %v1367, %v1443
      %v1448 = vadd.f32 %v1369, %v1443
      %v1449 = vadd.f32 %v1372, %v1443
      %v1450 = vadd.f32 %v1374, %v1443
      %v1451 = vadd.f32 %v1377, %v1443
      %v1452 = vadd.f32 %v1379, %v1443
      %v1453 = vadd.f32 %v1382, %v1443
      %v1454 = vadd.f32 %v1384, %v1443
      %v1455 = vadd.f32 %v1387, %v1443
      %v1456 = vadd.f32 %v1389, %v1443
      %v1457 = vadd.f32 %v1392, %v1443
      %v1458 = vadd.f32 %v1394, %v1443
      %v1459 = vadd.f32 %v1397, %v1443
      %v1460 = vadd.f32 %v1399, %v1443
      %v1461 = vadd.f32 %v1402, %v1443
      %v1462 = vadd.f32 %v1404, %v1443
      %v1463 = vadd.f32 %v1407, %v1443
      %v1464 = vadd.f32 %v1409, %v1443
      %v1465 = vadd.f32 %v1412, %v1443
      %v1466 = vadd.f32 %v1414, %v1443
      %v1467 = vadd.f32 %v1417, %v1443
      %v1468 = vadd.f32 %v1419, %v1443
      %v1469 = vadd.f32 %v1422, %v1443
      %v1470 = vadd.f32 %v1424, %v1443
      %v1471 = vadd.f32 %v1427, %v1443
      %v1472 = vadd.f32 %v1429, %v1443
      %v1473 = vadd.f32 %v1432, %v1443
      %v1474 = vadd.f32 %v1434, %v1443
      %v1475 = vadd.f32 %v1437, %v1443
      %v1476 = vadd.f32 %v1439, %v1443
      %v1477 = vld [vmem:[%s370] sm:$0xff]
      %v1478 = vld [vmem:[%s370 + $0x8] sm:$0xff]
      %v1479 = vld [vmem:[%s370 + $0x10] sm:$0xff]
      %v1480 = vld [vmem:[%s370 + $0x18] sm:$0xff]
      %v1481 = vld [vmem:[%s370 + $0x20] sm:$0xff]
      %v1482 = vld [vmem:[%s370 + $0x28] sm:$0xff]
      %v1483 = vld [vmem:[%s370 + $0x30] sm:$0xff]
      %v1484 = vld [vmem:[%s370 + $0x38] sm:$0xff]
      %v1485 = vld [vmem:[%s370 + $0x40] sm:$0xff]
      %v1486 = vld [vmem:[%s370 + $0x48] sm:$0xff]
      %v1487 = vld [vmem:[%s370 + $0x50] sm:$0xff]
      %v1488 = vld [vmem:[%s370 + $0x58] sm:$0xff]
      %v1489 = vld [vmem:[%s370 + $0x60] sm:$0xff]
      %v1490 = vld [vmem:[%s370 + $0x68] sm:$0xff]
      %v1491 = vld [vmem:[%s370 + $0x70] sm:$0xff]
      %v1492 = vld [vmem:[%s370 + $0x78] sm:$0xff]
      %v1493 = vld [vmem:[%s370 + $0x80] sm:$0xff]
      %v1494 = vld [vmem:[%s370 + $0x88] sm:$0xff]
      %v1495 = vld [vmem:[%s370 + $0x90] sm:$0xff]
      %v1496 = vld [vmem:[%s370 + $0x98] sm:$0xff]
      %v1497 = vld [vmem:[%s370 + $0xa0] sm:$0xff]
      %v1498 = vld [vmem:[%s370 + $0xa8] sm:$0xff]
      %v1499 = vld [vmem:[%s370 + $0xb0] sm:$0xff]
      %v1500 = vld [vmem:[%s370 + $0xb8] sm:$0xff]
      %v1501 = vld [vmem:[%s370 + $0xc0] sm:$0xff]
      %v1502 = vld [vmem:[%s370 + $0xc8] sm:$0xff]
      %v1503 = vld [vmem:[%s370 + $0xd0] sm:$0xff]
      %v1504 = vld [vmem:[%s370 + $0xd8] sm:$0xff]
      %v1505 = vld [vmem:[%s370 + $0xe0] sm:$0xff]
      %v1506 = vld [vmem:[%s370 + $0xe8] sm:$0xff]
      %v1507 = vld [vmem:[%s370 + $0xf0] sm:$0xff]
      %v1508 = vld [vmem:[%s370 + $0xf8] sm:$0xff]
      %v1509 = vsub.f32 0.0, %v1445
      %v1510 = vsub.f32 0.0, %v1446
      %v1511 = vsub.f32 0.0, %v1447
      %v1512 = vsub.f32 0.0, %v1448
      %v1513 = vsub.f32 0.0, %v1449
      %v1514 = vsub.f32 0.0, %v1450
      %v1515 = vsub.f32 0.0, %v1451
      %v1516 = vsub.f32 0.0, %v1452
      %v1517 = vsub.f32 0.0, %v1453
      %v1518 = vsub.f32 0.0, %v1454
      %v1519 = vsub.f32 0.0, %v1455
      %v1520 = vsub.f32 0.0, %v1456
      %v1521 = vsub.f32 0.0, %v1457
      %v1522 = vsub.f32 0.0, %v1458
      %v1523 = vsub.f32 0.0, %v1459
      %v1524 = vsub.f32 0.0, %v1460
      %v1525 = vsub.f32 0.0, %v1461
      %v1526 = vsub.f32 0.0, %v1462
      %v1527 = vsub.f32 0.0, %v1463
      %v1528 = vsub.f32 0.0, %v1464
      %v1529 = vsub.f32 0.0, %v1465
      %v1530 = vsub.f32 0.0, %v1466
      %v1531 = vsub.f32 0.0, %v1467
      %v1532 = vsub.f32 0.0, %v1468
      %v1533 = vsub.f32 0.0, %v1469
      %v1534 = vsub.f32 0.0, %v1470
      %v1535 = vsub.f32 0.0, %v1471
      %v1536 = vsub.f32 0.0, %v1472
      %v1537 = vsub.f32 0.0, %v1473
      %v1538 = vsub.f32 0.0, %v1474
      %v1539 = vsub.f32 0.0, %v1475
      %v1540 = vsub.f32 0.0, %v1476
      %v1541 = vmul.f32 %v1509, 1.442695
      %v1542 = vpow.pop %v1541
      %v1543 = vmul.f32 %v1510, 1.442695
      %v1544 = vpow.pop %v1543
      %v1545 = vmul.f32 %v1511, 1.442695
      %v1546 = vpow.pop %v1545
      %v1547 = vmul.f32 %v1512, 1.442695
      %v1548 = vpow.pop %v1547
      %v1549 = vmul.f32 %v1513, 1.442695
      %v1550 = vpow.pop %v1549
      %v1551 = vmul.f32 %v1514, 1.442695
      %v1552 = vpow.pop %v1551
      %v1553 = vmul.f32 %v1515, 1.442695
      %v1554 = vpow.pop %v1553
      %v1555 = vmul.f32 %v1516, 1.442695
      %v1556 = vpow.pop %v1555
      %v1557 = vmul.f32 %v1517, 1.442695
      %v1558 = vpow.pop %v1557
      %v1559 = vmul.f32 %v1518, 1.442695
      %v1560 = vpow.pop %v1559
      %v1561 = vmul.f32 %v1519, 1.442695
      %v1562 = vpow.pop %v1561
      %v1563 = vmul.f32 %v1520, 1.442695
      %v1564 = vpow.pop %v1563
      %v1565 = vmul.f32 %v1521, 1.442695
      %v1566 = vpow.pop %v1565
      %v1567 = vmul.f32 %v1522, 1.442695
      %v1568 = vpow.pop %v1567
      %v1569 = vmul.f32 %v1523, 1.442695
      %v1570 = vpow.pop %v1569
      %v1571 = vmul.f32 %v1524, 1.442695
      %v1572 = vpow.pop %v1571
      %v1573 = vmul.f32 %v1525, 1.442695
      %v1574 = vpow.pop %v1573
      %v1575 = vmul.f32 %v1526, 1.442695
      %v1576 = vpow.pop %v1575
      %v1577 = vmul.f32 %v1527, 1.442695
      %v1578 = vpow.pop %v1577
      %v1579 = vmul.f32 %v1528, 1.442695
      %v1580 = vpow.pop %v1579
      %v1581 = vmul.f32 %v1529, 1.442695
      %v1582 = vpow.pop %v1581
      %v1583 = vmul.f32 %v1530, 1.442695
      %v1584 = vpow.pop %v1583
      %v1585 = vmul.f32 %v1531, 1.442695
      %v1586 = vpow.pop %v1585
      %v1587 = vmul.f32 %v1532, 1.442695
      %v1588 = vpow.pop %v1587
      %v1589 = vmul.f32 %v1533, 1.442695
      %v1590 = vpow.pop %v1589
      %v1591 = vmul.f32 %v1534, 1.442695
      %v1592 = vpow.pop %v1591
      %v1593 = vmul.f32 %v1535, 1.442695
      %v1594 = vpow.pop %v1593
      %v1595 = vmul.f32 %v1536, 1.442695
      %v1596 = vpow.pop %v1595
      %v1597 = vmul.f32 %v1537, 1.442695
      %v1598 = vpow.pop %v1597
      %v1599 = vmul.f32 %v1538, 1.442695
      %v1600 = vpow.pop %v1599
      %v1601 = vmul.f32 %v1539, 1.442695
      %v1602 = vpow.pop %v1601
      %v1603 = vmul.f32 %v1540, 1.442695
      %v1604 = vpow.pop %v1603
      %v1605 = vadd.f32 %v1542, 1.0
      %v1606 = vadd.f32 %v1544, 1.0
      %v1607 = vadd.f32 %v1546, 1.0
      %v1608 = vadd.f32 %v1548, 1.0
      %v1609 = vadd.f32 %v1550, 1.0
      %v1610 = vadd.f32 %v1552, 1.0
      %v1611 = vadd.f32 %v1554, 1.0
      %v1612 = vadd.f32 %v1556, 1.0
      %v1613 = vadd.f32 %v1558, 1.0
      %v1614 = vadd.f32 %v1560, 1.0
      %v1615 = vadd.f32 %v1562, 1.0
      %v1616 = vadd.f32 %v1564, 1.0
      %v1617 = vadd.f32 %v1566, 1.0
      %v1618 = vadd.f32 %v1568, 1.0
      %v1619 = vadd.f32 %v1570, 1.0
      %v1620 = vadd.f32 %v1572, 1.0
      %v1621 = vadd.f32 %v1574, 1.0
      %v1622 = vadd.f32 %v1576, 1.0
      %v1623 = vadd.f32 %v1578, 1.0
      %v1624 = vadd.f32 %v1580, 1.0
      %v1625 = vadd.f32 %v1582, 1.0
      %v1626 = vadd.f32 %v1584, 1.0
      %v1627 = vadd.f32 %v1586, 1.0
      %v1628 = vadd.f32 %v1588, 1.0
      %v1629 = vadd.f32 %v1590, 1.0
      %v1630 = vadd.f32 %v1592, 1.0
      %v1631 = vadd.f32 %v1594, 1.0
      %v1632 = vadd.f32 %v1596, 1.0
      %v1633 = vadd.f32 %v1598, 1.0
      %v1634 = vadd.f32 %v1600, 1.0
      %v1635 = vadd.f32 %v1602, 1.0
      %v1636 = vadd.f32 %v1604, 1.0
      %v1637 = vrcp.pop %v1605
      %v1638 = vrcp.pop %v1606
      %v1639 = vrcp.pop %v1607
      %v1640 = vrcp.pop %v1608
      %v1641 = vrcp.pop %v1609
      %v1642 = vrcp.pop %v1610
      %v1643 = vrcp.pop %v1611
      %v1644 = vrcp.pop %v1612
      %v1645 = vrcp.pop %v1613
      %v1646 = vrcp.pop %v1614
      %v1647 = vrcp.pop %v1615
      %v1648 = vrcp.pop %v1616
      %v1649 = vrcp.pop %v1617
      %v1650 = vrcp.pop %v1618
      %v1651 = vrcp.pop %v1619
      %v1652 = vrcp.pop %v1620
      %v1653 = vrcp.pop %v1621
      %v1654 = vrcp.pop %v1622
      %v1655 = vrcp.pop %v1623
      %v1656 = vrcp.pop %v1624
      %v1657 = vrcp.pop %v1625
      %v1658 = vrcp.pop %v1626
      %v1659 = vrcp.pop %v1627
      %v1660 = vrcp.pop %v1628
      %v1661 = vrcp.pop %v1629
      %v1662 = vrcp.pop %v1630
      %v1663 = vrcp.pop %v1631
      %v1664 = vrcp.pop %v1632
      %v1665 = vrcp.pop %v1633
      %v1666 = vrcp.pop %v1634
      %v1667 = vrcp.pop %v1635
      %v1668 = vrcp.pop %v1636
      %v1669 = vmul.f32 %v1637, %v1477
      %v1670 = vmul.f32 %v1638, %v1478
      %v1671 = vmul.f32 %v1639, %v1479
      %v1672 = vmul.f32 %v1640, %v1480
      %v1673 = vmul.f32 %v1641, %v1481
      %v1674 = vmul.f32 %v1642, %v1482
      %v1675 = vmul.f32 %v1643, %v1483
      %v1676 = vmul.f32 %v1644, %v1484
      %v1677 = vmul.f32 %v1645, %v1485
      %v1678 = vmul.f32 %v1646, %v1486
      %v1679 = vmul.f32 %v1647, %v1487
      %v1680 = vmul.f32 %v1648, %v1488
      %v1681 = vmul.f32 %v1649, %v1489
      %v1682 = vmul.f32 %v1650, %v1490
      %v1683 = vmul.f32 %v1651, %v1491
      %v1684 = vmul.f32 %v1652, %v1492
      %v1685 = vmul.f32 %v1653, %v1493
      %v1686 = vmul.f32 %v1654, %v1494
      %v1687 = vmul.f32 %v1655, %v1495
      %v1688 = vmul.f32 %v1656, %v1496
      %v1689 = vmul.f32 %v1657, %v1497
      %v1690 = vmul.f32 %v1658, %v1498
      %v1691 = vmul.f32 %v1659, %v1499
      %v1692 = vmul.f32 %v1660, %v1500
      %v1693 = vmul.f32 %v1661, %v1501
      %v1694 = vmul.f32 %v1662, %v1502
      %v1695 = vmul.f32 %v1663, %v1503
      %v1696 = vmul.f32 %v1664, %v1504
      %v1697 = vmul.f32 %v1665, %v1505
      %v1698 = vmul.f32 %v1666, %v1506
      %v1699 = vmul.f32 %v1667, %v1507
      %v1700 = vmul.f32 %v1668, %v1508
      %1701 = vst [vmem:[%s379] sm:$0xff] %v1669
      %1702 = vst [vmem:[%s379 + $0x8] sm:$0xff] %v1670
      %1703 = vst [vmem:[%s379 + $0x10] sm:$0xff] %v1671
      %1704 = vst [vmem:[%s379 + $0x18] sm:$0xff] %v1672
      %1705 = vst [vmem:[%s379 + $0x20] sm:$0xff] %v1673
      %1706 = vst [vmem:[%s379 + $0x28] sm:$0xff] %v1674
      %1707 = vst [vmem:[%s379 + $0x30] sm:$0xff] %v1675
      %1708 = vst [vmem:[%s379 + $0x38] sm:$0xff] %v1676
      %1709 = vst [vmem:[%s379 + $0x40] sm:$0xff] %v1677
      %1710 = vst [vmem:[%s379 + $0x48] sm:$0xff] %v1678
      %1711 = vst [vmem:[%s379 + $0x50] sm:$0xff] %v1679
      %1712 = vst [vmem:[%s379 + $0x58] sm:$0xff] %v1680
      %1713 = vst [vmem:[%s379 + $0x60] sm:$0xff] %v1681
      %1714 = vst [vmem:[%s379 + $0x68] sm:$0xff] %v1682
      %1715 = vst [vmem:[%s379 + $0x70] sm:$0xff] %v1683
      %1716 = vst [vmem:[%s379 + $0x78] sm:$0xff] %v1684
      %1717 = vst [vmem:[%s379 + $0x80] sm:$0xff] %v1685
      %1718 = vst [vmem:[%s379 + $0x88] sm:$0xff] %v1686
      %1719 = vst [vmem:[%s379 + $0x90] sm:$0xff] %v1687
      %1720 = vst [vmem:[%s379 + $0x98] sm:$0xff] %v1688
      %1721 = vst [vmem:[%s379 + $0xa0] sm:$0xff] %v1689
      %1722 = vst [vmem:[%s379 + $0xa8] sm:$0xff] %v1690
      %1723 = vst [vmem:[%s379 + $0xb0] sm:$0xff] %v1691
      %1724 = vst [vmem:[%s379 + $0xb8] sm:$0xff] %v1692
      %1725 = vst [vmem:[%s379 + $0xc0] sm:$0xff] %v1693
      %1726 = vst [vmem:[%s379 + $0xc8] sm:$0xff] %v1694
      %1727 = vst [vmem:[%s379 + $0xd0] sm:$0xff] %v1695
      %1728 = vst [vmem:[%s379 + $0xd8] sm:$0xff] %v1696
      %1729 = vst [vmem:[%s379 + $0xe0] sm:$0xff] %v1697
      %1730 = vst [vmem:[%s379 + $0xe8] sm:$0xff] %v1698
      %1731 = vst [vmem:[%s379 + $0xf0] sm:$0xff] %v1699
      %1732 = vst [vmem:[%s379 + $0xf8] sm:$0xff] %v1700
      %s1733 = smul.u32 32, %s21
      %p1734 = scmp.lt.s32.totalorder %s1733, 63
      %s1735 = scalar_select %p1734, %s1733, 63
      %p1736 = scmp.lt.s32.totalorder %s22, 0
      %s1737 = scalar_select %p1736, %s22, 0
      %s1738 = sadd.s32 %s1737, %s1735
      %s1739 = smul.addr %s1738, 8
      %s1740 = scalar_lea.vmem %s6, %s1739
      // Predicated region
      $region45: #{biconvgru_cell.2} parent=43 // pred_check
        %p1741 = pneg %p207
      $region46: #{biconvgru_cell.2} parent=43 // pred_check_branch
        %1743 = sbr.rel (%p1741) target = $region48
      $region47: #{biconvgru_cell.2} parent=43 // pred_region
        %s1744 = smul.u32 32, %s21
      $region48: #{biconvgru_cell.2} parent=43 // pred_fallthru
        _
    $region44: #{biconvgru_cell.2} parent=5 // pred_fallthru
      _
    %p1745 = scmp.le.s32.totalorder 2, %s12
    // Predicated region
    $region49: #{biconvgru_cell.2} parent=5 // pred_check
      %p1746 = pneg %p1745
    $region50: #{biconvgru_cell.2} parent=5 // pred_check_branch
      %1748 = sbr.rel (%p1746) target = $region52
    $region51: #{biconvgru_cell.2} parent=5 // pred_region
      %s1749 = ssub.s32 %s12, 2
      // Predicated region
      $region53: #{biconvgru_cell.2} parent=51 // pred_check
        %p1750 = pneg %p213
      $region54: #{biconvgru_cell.2} parent=51 // pred_check_branch
        %1752 = sbr.rel (%p1750) target = $region56
      $region55: #{biconvgru_cell.2} parent=51 // pred_region
        %s1753 = smul.u32 32, %s23
        %p1754 = scmp.lt.s32.totalorder %s1753, 63
        %s1755 = scalar_select %p1754, %s1753, 63
        %p1756 = scmp.lt.s32.totalorder %s24, 0
        %s1757 = scalar_select %p1756, %s24, 0
        %s1758 = sadd.s32 %s1757, %s1755
        %s1759 = smul.addr %s1758, 8
        %s1760 = scalar_lea.vmem %s6, %s1759
      $region56: #{biconvgru_cell.2} parent=51 // pred_fallthru
        _
    $region52: #{biconvgru_cell.2} parent=5 // pred_fallthru
      _
  $region6: #{biconvgru_cell.2} parent=0 // loop_footer
    %s16 = sadd.s32 1, %s12
  $region7: #{biconvgru_cell.2} parent=0 // loop_footer_branch
    %11 = sbr.rel target = $region3
  $region8: #{biconvgru_cell.2} parent=0 // loop_exit
    _

// kernel: biconvgru_cell.3
$region0: #{biconvgru_cell.3}
  #allocation0 [shape = 'u32[]', space=smem, size = 0x4, offset = 0x4, fixed_abs, tag = 'smem constant byte address 0x4 - core index']
  #allocation1 [shape = 'u32[72,128]{1,0:T(1,128)}', space=vmem, size = 0x9000, scoped, tag = 'internal scratch']
  %s0 = inlined_call_operand.vmem [shape: bf16[512,128], index: 0, kind: input, shape index: {}]
  %s1 = inlined_call_operand.vmem [shape: bf16[128,128], index: 1, kind: input, shape index: {}]
  %s2 = inlined_call_operand.vmem [shape: bf16[512,384], index: 2, kind: input, shape index: {}]
  %s3 = inlined_call_operand.vmem [shape: bf16[384,128], index: 3, kind: input, shape index: {}]
  %s4 = inlined_call_operand.vmem [shape: f32[1,128], index: 4, kind: input, shape index: {}]
  %s5 = inlined_call_operand.vmem [shape: f32[512,128], index: 5, kind: input, shape index: {}]
  %s6 = inlined_call_operand.vmem [shape: f32[512,128], index: 6, kind: input, shape index: {}]
  %s7 = inlined_call_operand.hbm [shape: f32[512,128], index: 7, kind: output, shape index: {}]
  %s8 = sld [smem:[#allocation0]]
  $region61: #{biconvgru_cell.3} parent=0
    _
  %s10 = ssub.s32 1, %s8
  %s11 = scalar_select 0, %s10, %s8
  $region1: #{biconvgru_cell.3} parent=0
    #allocation2 [shape = 'u8[262144]{0}', space=vmem, size = 0x40000, scoped, tag = 'output window, operand 0']
    #allocation3 [shape = 's32[2]{0}', space=sflag, size = 0x8, scoped, tag = 'scoped memory for biconvgru_cell.3']
    %12 = vsyncpa [#allocation3], 0
    %s13 = scalar_lea.sflag [#allocation3], 1
    %14 = vsyncpa %s13, 0
    loop: start=0, step=1, limit=4
    $region2: #{biconvgru_cell.3} parent=1 // loop_pre_header
      _
    $region3: #{biconvgru_cell.3} parent=1 // loop_header
      %s16 = sphi 0, %s20
      %p17 = scmp.ge.s32.totalorder %s16, 4
      %s23 = sphi 0, %s35
      %s24 = sphi 0, %s31
      %s25 = sphi 0, %s23
      %s26 = sphi 0, %s24
      %s27 = sphi 0, %s25
      %s28 = sphi 0, %s26
      %s38 = sphi 0, %s40
      %s41 = sphi 0, %s38
      %s42 = sphi 0, %s41
      %s58 = sphi 0, %s42
      %s64 = sphi 0, %s66
      %s67 = sphi 0, %s64
      %s68 = sphi 0, %s67
      %s84 = sphi 0, %s68
      %s90 = sphi 0, %s92
      %s93 = sphi 0, %s90
      %s94 = sphi 0, %s93
      %s110 = sphi 0, %s94
      %s116 = sphi 0, %s118
      %s119 = sphi 0, %s116
      %s120 = sphi 0, %s119
      %s136 = sphi 0, %s120
      %s142 = sphi 0, %s144
      %s145 = sphi 0, %s142
      %s146 = sphi 0, %s145
      %s162 = sphi 0, %s146
      %s170 = sphi 0, %s172
      %s173 = sphi 0, %s170
      %s174 = sphi 0, %s173
      %s190 = sphi 0, %s174
      %s198 = sphi 0, %s200
      %s201 = sphi 0, %s198
      %s202 = sphi 0, %s201
      %s218 = sphi 0, %s202
      %s226 = sphi 0, %s228
      %s229 = sphi 0, %s226
      %s230 = sphi 0, %s229
      %s246 = sphi 0, %s230
    $region4: #{biconvgru_cell.3} parent=1 // loop_header_branch
      %19 = sbr.rel (%p17) target = $region8
    $region5: #{biconvgru_cell.3} parent=1 // loop_body
      %s21 = ssub.s32 %s16, 1
      %s22 = ssub.s32 %s16, 2
      %s29 = sadd.s32 1, %s24
      %p30 = scmp.ge.s32.totalorder %s29, 1
      %s31 = scalar_select %p30, 0, %s29
      %s32 = sadd.s32 1, %s23
      %s33 = scalar_select %p30, %s32, %s23
      %p34 = scmp.ge.s32.totalorder %s33, 2
      %s35 = scalar_select %p34, 0, %s33
      %s36 = ssub.s32 %s23, %s35
      %p37 = scmp.eq.s32.totalorder %s36, 0
      %s39 = sadd.s32 %s38, 1
      %s40 = scalar_select %p37, %s38, %s39
      %p43 = pneg %p37
      %p44 = scmp.eq.s32.totalorder %s16, 1
      %p45 = por %p43, %p44
      %p46 = scmp.ne.s32.totalorder %s38, %s41
      %p47 = scmp.eq.s32.totalorder %s16, 0
      %p48 = por %p46, %p47
      %p49 = scmp.ne.s32.totalorder %s38, %s41
      %p50 = scmp.eq.s32.totalorder %s21, 1
      %p51 = por %p49, %p50
      %p52 = scmp.ne.s32.totalorder %s41, %s42
      %p53 = scmp.eq.s32.totalorder %s21, 0
      %p54 = por %p52, %p53
      %p55 = scmp.ne.s32.totalorder %s41, %s42
      %p56 = scmp.eq.s32.totalorder %s22, 1
      %p57 = por %p55, %p56
      %p59 = scmp.ne.s32.totalorder %s42, %s58
      %p60 = scmp.eq.s32.totalorder %s22, 0
      %p61 = por %p59, %p60
      %s62 = ssub.s32 %s24, %s31
      %p63 = scmp.eq.s32.totalorder %s62, 0
      %s65 = sadd.s32 %s64, 1
      %s66 = scalar_select %p63, %s64, %s65
      %p69 = pneg %p63
      %p70 = scmp.eq.s32.totalorder %s16, 1
      %p71 = por %p69, %p70
      %p72 = scmp.ne.s32.totalorder %s64, %s67
      %p73 = scmp.eq.s32.totalorder %s16, 0
      %p74 = por %p72, %p73
      %p75 = scmp.ne.s32.totalorder %s64, %s67
      %p76 = scmp.eq.s32.totalorder %s21, 1
      %p77 = por %p75, %p76
      %p78 = scmp.ne.s32.totalorder %s67, %s68
      %p79 = scmp.eq.s32.totalorder %s21, 0
      %p80 = por %p78, %p79
      %p81 = scmp.ne.s32.totalorder %s67, %s68
      %p82 = scmp.eq.s32.totalorder %s22, 1
      %p83 = por %p81, %p82
      %p85 = scmp.ne.s32.totalorder %s68, %s84
      %p86 = scmp.eq.s32.totalorder %s22, 0
      %p87 = por %p85, %p86
      %s88 = ssub.s32 %s23, %s35
      %p89 = scmp.eq.s32.totalorder %s88, 0
      %s91 = sadd.s32 %s90, 1
      %s92 = scalar_select %p89, %s90, %s91
      %p95 = pneg %p89
      %p96 = scmp.eq.s32.totalorder %s16, 1
      %p97 = por %p95, %p96
      %p98 = scmp.ne.s32.totalorder %s90, %s93
      %p99 = scmp.eq.s32.totalorder %s16, 0
      %p100 = por %p98, %p99
      %p101 = scmp.ne.s32.totalorder %s90, %s93
      %p102 = scmp.eq.s32.totalorder %s21, 1
      %p103 = por %p101, %p102
      %p104 = scmp.ne.s32.totalorder %s93, %s94
      %p105 = scmp.eq.s32.totalorder %s21, 0
      %p106 = por %p104, %p105
      %p107 = scmp.ne.s32.totalorder %s93, %s94
      %p108 = scmp.eq.s32.totalorder %s22, 1
      %p109 = por %p107, %p108
      %p111 = scmp.ne.s32.totalorder %s94, %s110
      %p112 = scmp.eq.s32.totalorder %s22, 0
      %p113 = por %p111, %p112
      %s114 = ssub.s32 %s24, %s31
      %p115 = scmp.eq.s32.totalorder %s114, 0
      %s117 = sadd.s32 %s116, 1
      %s118 = scalar_select %p115, %s116, %s117
      %p121 = pneg %p115
      %p122 = scmp.eq.s32.totalorder %s16, 1
      %p123 = por %p121, %p122
      %p124 = scmp.ne.s32.totalorder %s116, %s119
      %p125 = scmp.eq.s32.totalorder %s16, 0
      %p126 = por %p124, %p125
      %p127 = scmp.ne.s32.totalorder %s116, %s119
      %p128 = scmp.eq.s32.totalorder %s21, 1
      %p129 = por %p127, %p128
      %p130 = scmp.ne.s32.totalorder %s119, %s120
      %p131 = scmp.eq.s32.totalorder %s21, 0
      %p132 = por %p130, %p131
      %p133 = scmp.ne.s32.totalorder %s119, %s120
      %p134 = scmp.eq.s32.totalorder %s22, 1
      %p135 = por %p133, %p134
      %p137 = scmp.ne.s32.totalorder %s120, %s136
      %p138 = scmp.eq.s32.totalorder %s22, 0
      %p139 = por %p137, %p138
      %s140 = ssub.s32 %s24, %s31
      %p141 = scmp.eq.s32.totalorder %s140, 0
      %s143 = sadd.s32 %s142, 1
      %s144 = scalar_select %p141, %s142, %s143
      %p147 = pneg %p141
      %p148 = scmp.eq.s32.totalorder %s16, 1
      %p149 = por %p147, %p148
      %p150 = scmp.ne.s32.totalorder %s142, %s145
      %p151 = scmp.eq.s32.totalorder %s16, 0
      %p152 = por %p150, %p151
      %p153 = scmp.ne.s32.totalorder %s142, %s145
      %p154 = scmp.eq.s32.totalorder %s21, 1
      %p155 = por %p153, %p154
      %p156 = scmp.ne.s32.totalorder %s145, %s146
      %p157 = scmp.eq.s32.totalorder %s21, 0
      %p158 = por %p156, %p157
      %p159 = scmp.ne.s32.totalorder %s145, %s146
      %p160 = scmp.eq.s32.totalorder %s22, 1
      %p161 = por %p159, %p160
      %p163 = scmp.ne.s32.totalorder %s146, %s162
      %p164 = scmp.eq.s32.totalorder %s22, 0
      %p165 = por %p163, %p164
      %s166 = ssub.s32 %s23, %s35
      %s167 = ssub.s32 %s24, %s31
      %s168 = sor.u32 %s166, %s167
      %p169 = scmp.eq.s32.totalorder %s168, 0
      %s171 = sadd.s32 %s170, 1
      %s172 = scalar_select %p169, %s170, %s171
      %p175 = pneg %p169
      %p176 = scmp.eq.s32.totalorder %s16, 1
      %p177 = por %p175, %p176
      %p178 = scmp.ne.s32.totalorder %s170, %s173
      %p179 = scmp.eq.s32.totalorder %s16, 0
      %p180 = por %p178, %p179
      %p181 = scmp.ne.s32.totalorder %s170, %s173
      %p182 = scmp.eq.s32.totalorder %s21, 1
      %p183 = por %p181, %p182
      %p184 = scmp.ne.s32.totalorder %s173, %s174
      %p185 = scmp.eq.s32.totalorder %s21, 0
      %p186 = por %p184, %p185
      %p187 = scmp.ne.s32.totalorder %s173, %s174
      %p188 = scmp.eq.s32.totalorder %s22, 1
      %p189 = por %p187, %p188
      %p191 = scmp.ne.s32.totalorder %s174, %s190
      %p192 = scmp.eq.s32.totalorder %s22, 0
      %p193 = por %p191, %p192
      %s194 = ssub.s32 %s23, %s35
      %s195 = ssub.s32 %s24, %s31
      %s196 = sor.u32 %s194, %s195
      %p197 = scmp.eq.s32.totalorder %s196, 0
      %s199 = sadd.s32 %s198, 1
      %s200 = scalar_select %p197, %s198, %s199
      %p203 = pneg %p197
      %p204 = scmp.eq.s32.totalorder %s16, 1
      %p205 = por %p203, %p204
      %p206 = scmp.ne.s32.totalorder %s198, %s201
      %p207 = scmp.eq.s32.totalorder %s16, 0
      %p208 = por %p206, %p207
      %p209 = scmp.ne.s32.totalorder %s198, %s201
      %p210 = scmp.eq.s32.totalorder %s21, 1
      %p211 = por %p209, %p210
      %p212 = scmp.ne.s32.totalorder %s201, %s202
      %p213 = scmp.eq.s32.totalorder %s21, 0
      %p214 = por %p212, %p213
      %p215 = scmp.ne.s32.totalorder %s201, %s202
      %p216 = scmp.eq.s32.totalorder %s22, 1
      %p217 = por %p215, %p216
      %p219 = scmp.ne.s32.totalorder %s202, %s218
      %p220 = scmp.eq.s32.totalorder %s22, 0
      %p221 = por %p219, %p220
      %s222 = ssub.s32 %s23, %s35
      %s223 = ssub.s32 %s24, %s31
      %s224 = sor.u32 %s222, %s223
      %p225 = scmp.eq.s32.totalorder %s224, 0
      %s227 = sadd.s32 %s226, 1
      %s228 = scalar_select %p225, %s226, %s227
      %p231 = pneg %p225
      %p232 = scmp.eq.s32.totalorder %s16, 1
      %p233 = por %p231, %p232
      %p234 = scmp.ne.s32.totalorder %s226, %s229
      %p235 = scmp.eq.s32.totalorder %s16, 0
      %p236 = por %p234, %p235
      %p237 = scmp.ne.s32.totalorder %s226, %s229
      %p238 = scmp.eq.s32.totalorder %s21, 1
      %p239 = por %p237, %p238
      %p240 = scmp.ne.s32.totalorder %s229, %s230
      %p241 = scmp.eq.s32.totalorder %s21, 0
      %p242 = por %p240, %p241
      %p243 = scmp.ne.s32.totalorder %s229, %s230
      %p244 = scmp.eq.s32.totalorder %s22, 1
      %p245 = por %p243, %p244
      %p247 = scmp.ne.s32.totalorder %s230, %s246
      %p248 = scmp.eq.s32.totalorder %s22, 0
      %p249 = por %p247, %p248
      %p250 = scmp.le.s32.totalorder 1, %s16
      %p251 = scmp.lt.s32.totalorder %s16, 3
      %p252 = pnand %p250, %p251
      %p253 = pneg %p252
      // Predicated region
      $region9: #{biconvgru_cell.3} parent=5 // pred_check
        _
      $region10: #{biconvgru_cell.3} parent=5 // pred_check_branch
        %255 = sbr.rel (%p252) target = $region12
      $region11: #{biconvgru_cell.3} parent=5 // pred_region
        %s256 = ssub.s32 %s16, 1
        // Predicated region
        $region13: #{biconvgru_cell.3} parent=11 // pred_check
          %p257 = pneg %p80
        $region14: #{biconvgru_cell.3} parent=11 // pred_check_branch
          %259 = sbr.rel (%p257) target = $region16
        $region15: #{biconvgru_cell.3} parent=11 // pred_region
          %p260 = scmp.lt.s32.totalorder %s26, 0
          %s261 = scalar_select %p260, %s26, 0
          %s262 = smul.addr %s261, 4
          %s263 = scalar_lea.vmem %s1, %s262
        $region16: #{biconvgru_cell.3} parent=11 // pred_fallthru
          _
        // Predicated region
        $region17: #{biconvgru_cell.3} parent=11 // pred_check
          %p264 = pneg %p132
        $region18: #{biconvgru_cell.3} parent=11 // pred_check_branch
          %266 = sbr.rel (%p264) target = $region20
        $region19: #{biconvgru_cell.3} parent=11 // pred_region
          %p267 = scmp.lt.s32.totalorder %s26, 0
          %s268 = scalar_select %p267, %s26, 0
          %s269 = smul.addr %s268, 4
          %s270 = scalar_lea.vmem %s3, %s269
        $region20: #{biconvgru_cell.3} parent=11 // pred_fallthru
          _
        // Predicated region
        $region21: #{biconvgru_cell.3} parent=11 // pred_check
          %p271 = pneg %p158
        $region22: #{biconvgru_cell.3} parent=11 // pred_check_branch
          %273 = sbr.rel (%p271) target = $region24
        $region23: #{biconvgru_cell.3} parent=11 // pred_region
          %p274 = scmp.lt.s32.totalorder %s26, 0
          %s275 = scalar_select %p274, %s26, 0
          %s276 = scalar_lea.vmem %s4, %s275
        $region24: #{biconvgru_cell.3} parent=11 // pred_fallthru
          _
      $region12: #{biconvgru_cell.3} parent=5 // pred_fallthru
        _
      %p277 = scmp.lt.s32.totalorder %s16, 2
      // Predicated region
      $region25: #{biconvgru_cell.3} parent=5 // pred_check
        %p278 = pneg %p277
      $region26: #{biconvgru_cell.3} parent=5 // pred_check_branch
        %280 = sbr.rel (%p278) target = $region28
      $region27: #{biconvgru_cell.3} parent=5 // pred_region
        // Predicated region
        $region29: #{biconvgru_cell.3} parent=27 // pred_check
          %p281 = pneg %p48
        $region30: #{biconvgru_cell.3} parent=27 // pred_check_branch
          %283 = sbr.rel (%p281) target = $region32
        $region31: #{biconvgru_cell.3} parent=27 // pred_region
          %s284 = smul.u32 32, %s23
          %p285 = scmp.lt.s32.totalorder %s284, 63
          %s286 = scalar_select %p285, %s284, 63
          %s287 = smul.addr %s286, 4
          %s288 = scalar_lea.vmem %s0, %s287
          %s289 = smul.u32 32, %s23
        $region32: #{biconvgru_cell.3} parent=27 // pred_fallthru
          _
        // Predicated region
        $region33: #{biconvgru_cell.3} parent=27 // pred_check
          %p290 = pneg %p100
        $region34: #{biconvgru_cell.3} parent=27 // pred_check_branch
          %292 = sbr.rel (%p290) target = $region36
        $region35: #{biconvgru_cell.3} parent=27 // pred_region
          %s293 = smul.u32 32, %s23
          %p294 = scmp.lt.s32.totalorder %s293, 63
          %s295 = scalar_select %p294, %s293, 63
          %s296 = smul.addr %s295, 3
          %s297 = smul.addr %s296, 4
          %s298 = scalar_lea.vmem %s2, %s297
          %s299 = smul.u32 32, %s23
        $region36: #{biconvgru_cell.3} parent=27 // pred_fallthru
          _
        // Predicated region
        $region37: #{biconvgru_cell.3} parent=27 // pred_check
          %p300 = pneg %p180
        $region38: #{biconvgru_cell.3} parent=27 // pred_check_branch
          %302 = sbr.rel (%p300) target = $region40
        $region39: #{biconvgru_cell.3} parent=27 // pred_region
          %s303 = smul.u32 32, %s23
          %p304 = scmp.lt.s32.totalorder %s303, 63
          %s305 = scalar_select %p304, %s303, 63
          %p306 = scmp.lt.s32.totalorder %s24, 0
          %s307 = scalar_select %p306, %s24, 0
          %s308 = sadd.s32 %s307, %s305
          %s309 = smul.addr %s308, 8
          %s310 = scalar_lea.vmem %s5, %s309
          %s311 = smul.u32 32, %s23
        $region40: #{biconvgru_cell.3} parent=27 // pred_fallthru
          _
        // Predicated region
        $region41: #{biconvgru_cell.3} parent=27 // pred_check
          %p312 = pneg %p208
        $region42: #{biconvgru_cell.3} parent=27 // pred_check_branch
          %314 = sbr.rel (%p312) target = $region44
        $region43: #{biconvgru_cell.3} parent=27 // pred_region
          %s315 = smul.u32 32, %s23
          %p316 = scmp.lt.s32.totalorder %s315, 63
          %s317 = scalar_select %p316, %s315, 63
          %p318 = scmp.lt.s32.totalorder %s24, 0
          %s319 = scalar_select %p318, %s24, 0
          %s320 = sadd.s32 %s319, %s317
          %s321 = smul.addr %s320, 8
          %s322 = scalar_lea.vmem %s6, %s321
          %s323 = smul.u32 32, %s23
        $region44: #{biconvgru_cell.3} parent=27 // pred_fallthru
          _
      $region28: #{biconvgru_cell.3} parent=5 // pred_fallthru
        _
      %p324 = scmp.le.s32.totalorder 1, %s16
      %p325 = scmp.lt.s32.totalorder %s16, 3
      %p326 = pnand %p324, %p325
      %p327 = pneg %p326
      // Predicated region
      $region45: #{biconvgru_cell.3} parent=5 // pred_check
        _
      $region46: #{biconvgru_cell.3} parent=5 // pred_check_branch
        %329 = sbr.rel (%p326) target = $region48
      $region47: #{biconvgru_cell.3} parent=5 // pred_region
        %s330 = ssub.s32 %s16, 1
        %s331 = smul.u32 32, %s25
        %p332 = scmp.lt.s32.totalorder %s331, 63
        %s333 = scalar_select %p332, %s331, 63
        %s334 = smul.addr %s333, 4
        %s335 = scalar_lea.vmem %s0, %s334
        %p336 = pneg %p54
        %p337 = pneg %p51
        %p338 = scmp.lt.s32.totalorder %s26, 0
        %s339 = scalar_select %p338, %s26, 0
        %s340 = smul.addr %s339, 4
        %s341 = scalar_lea.vmem %s1, %s340
        %p342 = pneg %p80
        %p343 = pneg %p77
        %s344 = smul.u32 32, %s25
        %p345 = scmp.lt.s32.totalorder %s344, 63
        %s346 = scalar_select %p345, %s344, 63
        %s347 = smul.addr %s346, 3
        %s348 = smul.addr %s347, 4
        %s349 = scalar_lea.vmem %s2, %s348
        %p350 = pneg %p106
        %p351 = pneg %p103
        %p352 = scmp.lt.s32.totalorder %s26, 0
        %s353 = scalar_select %p352, %s26, 0
        %s354 = smul.addr %s353, 4
        %s355 = scalar_lea.vmem %s3, %s354
        %p356 = pneg %p132
        %p357 = pneg %p129
        %p358 = scmp.lt.s32.totalorder %s26, 0
        %s359 = scalar_select %p358, %s26, 0
        %s360 = scalar_lea.vmem %s4, %s359
        %p361 = pneg %p158
        %p362 = pneg %p155
        %s363 = smul.u32 32, %s25
        %p364 = scmp.lt.s32.totalorder %s363, 63
        %s365 = scalar_select %p364, %s363, 63
        %p366 = scmp.lt.s32.totalorder %s26, 0
        %s367 = scalar_select %p366, %s26, 0
        %s368 = sadd.s32 %s367, %s365
        %s369 = smul.addr %s368, 8
        %s370 = scalar_lea.vmem %s5, %s369
        %p371 = pneg %p186
        %p372 = pneg %p183
        %s373 = smul.u32 32, %s25
        %p374 = scmp.lt.s32.totalorder %s373, 63
        %s375 = scalar_select %p374, %s373, 63
        %p376 = scmp.lt.s32.totalorder %s26, 0
        %s377 = scalar_select %p376, %s26, 0
        %s378 = sadd.s32 %s377, %s375
        %s379 = smul.addr %s378, 8
        %s380 = scalar_lea.vmem %s6, %s379
        %p381 = pneg %p214
        %p382 = pneg %p211
        %p383 = pneg %p242
        %p384 = pneg %p239
        %s385 = sand.u32 %s229, 1
        %s386 = scalar_lea.sflag [#allocation3], %s385
        %s387 = sand.u32 %s229, 1
        %s388 = smul.addr %s387, 256
        %s389 = scalar_lea.vmem [#allocation2], %s388
        %s390 = smul.u32 32, %s25
        %p391 = scmp.lt.s32.totalorder %s390, 63
        %s392 = scalar_select %p391, %s390, 63
        %s393 = smul.addr %s392, 4
        %s394 = scalar_lea.vmem %s0, %s393
        %s395 = smul.u32 32, %s25
        %p396 = scmp.lt.s32.totalorder %s26, 0
        %s397 = scalar_select %p396, %s26, 0
        %s398 = smul.addr %s397, 4
        %s399 = scalar_lea.vmem %s1, %s398
        %s400 = smul.u32 32, %s25
        %p401 = scmp.lt.s32.totalorder %s400, 63
        %s402 = scalar_select %p401, %s400, 63
        %s403 = smul.addr %s402, 3
        %s404 = smul.addr %s403, 4
        %s405 = scalar_lea.vmem %s2, %s404
        %s406 = smul.u32 32, %s25
        %p407 = scmp.lt.s32.totalorder %s26, 0
        %s408 = scalar_select %p407, %s26, 0
        %s409 = smul.addr %s408, 4
        %s410 = scalar_lea.vmem %s3, %s409
        %p411 = scmp.lt.s32.totalorder %s26, 0
        %s412 = scalar_select %p411, %s26, 0
        %s413 = scalar_lea.vmem %s4, %s412
        %s414 = smul.u32 32, %s25
        %p415 = scmp.lt.s32.totalorder %s414, 63
        %s416 = scalar_select %p415, %s414, 63
        %p417 = scmp.lt.s32.totalorder %s26, 0
        %s418 = scalar_select %p417, %s26, 0
        %s419 = sadd.s32 %s418, %s416
        %s420 = smul.addr %s419, 8
        %s421 = scalar_lea.vmem %s5, %s420
        %s422 = smul.u32 32, %s25
        %s423 = smul.u32 32, %s25
        %p424 = scmp.lt.s32.totalorder %s423, 63
        %s425 = scalar_select %p424, %s423, 63
        %p426 = scmp.lt.s32.totalorder %s26, 0
        %s427 = scalar_select %p426, %s26, 0
        %s428 = sadd.s32 %s427, %s425
        %s429 = smul.addr %s428, 8
        %s430 = scalar_lea.vmem %s6, %s429
        %s431 = smul.u32 32, %s25
        %s432 = smul.u32 32, %s25
        %v433 = vld [vmem:[%s394] sm:$0xf]
        %v434 = vld [vmem:[%s394 + $0x4] sm:$0xf]
        %v435 = vld [vmem:[%s394 + $0x8] sm:$0xf]
        %v436 = vld [vmem:[%s394 + $0xc] sm:$0xf]
        %v437 = vld [vmem:[%s394 + $0x10] sm:$0xf]
        %v438 = vld [vmem:[%s394 + $0x14] sm:$0xf]
        %v439 = vld [vmem:[%s394 + $0x18] sm:$0xf]
        %v440 = vld [vmem:[%s394 + $0x1c] sm:$0xf]
        %v441 = vld [vmem:[%s394 + $0x20] sm:$0xf]
        %v442 = vld [vmem:[%s394 + $0x24] sm:$0xf]
        %v443 = vld [vmem:[%s394 + $0x28] sm:$0xf]
        %v444 = vld [vmem:[%s394 + $0x2c] sm:$0xf]
        %v445 = vld [vmem:[%s394 + $0x30] sm:$0xf]
        %v446 = vld [vmem:[%s394 + $0x34] sm:$0xf]
        %v447 = vld [vmem:[%s394 + $0x38] sm:$0xf]
        %v448 = vld [vmem:[%s394 + $0x3c] sm:$0xf]
        %v449 = vld [vmem:[%s394 + $0x40] sm:$0xf]
        %v450 = vld [vmem:[%s394 + $0x44] sm:$0xf]
        %v451 = vld [vmem:[%s394 + $0x48] sm:$0xf]
        %v452 = vld [vmem:[%s394 + $0x4c] sm:$0xf]
        %v453 = vld [vmem:[%s394 + $0x50] sm:$0xf]
        %v454 = vld [vmem:[%s394 + $0x54] sm:$0xf]
        %v455 = vld [vmem:[%s394 + $0x58] sm:$0xf]
        %v456 = vld [vmem:[%s394 + $0x5c] sm:$0xf]
        %v457 = vld [vmem:[%s394 + $0x60] sm:$0xf]
        %v458 = vld [vmem:[%s394 + $0x64] sm:$0xf]
        %v459 = vld [vmem:[%s394 + $0x68] sm:$0xf]
        %v460 = vld [vmem:[%s394 + $0x6c] sm:$0xf]
        %v461 = vld [vmem:[%s394 + $0x70] sm:$0xf]
        %v462 = vld [vmem:[%s394 + $0x74] sm:$0xf]
        %v463 = vld [vmem:[%s394 + $0x78] sm:$0xf]
        %v464 = vld [vmem:[%s394 + $0x7c] sm:$0xf]
        %v465 = vld [vmem:[%s399] sm:$0xf]
        %v466 = vld [vmem:[%s399 + $0x4] sm:$0xf]
        %v467 = vld [vmem:[%s399 + $0x8] sm:$0xf]
        %v468 = vld [vmem:[%s399 + $0xc] sm:$0xf]
        %v469 = vld [vmem:[%s399 + $0x10] sm:$0xf]
        %v470 = vld [vmem:[%s399 + $0x14] sm:$0xf]
        %v471 = vld [vmem:[%s399 + $0x18] sm:$0xf]
        %v472 = vld [vmem:[%s399 + $0x1c] sm:$0xf]
        %v473 = vld [vmem:[%s399 + $0x20] sm:$0xf]
        %v474 = vld [vmem:[%s399 + $0x24] sm:$0xf]
        %v475 = vld [vmem:[%s399 + $0x28] sm:$0xf]
        %v476 = vld [vmem:[%s399 + $0x2c] sm:$0xf]
        %v477 = vld [vmem:[%s399 + $0x30] sm:$0xf]
        %v478 = vld [vmem:[%s399 + $0x34] sm:$0xf]
        %v479 = vld [vmem:[%s399 + $0x38] sm:$0xf]
        %v480 = vld [vmem:[%s399 + $0x3c] sm:$0xf]
        %v481 = vld [vmem:[%s405] sm:$0xff]
        %v482 = vld [vmem:[%s405 + $0x8] sm:$0xf]
        %v483 = vld [vmem:[%s405 + $0xc] sm:$0xff]
        %v484 = vld [vmem:[%s405 + $0x14] sm:$0xf]
        %v485 = vld [vmem:[%s405 + $0x18] sm:$0xff]
        %v486 = vld [vmem:[%s405 + $0x20] sm:$0xf]
        %v487 = vld [vmem:[%s405 + $0x24] sm:$0xff]
        %v488 = vld [vmem:[%s405 + $0x2c] sm:$0xf]
        %v489 = vld [vmem:[%s405 + $0x30] sm:$0xff]
        %v490 = vld [vmem:[%s405 + $0x38] sm:$0xf]
        %v491 = vld [vmem:[%s405 + $0x3c] sm:$0xff]
        %v492 = vld [vmem:[%s405 + $0x44] sm:$0xf]
        %v493 = vld [vmem:[%s405 + $0x48] sm:$0xff]
        %v494 = vld [vmem:[%s405 + $0x50] sm:$0xf]
        %v495 = vld [vmem:[%s405 + $0x54] sm:$0xff]
        %v496 = vld [vmem:[%s405 + $0x5c] sm:$0xf]
        %v497 = vld [vmem:[%s405 + $0x60] sm:$0xff]
        %v498 = vld [vmem:[%s405 + $0x68] sm:$0xf]
        %v499 = vld [vmem:[%s405 + $0x6c] sm:$0xff]
        %v500 = vld [vmem:[%s405 + $0x74] sm:$0xf]
        %v501 = vld [vmem:[%s405 + $0x78] sm:$0xff]
        %v502 = vld [vmem:[%s405 + $0x80] sm:$0xf]
        %v503 = vld [vmem:[%s405 + $0x84] sm:$0xff]
        %v504 = vld [vmem:[%s405 + $0x8c] sm:$0xf]
        %v505 = vld [vmem:[%s405 + $0x90] sm:$0xff]
        %v506 = vld [vmem:[%s405 + $0x98] sm:$0xf]
        %v507 = vld [vmem:[%s405 + $0x9c] sm:$0xff]
        %v508 = vld [vmem:[%s405 + $0xa4] sm:$0xf]
        %v509 = vld [vmem:[%s405 + $0xa8] sm:$0xff]
        %v510 = vld [vmem:[%s405 + $0xb0] sm:$0xf]
        %v511 = vld [vmem:[%s405 + $0xb4] sm:$0xff]
        %v512 = vld [vmem:[%s405 + $0xbc] sm:$0xf]
        %v513 = vld [vmem:[%s405 + $0xc0] sm:$0xff]
        %v514 = vld [vmem:[%s405 + $0xc8] sm:$0xf]
        %v515 = vld [vmem:[%s405 + $0xcc] sm:$0xff]
        %v516 = vld [vmem:[%s405 + $0xd4] sm:$0xf]
        %v517 = vld [vmem:[%s405 + $0xd8] sm:$0xff]
        %v518 = vld [vmem:[%s405 + $0xe0] sm:$0xf]
        %v519 = vld [vmem:[%s405 + $0xe4] sm:$0xff]
        %v520 = vld [vmem:[%s405 + $0xec] sm:$0xf]
        %v521 = vld [vmem:[%s405 + $0xf0] sm:$0xff]
        %v522 = vld [vmem:[%s405 + $0xf8] sm:$0xf]
        %v523 = vld [vmem:[%s405 + $0xfc] sm:$0xff]
        %v524 = vld [vmem:[%s405 + $0x104] sm:$0xf]
        %v525 = vld [vmem:[%s405 + $0x108] sm:$0xff]
        %v526 = vld [vmem:[%s405 + $0x110] sm:$0xf]
        %v527 = vld [vmem:[%s405 + $0x114] sm:$0xff]
        %v528 = vld [vmem:[%s405 + $0x11c] sm:$0xf]
        %v529 = vld [vmem:[%s405 + $0x120] sm:$0xff]
        %v530 = vld [vmem:[%s405 + $0x128] sm:$0xf]
        %v531 = vld [vmem:[%s405 + $0x12c] sm:$0xff]
        %v532 = vld [vmem:[%s405 + $0x134] sm:$0xf]
        %v533 = vld [vmem:[%s405 + $0x138] sm:$0xff]
        %v534 = vld [vmem:[%s405 + $0x140] sm:$0xf]
        %v535 = vld [vmem:[%s405 + $0x144] sm:$0xff]
        %v536 = vld [vmem:[%s405 + $0x14c] sm:$0xf]
        %v537 = vld [vmem:[%s405 + $0x150] sm:$0xff]
        %v538 = vld [vmem:[%s405 + $0x158] sm:$0xf]
        %v539 = vld [vmem:[%s405 + $0x15c] sm:$0xff]
        %v540 = vld [vmem:[%s405 + $0x164] sm:$0xf]
        %v541 = vld [vmem:[%s405 + $0x168] sm:$0xff]
        %v542 = vld [vmem:[%s405 + $0x170] sm:$0xf]
        %v543 = vld [vmem:[%s405 + $0x174] sm:$0xff]
        %v544 = vld [vmem:[%s405 + $0x17c] sm:$0xf]
        %v545 = vld [vmem:[%s410] sm:$0xf]
        %v546 = vld [vmem:[%s410 + $0x4] sm:$0xf]
        %v547 = vld [vmem:[%s410 + $0x8] sm:$0xf]
        %v548 = vld [vmem:[%s410 + $0xc] sm:$0xf]
        %v549 = vld [vmem:[%s410 + $0x10] sm:$0xf]
        %v550 = vld [vmem:[%s410 + $0x14] sm:$0xf]
        %v551 = vld [vmem:[%s410 + $0x18] sm:$0xf]
        %v552 = vld [vmem:[%s410 + $0x1c] sm:$0xf]
        %v553 = vld [vmem:[%s410 + $0x20] sm:$0xf]
        %v554 = vld [vmem:[%s410 + $0x24] sm:$0xf]
        %v555 = vld [vmem:[%s410 + $0x28] sm:$0xf]
        %v556 = vld [vmem:[%s410 + $0x2c] sm:$0xf]
        %v557 = vld [vmem:[%s410 + $0x30] sm:$0xf]
        %v558 = vld [vmem:[%s410 + $0x34] sm:$0xf]
        %v559 = vld [vmem:[%s410 + $0x38] sm:$0xf]
        %v560 = vld [vmem:[%s410 + $0x3c] sm:$0xf]
        %v561 = vld [vmem:[%s410 + $0x40] sm:$0xf]
        %v562 = vld [vmem:[%s410 + $0x44] sm:$0xf]
        %v563 = vld [vmem:[%s410 + $0x48] sm:$0xf]
        %v564 = vld [vmem:[%s410 + $0x4c] sm:$0xf]
        %v565 = vld [vmem:[%s410 + $0x50] sm:$0xf]
        %v566 = vld [vmem:[%s410 + $0x54] sm:$0xf]
        %v567 = vld [vmem:[%s410 + $0x58] sm:$0xf]
        %v568 = vld [vmem:[%s410 + $0x5c] sm:$0xf]
        %v569 = vld [vmem:[%s410 + $0x60] sm:$0xf]
        %v570 = vld [vmem:[%s410 + $0x64] sm:$0xf]
        %v571 = vld [vmem:[%s410 + $0x68] sm:$0xf]
        %v572 = vld [vmem:[%s410 + $0x6c] sm:$0xf]
        %v573 = vld [vmem:[%s410 + $0x70] sm:$0xf]
        %v574 = vld [vmem:[%s410 + $0x74] sm:$0xf]
        %v575 = vld [vmem:[%s410 + $0x78] sm:$0xf]
        %v576 = vld [vmem:[%s410 + $0x7c] sm:$0xf]
        %v577 = vld [vmem:[%s410 + $0x80] sm:$0xf]
        %v578 = vld [vmem:[%s410 + $0x84] sm:$0xf]
        %v579 = vld [vmem:[%s410 + $0x88] sm:$0xf]
        %v580 = vld [vmem:[%s410 + $0x8c] sm:$0xf]
        %v581 = vld [vmem:[%s410 + $0x90] sm:$0xf]
        %v582 = vld [vmem:[%s410 + $0x94] sm:$0xf]
        %v583 = vld [vmem:[%s410 + $0x98] sm:$0xf]
        %v584 = vld [vmem:[%s410 + $0x9c] sm:$0xf]
        %v585 = vld [vmem:[%s410 + $0xa0] sm:$0xf]
        %v586 = vld [vmem:[%s410 + $0xa4] sm:$0xf]
        %v587 = vld [vmem:[%s410 + $0xa8] sm:$0xf]
        %v588 = vld [vmem:[%s410 + $0xac] sm:$0xf]
        %v589 = vld [vmem:[%s410 + $0xb0] sm:$0xf]
        %v590 = vld [vmem:[%s410 + $0xb4] sm:$0xf]
        %v591 = vld [vmem:[%s410 + $0xb8] sm:$0xf]
        %v592 = vld [vmem:[%s410 + $0xbc] sm:$0xf]
        %v657 = vunpack.c.l.b16 %v481
        %v658 = vunpack.c.h.b16 %v481
        %v659 = vunpack.c.l.b16 %v482
        %v660 = vunpack.c.l.b16 %v483
        %v661 = vunpack.c.h.b16 %v483
        %v662 = vunpack.c.l.b16 %v484
        %v663 = vunpack.c.l.b16 %v485
        %v664 = vunpack.c.h.b16 %v485
        %v665 = vunpack.c.l.b16 %v486
        %v666 = vunpack.c.l.b16 %v487
        %v667 = vunpack.c.h.b16 %v487
        %v668 = vunpack.c.l.b16 %v488
        %v669 = vunpack.c.l.b16 %v489
        %v670 = vunpack.c.h.b16 %v489
        %v671 = vunpack.c.l.b16 %v490
        %v672 = vunpack.c.l.b16 %v491
        %v673 = vunpack.c.h.b16 %v491
        %v674 = vunpack.c.l.b16 %v492
        %v675 = vunpack.c.l.b16 %v493
        %v676 = vunpack.c.h.b16 %v493
        %v677 = vunpack.c.l.b16 %v494
        %v678 = vunpack.c.l.b16 %v495
        %v679 = vunpack.c.h.b16 %v495
        %v680 = vunpack.c.l.b16 %v496
        %v681 = vunpack.c.l.b16 %v497
        %v682 = vunpack.c.h.b16 %v497
        %v683 = vunpack.c.l.b16 %v498
        %v684 = vunpack.c.l.b16 %v499
        %v685 = vunpack.c.h.b16 %v499
        %v686 = vunpack.c.l.b16 %v500
        %v687 = vunpack.c.l.b16 %v501
        %v688 = vunpack.c.h.b16 %v501
        %v689 = vunpack.c.l.b16 %v502
        %v690 = vunpack.c.l.b16 %v503
        %v691 = vunpack.c.h.b16 %v503
        %v692 = vunpack.c.l.b16 %v504
        %v693 = vunpack.c.l.b16 %v505
        %v694 = vunpack.c.h.b16 %v505
        %v695 = vunpack.c.l.b16 %v506
        %v696 = vunpack.c.l.b16 %v507
        %v697 = vunpack.c.h.b16 %v507
        %v698 = vunpack.c.l.b16 %v508
        %v699 = vunpack.c.l.b16 %v509
        %v700 = vunpack.c.h.b16 %v509
        %v701 = vunpack.c.l.b16 %v510
        %v702 = vunpack.c.l.b16 %v511
        %v703 = vunpack.c.h.b16 %v511
        %v704 = vunpack.c.l.b16 %v512
        %v705 = vunpack.c.l.b16 %v513
        %v706 = vunpack.c.h.b16 %v513
        %v707 = vunpack.c.l.b16 %v514
        %v708 = vunpack.c.l.b16 %v515
        %v709 = vunpack.c.h.b16 %v515
        %v710 = vunpack.c.l.b16 %v516
        %v711 = vunpack.c.l.b16 %v517
        %v712 = vunpack.c.h.b16 %v517
        %v713 = vunpack.c.l.b16 %v518
        %v714 = vunpack.c.l.b16 %v519
        %v715 = vunpack.c.h.b16 %v519
        %v716 = vunpack.c.l.b16 %v520
        %v717 = vunpack.c.l.b16 %v521
        %v718 = vunpack.c.h.b16 %v521
        %v719 = vunpack.c.l.b16 %v522
        %v720 = vunpack.c.l.b16 %v523
        %v721 = vunpack.c.h.b16 %v523
        %v722 = vunpack.c.l.b16 %v524
        %v723 = vunpack.c.l.b16 %v525
        %v724 = vunpack.c.h.b16 %v525
        %v725 = vunpack.c.l.b16 %v526
        %v726 = vunpack.c.l.b16 %v527
        %v727 = vunpack.c.h.b16 %v527
        %v728 = vunpack.c.l.b16 %v528
        %v729 = vunpack.c.l.b16 %v529
        %v730 = vunpack.c.h.b16 %v529
        %v731 = vunpack.c.l.b16 %v530
        %v732 = vunpack.c.l.b16 %v531
        %v733 = vunpack.c.h.b16 %v531
        %v734 = vunpack.c.l.b16 %v532
        %v735 = vunpack.c.l.b16 %v533
        %v736 = vunpack.c.h.b16 %v533
        %v737 = vunpack.c.l.b16 %v534
        %v738 = vunpack.c.l.b16 %v535
        %v739 = vunpack.c.h.b16 %v535
        %v740 = vunpack.c.l.b16 %v536
        %v741 = vunpack.c.l.b16 %v537
        %v742 = vunpack.c.h.b16 %v537
        %v743 = vunpack.c.l.b16 %v538
        %v744 = vunpack.c.l.b16 %v539
        %v745 = vunpack.c.h.b16 %v539
        %v746 = vunpack.c.l.b16 %v540
        %v747 = vunpack.c.l.b16 %v541
        %v748 = vunpack.c.h.b16 %v541
        %v749 = vunpack.c.l.b16 %v542
        %v750 = vunpack.c.l.b16 %v543
        %v751 = vunpack.c.h.b16 %v543
        %v752 = vunpack.c.l.b16 %v544
        %v753 = vpack.c.b16 %v660, %v657
        %v754 = vpack.c.b16 %v661, %v658
        %v755 = vpack.c.b16 %v662, %v659
        %v756 = vpack.c.b16 %v666, %v663
        %v757 = vpack.c.b16 %v667, %v664
        %v758 = vpack.c.b16 %v668, %v665
        %v759 = vpack.c.b16 %v672, %v669
        %v760 = vpack.c.b16 %v673, %v670
        %v761 = vpack.c.b16 %v674, %v671
        %v762 = vpack.c.b16 %v678, %v675
        %v763 = vpack.c.b16 %v679, %v676
        %v764 = vpack.c.b16 %v680, %v677
        %v765 = vpack.c.b16 %v684, %v681
        %v766 = vpack.c.b16 %v685, %v682
        %v767 = vpack.c.b16 %v686, %v683
        %v768 = vpack.c.b16 %v690, %v687
        %v769 = vpack.c.b16 %v691, %v688
        %v770 = vpack.c.b16 %v692, %v689
        %v771 = vpack.c.b16 %v696, %v693
        %v772 = vpack.c.b16 %v697, %v694
        %v773 = vpack.c.b16 %v698, %v695
        %v774 = vpack.c.b16 %v702, %v699
        %v775 = vpack.c.b16 %v703, %v700
        %v776 = vpack.c.b16 %v704, %v701
        %v777 = vpack.c.b16 %v708, %v705
        %v778 = vpack.c.b16 %v709, %v706
        %v779 = vpack.c.b16 %v710, %v707
        %v780 = vpack.c.b16 %v714, %v711
        %v781 = vpack.c.b16 %v715, %v712
        %v782 = vpack.c.b16 %v716, %v713
        %v783 = vpack.c.b16 %v720, %v717
        %v784 = vpack.c.b16 %v721, %v718
        %v785 = vpack.c.b16 %v722, %v719
        %v786 = vpack.c.b16 %v726, %v723
        %v787 = vpack.c.b16 %v727, %v724
        %v788 = vpack.c.b16 %v728, %v725
        %v789 = vpack.c.b16 %v732, %v729
        %v790 = vpack.c.b16 %v733, %v730
        %v791 = vpack.c.b16 %v734, %v731
        %v792 = vpack.c.b16 %v738, %v735
        %v793 = vpack.c.b16 %v739, %v736
        %v794 = vpack.c.b16 %v740, %v737
        %v795 = vpack.c.b16 %v744, %v741
        %v796 = vpack.c.b16 %v745, %v742
        %v797 = vpack.c.b16 %v746, %v743
        %v798 = vpack.c.b16 %v750, %v747
        %v799 = vpack.c.b16 %v751, %v748
        %v800 = vpack.c.b16 %v752, %v749
        %v897 = vunpack.c.l.b16 %v545
        %v898 = vunpack.c.l.b16 %v546
        %v899 = vunpack.c.l.b16 %v547
        %v900 = vunpack.c.l.b16 %v548
        %v901 = vunpack.c.l.b16 %v549
        %v902 = vunpack.c.l.b16 %v550
        %v903 = vunpack.c.l.b16 %v551
        %v904 = vunpack.c.l.b16 %v552
        %v905 = vunpack.c.l.b16 %v553
        %v906 = vunpack.c.l.b16 %v554
        %v907 = vunpack.c.l.b16 %v555
        %v908 = vunpack.c.l.b16 %v556
        %v909 = vunpack.c.l.b16 %v557
        %v910 = vunpack.c.l.b16 %v558
        %v911 = vunpack.c.l.b16 %v559
        %v912 = vunpack.c.l.b16 %v560
        %v913 = vunpack.c.l.b16 %v561
        %v914 = vunpack.c.l.b16 %v562
        %v915 = vunpack.c.l.b16 %v563
        %v916 = vunpack.c.l.b16 %v564
        %v917 = vunpack.c.l.b16 %v565
        %v918 = vunpack.c.l.b16 %v566
        %v919 = vunpack.c.l.b16 %v567
        %v920 = vunpack.c.l.b16 %v568
        %v921 = vunpack.c.l.b16 %v569
        %v922 = vunpack.c.l.b16 %v570
        %v923 = vunpack.c.l.b16 %v571
        %v924 = vunpack.c.l.b16 %v572
        %v925 = vunpack.c.l.b16 %v573
        %v926 = vunpack.c.l.b16 %v574
        %v927 = vunpack.c.l.b16 %v575
        %v928 = vunpack.c.l.b16 %v576
        %v929 = vunpack.c.l.b16 %v577
        %v930 = vunpack.c.l.b16 %v578
        %v931 = vunpack.c.l.b16 %v579
        %v932 = vunpack.c.l.b16 %v580
        %v933 = vunpack.c.l.b16 %v581
        %v934 = vunpack.c.l.b16 %v582
        %v935 = vunpack.c.l.b16 %v583
        %v936 = vunpack.c.l.b16 %v584
        %v937 = vunpack.c.l.b16 %v585
        %v938 = vunpack.c.l.b16 %v586
        %v939 = vunpack.c.l.b16 %v587
        %v940 = vunpack.c.l.b16 %v588
        %v941 = vunpack.c.l.b16 %v589
        %v942 = vunpack.c.l.b16 %v590
        %v943 = vunpack.c.l.b16 %v591
        %v944 = vunpack.c.l.b16 %v592
        %v945 = vpack.c.b16 %v898, %v897
        %v946 = vpack.c.b16 %v900, %v899
        %v947 = vpack.c.b16 %v902, %v901
        %v948 = vpack.c.b16 %v904, %v903
        %v949 = vpack.c.b16 %v906, %v905
        %v950 = vpack.c.b16 %v908, %v907
        %v951 = vpack.c.b16 %v910, %v909
        %v952 = vpack.c.b16 %v912, %v911
        %v953 = vpack.c.b16 %v914, %v913
        %v954 = vpack.c.b16 %v916, %v915
        %v955 = vpack.c.b16 %v918, %v917
        %v956 = vpack.c.b16 %v920, %v919
        %v957 = vpack.c.b16 %v922, %v921
        %v958 = vpack.c.b16 %v924, %v923
        %v959 = vpack.c.b16 %v926, %v925
        %v960 = vpack.c.b16 %v928, %v927
        %v961 = vpack.c.b16 %v930, %v929
        %v962 = vpack.c.b16 %v932, %v931
        %v963 = vpack.c.b16 %v934, %v933
        %v964 = vpack.c.b16 %v936, %v935
        %v965 = vpack.c.b16 %v938, %v937
        %v966 = vpack.c.b16 %v940, %v939
        %v967 = vpack.c.b16 %v942, %v941
        %v968 = vpack.c.b16 %v944, %v943
        %993 = vmatpush.bf16.msra.mxu0 %v952
        %994 = vmatpush.bf16.msra.mxu0 %v951
        %995 = vmatpush.bf16.msra.mxu0 %v950
        %996 = vmatpush.bf16.msra.mxu0 %v949
        %997 = vmatpush.bf16.msra.mxu0 %v948
        %998 = vmatpush.bf16.msra.mxu0 %v947
        %999 = vmatpush.bf16.msra.mxu0 %v946
        %1000 = vmatpush.bf16.msra.mxu0 %v945
        %1001 = vmatmul.bf16.gmra.mxu0 %v753
        %v1002 = vpop.f32.mrf.mxu0
        %v1003 = vadd.f32 0.0, %v1002
        %v1004 = vpop.f32.mrf.mxu0
        %v1005 = vadd.f32 0.0, %v1004
        %1006 = vmatmul.bf16.gmra.mxu0 %v756
        %v1007 = vpop.f32.mrf.mxu0
        %v1008 = vadd.f32 0.0, %v1007
        %v1009 = vpop.f32.mrf.mxu0
        %v1010 = vadd.f32 0.0, %v1009
        %1011 = vmatmul.bf16.gmra.mxu0 %v759
        %v1012 = vpop.f32.mrf.mxu0
        %v1013 = vadd.f32 0.0, %v1012
        %v1014 = vpop.f32.mrf.mxu0
        %v1015 = vadd.f32 0.0, %v1014
        %1016 = vmatmul.bf16.gmra.mxu0 %v762
        %v1017 = vpop.f32.mrf.mxu0
        %v1018 = vadd.f32 0.0, %v1017
        %v1019 = vpop.f32.mrf.mxu0
        %v1020 = vadd.f32 0.0, %v1019
        %1021 = vmatmul.bf16.gmra.mxu0 %v765
        %v1022 = vpop.f32.mrf.mxu0
        %v1023 = vadd.f32 0.0, %v1022
        %v1024 = vpop.f32.mrf.mxu0
        %v1025 = vadd.f32 0.0, %v1024
        %1026 = vmatmul.bf16.gmra.mxu0 %v768
        %v1027 = vpop.f32.mrf.mxu0
        %v1028 = vadd.f32 0.0, %v1027
        %v1029 = vpop.f32.mrf.mxu0
        %v1030 = vadd.f32 0.0, %v1029
        %1031 = vmatmul.bf16.gmra.mxu0 %v771
        %v1032 = vpop.f32.mrf.mxu0
        %v1033 = vadd.f32 0.0, %v1032
        %v1034 = vpop.f32.mrf.mxu0
        %v1035 = vadd.f32 0.0, %v1034
        %1036 = vmatmul.bf16.gmra.mxu0 %v774
        %v1037 = vpop.f32.mrf.mxu0
        %v1038 = vadd.f32 0.0, %v1037
        %v1039 = vpop.f32.mrf.mxu0
        %v1040 = vadd.f32 0.0, %v1039
        %1041 = vmatmul.bf16.gmra.mxu0 %v777
        %v1042 = vpop.f32.mrf.mxu0
        %v1043 = vadd.f32 0.0, %v1042
        %v1044 = vpop.f32.mrf.mxu0
        %v1045 = vadd.f32 0.0, %v1044
        %1046 = vmatmul.bf16.gmra.mxu0 %v780
        %v1047 = vpop.f32.mrf.mxu0
        %v1048 = vadd.f32 0.0, %v1047
        %v1049 = vpop.f32.mrf.mxu0
        %v1050 = vadd.f32 0.0, %v1049
        %1051 = vmatmul.bf16.gmra.mxu0 %v783
        %v1052 = vpop.f32.mrf.mxu0
        %v1053 = vadd.f32 0.0, %v1052
        %v1054 = vpop.f32.mrf.mxu0
        %v1055 = vadd.f32 0.0, %v1054
        %1056 = vmatmul.bf16.gmra.mxu0 %v786
        %v1057 = vpop.f32.mrf.mxu0
        %v1058 = vadd.f32 0.0, %v1057
        %v1059 = vpop.f32.mrf.mxu0
        %v1060 = vadd.f32 0.0, %v1059
        %1061 = vmatmul.bf16.gmra.mxu0 %v789
        %v1062 = vpop.f32.mrf.mxu0
        %v1063 = vadd.f32 0.0, %v1062
        %v1064 = vpop.f32.mrf.mxu0
        %v1065 = vadd.f32 0.0, %v1064
        %1066 = vmatmul.bf16.gmra.mxu0 %v792
        %v1067 = vpop.f32.mrf.mxu0
        %v1068 = vadd.f32 0.0, %v1067
        %v1069 = vpop.f32.mrf.mxu0
        %v1070 = vadd.f32 0.0, %v1069
        %1071 = vmatmul.bf16.gmra.mxu0 %v795
        %v1072 = vpop.f32.mrf.mxu0
        %v1073 = vadd.f32 0.0, %v1072
        %v1074 = vpop.f32.mrf.mxu0
        %v1075 = vadd.f32 0.0, %v1074
        %1076 = vmatmul.bf16.gmra.mxu0 %v798
        %v1077 = vpop.f32.mrf.mxu0
        %v1078 = vadd.f32 0.0, %v1077
        %v1079 = vpop.f32.mrf.mxu0
        %v1080 = vadd.f32 0.0, %v1079
        %1081 = vdwg.mxu0
        %1082 = vmatpush.bf16.msra.mxu0 %v960
        %1083 = vmatpush.bf16.msra.mxu0 %v959
        %1084 = vmatpush.bf16.msra.mxu0 %v958
        %1085 = vmatpush.bf16.msra.mxu0 %v957
        %1086 = vmatpush.bf16.msra.mxu0 %v956
        %1087 = vmatpush.bf16.msra.mxu0 %v955
        %1088 = vmatpush.bf16.msra.mxu0 %v954
        %1089 = vmatpush.bf16.msra.mxu0 %v953
        %1090 = vmatmul.bf16.gmra.mxu0 %v754
        %v1091 = vpop.f32.mrf.mxu0
        %v1092 = vadd.f32 %v1003, %v1091
        %v1093 = vpop.f32.mrf.mxu0
        %v1094 = vadd.f32 %v1005, %v1093
        %1095 = vmatmul.bf16.gmra.mxu0 %v757
        %v1096 = vpop.f32.mrf.mxu0
        %v1097 = vadd.f32 %v1008, %v1096
        %v1098 = vpop.f32.mrf.mxu0
        %v1099 = vadd.f32 %v1010, %v1098
        %1100 = vmatmul.bf16.gmra.mxu0 %v760
        %v1101 = vpop.f32.mrf.mxu0
        %v1102 = vadd.f32 %v1013, %v1101
        %v1103 = vpop.f32.mrf.mxu0
        %v1104 = vadd.f32 %v1015, %v1103
        %1105 = vmatmul.bf16.gmra.mxu0 %v763
        %v1106 = vpop.f32.mrf.mxu0
        %v1107 = vadd.f32 %v1018, %v1106
        %v1108 = vpop.f32.mrf.mxu0
        %v1109 = vadd.f32 %v1020, %v1108
        %1110 = vmatmul.bf16.gmra.mxu0 %v766
        %v1111 = vpop.f32.mrf.mxu0
        %v1112 = vadd.f32 %v1023, %v1111
        %v1113 = vpop.f32.mrf.mxu0
        %v1114 = vadd.f32 %v1025, %v1113
        %1115 = vmatmul.bf16.gmra.mxu0 %v769
        %v1116 = vpop.f32.mrf.mxu0
        %v1117 = vadd.f32 %v1028, %v1116
        %v1118 = vpop.f32.mrf.mxu0
        %v1119 = vadd.f32 %v1030, %v1118
        %1120 = vmatmul.bf16.gmra.mxu0 %v772
        %v1121 = vpop.f32.mrf.mxu0
        %v1122 = vadd.f32 %v1033, %v1121
        %v1123 = vpop.f32.mrf.mxu0
        %v1124 = vadd.f32 %v1035, %v1123
        %1125 = vmatmul.bf16.gmra.mxu0 %v775
        %v1126 = vpop.f32.mrf.mxu0
        %v1127 = vadd.f32 %v1038, %v1126
        %v1128 = vpop.f32.mrf.mxu0
        %v1129 = vadd.f32 %v1040, %v1128
        %1130 = vmatmul.bf16.gmra.mxu0 %v778
        %v1131 = vpop.f32.mrf.mxu0
        %v1132 = vadd.f32 %v1043, %v1131
        %v1133 = vpop.f32.mrf.mxu0
        %v1134 = vadd.f32 %v1045, %v1133
        %1135 = vmatmul.bf16.gmra.mxu0 %v781
        %v1136 = vpop.f32.mrf.mxu0
        %v1137 = vadd.f32 %v1048, %v1136
        %v1138 = vpop.f32.mrf.mxu0
        %v1139 = vadd.f32 %v1050, %v1138
        %1140 = vmatmul.bf16.gmra.mxu0 %v784
        %v1141 = vpop.f32.mrf.mxu0
        %v1142 = vadd.f32 %v1053, %v1141
        %v1143 = vpop.f32.mrf.mxu0
        %v1144 = vadd.f32 %v1055, %v1143
        %1145 = vmatmul.bf16.gmra.mxu0 %v787
        %v1146 = vpop.f32.mrf.mxu0
        %v1147 = vadd.f32 %v1058, %v1146
        %v1148 = vpop.f32.mrf.mxu0
        %v1149 = vadd.f32 %v1060, %v1148
        %1150 = vmatmul.bf16.gmra.mxu0 %v790
        %v1151 = vpop.f32.mrf.mxu0
        %v1152 = vadd.f32 %v1063, %v1151
        %v1153 = vpop.f32.mrf.mxu0
        %v1154 = vadd.f32 %v1065, %v1153
        %1155 = vmatmul.bf16.gmra.mxu0 %v793
        %v1156 = vpop.f32.mrf.mxu0
        %v1157 = vadd.f32 %v1068, %v1156
        %v1158 = vpop.f32.mrf.mxu0
        %v1159 = vadd.f32 %v1070, %v1158
        %1160 = vmatmul.bf16.gmra.mxu0 %v796
        %v1161 = vpop.f32.mrf.mxu0
        %v1162 = vadd.f32 %v1073, %v1161
        %v1163 = vpop.f32.mrf.mxu0
        %v1164 = vadd.f32 %v1075, %v1163
        %1165 = vmatmul.bf16.gmra.mxu0 %v799
        %v1166 = vpop.f32.mrf.mxu0
        %v1167 = vadd.f32 %v1078, %v1166
        %v1168 = vpop.f32.mrf.mxu0
        %v1169 = vadd.f32 %v1080, %v1168
        %1170 = vdwg.mxu0
        %1171 = vmatpush.bf16.msra.mxu0 %v968
        %1172 = vmatpush.bf16.msra.mxu0 %v967
        %1173 = vmatpush.bf16.msra.mxu0 %v966
        %1174 = vmatpush.bf16.msra.mxu0 %v965
        %1175 = vmatpush.bf16.msra.mxu0 %v964
        %1176 = vmatpush.bf16.msra.mxu0 %v963
        %1177 = vmatpush.bf16.msra.mxu0 %v962
        %1178 = vmatpush.bf16.msra.mxu0 %v961
        %1179 = vmatmul.bf16.gmra.mxu0 %v755
        %v1180 = vpop.f32.mrf.mxu0
        %v1181 = vadd.f32 %v1092, %v1180
        %v1182 = vpop.f32.mrf.mxu0
        %v1183 = vadd.f32 %v1094, %v1182
        %1184 = vmatmul.bf16.gmra.mxu0 %v758
        %v1185 = vpop.f32.mrf.mxu0
        %v1186 = vadd.f32 %v1097, %v1185
        %v1187 = vpop.f32.mrf.mxu0
        %v1188 = vadd.f32 %v1099, %v1187
        %1189 = vmatmul.bf16.gmra.mxu0 %v761
        %v1190 = vpop.f32.mrf.mxu0
        %v1191 = vadd.f32 %v1102, %v1190
        %v1192 = vpop.f32.mrf.mxu0
        %v1193 = vadd.f32 %v1104, %v1192
        %1194 = vmatmul.bf16.gmra.mxu0 %v764
        %v1195 = vpop.f32.mrf.mxu0
        %v1196 = vadd.f32 %v1107, %v1195
        %v1197 = vpop.f32.mrf.mxu0
        %v1198 = vadd.f32 %v1109, %v1197
        %1199 = vmatmul.bf16.gmra.mxu0 %v767
        %v1200 = vpop.f32.mrf.mxu0
        %v1201 = vadd.f32 %v1112, %v1200
        %v1202 = vpop.f32.mrf.mxu0
        %v1203 = vadd.f32 %v1114, %v1202
        %1204 = vmatmul.bf16.gmra.mxu0 %v770
        %v1205 = vpop.f32.mrf.mxu0
        %v1206 = vadd.f32 %v1117, %v1205
        %v1207 = vpop.f32.mrf.mxu0
        %v1208 = vadd.f32 %v1119, %v1207
        %1209 = vmatmul.bf16.gmra.mxu0 %v773
        %v1210 = vpop.f32.mrf.mxu0
        %v1211 = vadd.f32 %v1122, %v1210
        %v1212 = vpop.f32.mrf.mxu0
        %v1213 = vadd.f32 %v1124, %v1212
        %1214 = vmatmul.bf16.gmra.mxu0 %v776
        %v1215 = vpop.f32.mrf.mxu0
        %v1216 = vadd.f32 %v1127, %v1215
        %v1217 = vpop.f32.mrf.mxu0
        %v1218 = vadd.f32 %v1129, %v1217
        %1219 = vmatmul.bf16.gmra.mxu0 %v779
        %v1220 = vpop.f32.mrf.mxu0
        %v1221 = vadd.f32 %v1132, %v1220
        %v1222 = vpop.f32.mrf.mxu0
        %v1223 = vadd.f32 %v1134, %v1222
        %1224 = vmatmul.bf16.gmra.mxu0 %v782
        %v1225 = vpop.f32.mrf.mxu0
        %v1226 = vadd.f32 %v1137, %v1225
        %v1227 = vpop.f32.mrf.mxu0
        %v1228 = vadd.f32 %v1139, %v1227
        %1229 = vmatmul.bf16.gmra.mxu0 %v785
        %v1230 = vpop.f32.mrf.mxu0
        %v1231 = vadd.f32 %v1142, %v1230
        %v1232 = vpop.f32.mrf.mxu0
        %v1233 = vadd.f32 %v1144, %v1232
        %1234 = vmatmul.bf16.gmra.mxu0 %v788
        %v1235 = vpop.f32.mrf.mxu0
        %v1236 = vadd.f32 %v1147, %v1235
        %v1237 = vpop.f32.mrf.mxu0
        %v1238 = vadd.f32 %v1149, %v1237
        %1239 = vmatmul.bf16.gmra.mxu0 %v791
        %v1240 = vpop.f32.mrf.mxu0
        %v1241 = vadd.f32 %v1152, %v1240
        %v1242 = vpop.f32.mrf.mxu0
        %v1243 = vadd.f32 %v1154, %v1242
        %1244 = vmatmul.bf16.gmra.mxu0 %v794
        %v1245 = vpop.f32.mrf.mxu0
        %v1246 = vadd.f32 %v1157, %v1245
        %v1247 = vpop.f32.mrf.mxu0
        %v1248 = vadd.f32 %v1159, %v1247
        %1249 = vmatmul.bf16.gmra.mxu0 %v797
        %v1250 = vpop.f32.mrf.mxu0
        %v1251 = vadd.f32 %v1162, %v1250
        %v1252 = vpop.f32.mrf.mxu0
        %v1253 = vadd.f32 %v1164, %v1252
        %1254 = vmatmul.bf16.gmra.mxu0 %v800
        %v1255 = vpop.f32.mrf.mxu0
        %v1256 = vadd.f32 %v1167, %v1255
        %v1257 = vpop.f32.mrf.mxu0
        %v1258 = vadd.f32 %v1169, %v1257
        %1259 = vdwg.mxu0
        %v1292 = vunpack.c.l.b16 %v433
        %v1293 = vunpack.c.l.b16 %v434
        %v1294 = vunpack.c.l.b16 %v435
        %v1295 = vunpack.c.l.b16 %v436
        %v1296 = vunpack.c.l.b16 %v437
        %v1297 = vunpack.c.l.b16 %v438
        %v1298 = vunpack.c.l.b16 %v439
        %v1299 = vunpack.c.l.b16 %v440
        %v1300 = vunpack.c.l.b16 %v441
        %v1301 = vunpack.c.l.b16 %v442
        %v1302 = vunpack.c.l.b16 %v443
        %v1303 = vunpack.c.l.b16 %v444
        %v1304 = vunpack.c.l.b16 %v445
        %v1305 = vunpack.c.l.b16 %v446
        %v1306 = vunpack.c.l.b16 %v447
        %v1307 = vunpack.c.l.b16 %v448
        %v1308 = vunpack.c.l.b16 %v449
        %v1309 = vunpack.c.l.b16 %v450
        %v1310 = vunpack.c.l.b16 %v451
        %v1311 = vunpack.c.l.b16 %v452
        %v1312 = vunpack.c.l.b16 %v453
        %v1313 = vunpack.c.l.b16 %v454
        %v1314 = vunpack.c.l.b16 %v455
        %v1315 = vunpack.c.l.b16 %v456
        %v1316 = vunpack.c.l.b16 %v457
        %v1317 = vunpack.c.l.b16 %v458
        %v1318 = vunpack.c.l.b16 %v459
        %v1319 = vunpack.c.l.b16 %v460
        %v1320 = vunpack.c.l.b16 %v461
        %v1321 = vunpack.c.l.b16 %v462
        %v1322 = vunpack.c.l.b16 %v463
        %v1323 = vunpack.c.l.b16 %v464
        %v1324 = vpack.c.b16 %v1293, %v1292
        %v1325 = vpack.c.b16 %v1295, %v1294
        %v1326 = vpack.c.b16 %v1297, %v1296
        %v1327 = vpack.c.b16 %v1299, %v1298
        %v1328 = vpack.c.b16 %v1301, %v1300
        %v1329 = vpack.c.b16 %v1303, %v1302
        %v1330 = vpack.c.b16 %v1305, %v1304
        %v1331 = vpack.c.b16 %v1307, %v1306
        %v1332 = vpack.c.b16 %v1309, %v1308
        %v1333 = vpack.c.b16 %v1311, %v1310
        %v1334 = vpack.c.b16 %v1313, %v1312
        %v1335 = vpack.c.b16 %v1315, %v1314
        %v1336 = vpack.c.b16 %v1317, %v1316
        %v1337 = vpack.c.b16 %v1319, %v1318
        %v1338 = vpack.c.b16 %v1321, %v1320
        %v1339 = vpack.c.b16 %v1323, %v1322
        %v1372 = vunpack.c.l.b16 %v465
        %v1373 = vunpack.c.l.b16 %v466
        %v1374 = vunpack.c.l.b16 %v467
        %v1375 = vunpack.c.l.b16 %v468
        %v1376 = vunpack.c.l.b16 %v469
        %v1377 = vunpack.c.l.b16 %v470
        %v1378 = vunpack.c.l.b16 %v471
        %v1379 = vunpack.c.l.b16 %v472
        %v1380 = vunpack.c.l.b16 %v473
        %v1381 = vunpack.c.l.b16 %v474
        %v1382 = vunpack.c.l.b16 %v475
        %v1383 = vunpack.c.l.b16 %v476
        %v1384 = vunpack.c.l.b16 %v477
        %v1385 = vunpack.c.l.b16 %v478
        %v1386 = vunpack.c.l.b16 %v479
        %v1387 = vunpack.c.l.b16 %v480
        %v1388 = vpack.c.b16 %v1373, %v1372
        %v1389 = vpack.c.b16 %v1375, %v1374
        %v1390 = vpack.c.b16 %v1377, %v1376
        %v1391 = vpack.c.b16 %v1379, %v1378
        %v1392 = vpack.c.b16 %v1381, %v1380
        %v1393 = vpack.c.b16 %v1383, %v1382
        %v1394 = vpack.c.b16 %v1385, %v1384
        %v1395 = vpack.c.b16 %v1387, %v1386
        %1404 = vmatpush.bf16.msra.mxu0 %v1395
        %1405 = vmatpush.bf16.msra.mxu0 %v1394
        %1406 = vmatpush.bf16.msra.mxu0 %v1393
        %1407 = vmatpush.bf16.msra.mxu0 %v1392
        %1408 = vmatpush.bf16.msra.mxu0 %v1391
        %1409 = vmatpush.bf16.msra.mxu0 %v1390
        %1410 = vmatpush.bf16.msra.mxu0 %v1389
        %1411 = vmatpush.bf16.msra.mxu0 %v1388
        %1412 = vmatmul.bf16.gmra.mxu0 %v1324
        %v1413 = vpop.f32.mrf.mxu0
        %v1414 = vadd.f32 %v1181, %v1413
        %v1415 = vpop.f32.mrf.mxu0
        %v1416 = vadd.f32 %v1183, %v1415
        %1417 = vmatmul.bf16.gmra.mxu0 %v1325
        %v1418 = vpop.f32.mrf.mxu0
        %v1419 = vadd.f32 %v1186, %v1418
        %v1420 = vpop.f32.mrf.mxu0
        %v1421 = vadd.f32 %v1188, %v1420
        %1422 = vmatmul.bf16.gmra.mxu0 %v1326
        %v1423 = vpop.f32.mrf.mxu0
        %v1424 = vadd.f32 %v1191, %v1423
        %v1425 = vpop.f32.mrf.mxu0
        %v1426 = vadd.f32 %v1193, %v1425
        %1427 = vmatmul.bf16.gmra.mxu0 %v1327
        %v1428 = vpop.f32.mrf.mxu0
        %v1429 = vadd.f32 %v1196, %v1428
        %v1430 = vpop.f32.mrf.mxu0
        %v1431 = vadd.f32 %v1198, %v1430
        %1432 = vmatmul.bf16.gmra.mxu0 %v1328
        %v1433 = vpop.f32.mrf.mxu0
        %v1434 = vadd.f32 %v1201, %v1433
        %v1435 = vpop.f32.mrf.mxu0
        %v1436 = vadd.f32 %v1203, %v1435
        %1437 = vmatmul.bf16.gmra.mxu0 %v1329
        %v1438 = vpop.f32.mrf.mxu0
        %v1439 = vadd.f32 %v1206, %v1438
        %v1440 = vpop.f32.mrf.mxu0
        %v1441 = vadd.f32 %v1208, %v1440
        %1442 = vmatmul.bf16.gmra.mxu0 %v1330
        %v1443 = vpop.f32.mrf.mxu0
        %v1444 = vadd.f32 %v1211, %v1443
        %v1445 = vpop.f32.mrf.mxu0
        %v1446 = vadd.f32 %v1213, %v1445
        %1447 = vmatmul.bf16.gmra.mxu0 %v1331
        %v1448 = vpop.f32.mrf.mxu0
        %v1449 = vadd.f32 %v1216, %v1448
        %v1450 = vpop.f32.mrf.mxu0
        %v1451 = vadd.f32 %v1218, %v1450
        %1452 = vmatmul.bf16.gmra.mxu0 %v1332
        %v1453 = vpop.f32.mrf.mxu0
        %v1454 = vadd.f32 %v1221, %v1453
        %v1455 = vpop.f32.mrf.mxu0
        %v1456 = vadd.f32 %v1223, %v1455
        %1457 = vmatmul.bf16.gmra.mxu0 %v1333
        %v1458 = vpop.f32.mrf.mxu0
        %v1459 = vadd.f32 %v1226, %v1458
        %v1460 = vpop.f32.mrf.mxu0
        %v1461 = vadd.f32 %v1228, %v1460
        %1462 = vmatmul.bf16.gmra.mxu0 %v1334
        %v1463 = vpop.f32.mrf.mxu0
        %v1464 = vadd.f32 %v1231, %v1463
        %v1465 = vpop.f32.mrf.mxu0
        %v1466 = vadd.f32 %v1233, %v1465
        %1467 = vmatmul.bf16.gmra.mxu0 %v1335
        %v1468 = vpop.f32.mrf.mxu0
        %v1469 = vadd.f32 %v1236, %v1468
        %v1470 = vpop.f32.mrf.mxu0
        %v1471 = vadd.f32 %v1238, %v1470
        %1472 = vmatmul.bf16.gmra.mxu0 %v1336
        %v1473 = vpop.f32.mrf.mxu0
        %v1474 = vadd.f32 %v1241, %v1473
        %v1475 = vpop.f32.mrf.mxu0
        %v1476 = vadd.f32 %v1243, %v1475
        %1477 = vmatmul.bf16.gmra.mxu0 %v1337
        %v1478 = vpop.f32.mrf.mxu0
        %v1479 = vadd.f32 %v1246, %v1478
        %v1480 = vpop.f32.mrf.mxu0
        %v1481 = vadd.f32 %v1248, %v1480
        %1482 = vmatmul.bf16.gmra.mxu0 %v1338
        %v1483 = vpop.f32.mrf.mxu0
        %v1484 = vadd.f32 %v1251, %v1483
        %v1485 = vpop.f32.mrf.mxu0
        %v1486 = vadd.f32 %v1253, %v1485
        %1487 = vmatmul.bf16.gmra.mxu0 %v1339
        %v1488 = vpop.f32.mrf.mxu0
        %v1489 = vadd.f32 %v1256, %v1488
        %v1490 = vpop.f32.mrf.mxu0
        %v1491 = vadd.f32 %v1258, %v1490
        %1492 = vdwg.mxu0
        %v1493 = vld [vmem:[%s413] sm:$0x1]
        %v1495 = vperm.slane %v1493, 0
        %v1497 = vadd.f32 %v1414, %v1495
        %v1498 = vadd.f32 %v1416, %v1495
        %v1499 = vadd.f32 %v1419, %v1495
        %v1500 = vadd.f32 %v1421, %v1495
        %v1501 = vadd.f32 %v1424, %v1495
        %v1502 = vadd.f32 %v1426, %v1495
        %v1503 = vadd.f32 %v1429, %v1495
        %v1504 = vadd.f32 %v1431, %v1495
        %v1505 = vadd.f32 %v1434, %v1495
        %v1506 = vadd.f32 %v1436, %v1495
        %v1507 = vadd.f32 %v1439, %v1495
        %v1508 = vadd.f32 %v1441, %v1495
        %v1509 = vadd.f32 %v1444, %v1495
        %v1510 = vadd.f32 %v1446, %v1495
        %v1511 = vadd.f32 %v1449, %v1495
        %v1512 = vadd.f32 %v1451, %v1495
        %v1513 = vadd.f32 %v1454, %v1495
        %v1514 = vadd.f32 %v1456, %v1495
        %v1515 = vadd.f32 %v1459, %v1495
        %v1516 = vadd.f32 %v1461, %v1495
        %v1517 = vadd.f32 %v1464, %v1495
        %v1518 = vadd.f32 %v1466, %v1495
        %v1519 = vadd.f32 %v1469, %v1495
        %v1520 = vadd.f32 %v1471, %v1495
        %v1521 = vadd.f32 %v1474, %v1495
        %v1522 = vadd.f32 %v1476, %v1495
        %v1523 = vadd.f32 %v1479, %v1495
        %v1524 = vadd.f32 %v1481, %v1495
        %v1525 = vadd.f32 %v1484, %v1495
        %v1526 = vadd.f32 %v1486, %v1495
        %v1527 = vadd.f32 %v1489, %v1495
        %v1528 = vadd.f32 %v1491, %v1495
        %v1529 = vld [vmem:[%s421] sm:$0xff]
        %v1530 = vld [vmem:[%s421 + $0x8] sm:$0xff]
        %v1531 = vld [vmem:[%s421 + $0x10] sm:$0xff]
        %v1532 = vld [vmem:[%s421 + $0x18] sm:$0xff]
        %v1533 = vld [vmem:[%s421 + $0x20] sm:$0xff]
        %v1534 = vld [vmem:[%s421 + $0x28] sm:$0xff]
        %v1535 = vld [vmem:[%s421 + $0x30] sm:$0xff]
        %v1536 = vld [vmem:[%s421 + $0x38] sm:$0xff]
        %v1537 = vld [vmem:[%s421 + $0x40] sm:$0xff]
        %v1538 = vld [vmem:[%s421 + $0x48] sm:$0xff]
        %v1539 = vld [vmem:[%s421 + $0x50] sm:$0xff]
        %v1540 = vld [vmem:[%s421 + $0x58] sm:$0xff]
        %v1541 = vld [vmem:[%s421 + $0x60] sm:$0xff]
        %v1542 = vld [vmem:[%s421 + $0x68] sm:$0xff]
        %v1543 = vld [vmem:[%s421 + $0x70] sm:$0xff]
        %v1544 = vld [vmem:[%s421 + $0x78] sm:$0xff]
        %v1545 = vld [vmem:[%s421 + $0x80] sm:$0xff]
        %v1546 = vld [vmem:[%s421 + $0x88] sm:$0xff]
        %v1547 = vld [vmem:[%s421 + $0x90] sm:$0xff]
        %v1548 = vld [vmem:[%s421 + $0x98] sm:$0xff]
        %v1549 = vld [vmem:[%s421 + $0xa0] sm:$0xff]
        %v1550 = vld [vmem:[%s421 + $0xa8] sm:$0xff]
        %v1551 = vld [vmem:[%s421 + $0xb0] sm:$0xff]
        %v1552 = vld [vmem:[%s421 + $0xb8] sm:$0xff]
        %v1553 = vld [vmem:[%s421 + $0xc0] sm:$0xff]
        %v1554 = vld [vmem:[%s421 + $0xc8] sm:$0xff]
        %v1555 = vld [vmem:[%s421 + $0xd0] sm:$0xff]
        %v1556 = vld [vmem:[%s421 + $0xd8] sm:$0xff]
        %v1557 = vld [vmem:[%s421 + $0xe0] sm:$0xff]
        %v1558 = vld [vmem:[%s421 + $0xe8] sm:$0xff]
        %v1559 = vld [vmem:[%s421 + $0xf0] sm:$0xff]
        %v1560 = vld [vmem:[%s421 + $0xf8] sm:$0xff]
        %v1561 = vld [vmem:[%s430] sm:$0xff]
        %v1562 = vld [vmem:[%s430 + $0x8] sm:$0xff]
        %v1563 = vld [vmem:[%s430 + $0x10] sm:$0xff]
        %v1564 = vld [vmem:[%s430 + $0x18] sm:$0xff]
        %v1565 = vld [vmem:[%s430 + $0x20] sm:$0xff]
        %v1566 = vld [vmem:[%s430 + $0x28] sm:$0xff]
        %v1567 = vld [vmem:[%s430 + $0x30] sm:$0xff]
        %v1568 = vld [vmem:[%s430 + $0x38] sm:$0xff]
        %v1569 = vld [vmem:[%s430 + $0x40] sm:$0xff]
        %v1570 = vld [vmem:[%s430 + $0x48] sm:$0xff]
        %v1571 = vld [vmem:[%s430 + $0x50] sm:$0xff]
        %v1572 = vld [vmem:[%s430 + $0x58] sm:$0xff]
        %v1573 = vld [vmem:[%s430 + $0x60] sm:$0xff]
        %v1574 = vld [vmem:[%s430 + $0x68] sm:$0xff]
        %v1575 = vld [vmem:[%s430 + $0x70] sm:$0xff]
        %v1576 = vld [vmem:[%s430 + $0x78] sm:$0xff]
        %v1577 = vld [vmem:[%s430 + $0x80] sm:$0xff]
        %v1578 = vld [vmem:[%s430 + $0x88] sm:$0xff]
        %v1579 = vld [vmem:[%s430 + $0x90] sm:$0xff]
        %v1580 = vld [vmem:[%s430 + $0x98] sm:$0xff]
        %v1581 = vld [vmem:[%s430 + $0xa0] sm:$0xff]
        %v1582 = vld [vmem:[%s430 + $0xa8] sm:$0xff]
        %v1583 = vld [vmem:[%s430 + $0xb0] sm:$0xff]
        %v1584 = vld [vmem:[%s430 + $0xb8] sm:$0xff]
        %v1585 = vld [vmem:[%s430 + $0xc0] sm:$0xff]
        %v1586 = vld [vmem:[%s430 + $0xc8] sm:$0xff]
        %v1587 = vld [vmem:[%s430 + $0xd0] sm:$0xff]
        %v1588 = vld [vmem:[%s430 + $0xd8] sm:$0xff]
        %v1589 = vld [vmem:[%s430 + $0xe0] sm:$0xff]
        %v1590 = vld [vmem:[%s430 + $0xe8] sm:$0xff]
        %v1591 = vld [vmem:[%s430 + $0xf0] sm:$0xff]
        %v1592 = vld [vmem:[%s430 + $0xf8] sm:$0xff]
        %v1593 = vsub.f32 1.0, %v1561
        %v1594 = vsub.f32 1.0, %v1562
        %v1595 = vsub.f32 1.0, %v1563
        %v1596 = vsub.f32 1.0, %v1564
        %v1597 = vsub.f32 1.0, %v1565
        %v1598 = vsub.f32 1.0, %v1566
        %v1599 = vsub.f32 1.0, %v1567
        %v1600 = vsub.f32 1.0, %v1568
        %v1601 = vsub.f32 1.0, %v1569
        %v1602 = vsub.f32 1.0, %v1570
        %v1603 = vsub.f32 1.0, %v1571
        %v1604 = vsub.f32 1.0, %v1572
        %v1605 = vsub.f32 1.0, %v1573
        %v1606 = vsub.f32 1.0, %v1574
        %v1607 = vsub.f32 1.0, %v1575
        %v1608 = vsub.f32 1.0, %v1576
        %v1609 = vsub.f32 1.0, %v1577
        %v1610 = vsub.f32 1.0, %v1578
        %v1611 = vsub.f32 1.0, %v1579
        %v1612 = vsub.f32 1.0, %v1580
        %v1613 = vsub.f32 1.0, %v1581
        %v1614 = vsub.f32 1.0, %v1582
        %v1615 = vsub.f32 1.0, %v1583
        %v1616 = vsub.f32 1.0, %v1584
        %v1617 = vsub.f32 1.0, %v1585
        %v1618 = vsub.f32 1.0, %v1586
        %v1619 = vsub.f32 1.0, %v1587
        %v1620 = vsub.f32 1.0, %v1588
        %v1621 = vsub.f32 1.0, %v1589
        %v1622 = vsub.f32 1.0, %v1590
        %v1623 = vsub.f32 1.0, %v1591
        %v1624 = vsub.f32 1.0, %v1592
        %v1625 = vtanh.pop %v1497
        %v1626 = vtanh.pop %v1498
        %v1627 = vtanh.pop %v1499
        %v1628 = vtanh.pop %v1500
        %v1629 = vtanh.pop %v1501
        %v1630 = vtanh.pop %v1502
        %v1631 = vtanh.pop %v1503
        %v1632 = vtanh.pop %v1504
        %v1633 = vtanh.pop %v1505
        %v1634 = vtanh.pop %v1506
        %v1635 = vtanh.pop %v1507
        %v1636 = vtanh.pop %v1508
        %v1637 = vtanh.pop %v1509
        %v1638 = vtanh.pop %v1510
        %v1639 = vtanh.pop %v1511
        %v1640 = vtanh.pop %v1512
        %v1641 = vtanh.pop %v1513
        %v1642 = vtanh.pop %v1514
        %v1643 = vtanh.pop %v1515
        %v1644 = vtanh.pop %v1516
        %v1645 = vtanh.pop %v1517
        %v1646 = vtanh.pop %v1518
        %v1647 = vtanh.pop %v1519
        %v1648 = vtanh.pop %v1520
        %v1649 = vtanh.pop %v1521
        %v1650 = vtanh.pop %v1522
        %v1651 = vtanh.pop %v1523
        %v1652 = vtanh.pop %v1524
        %v1653 = vtanh.pop %v1525
        %v1654 = vtanh.pop %v1526
        %v1655 = vtanh.pop %v1527
        %v1656 = vtanh.pop %v1528
        %v1657 = vmul.f32 %v1593, %v1625
        %v1658 = vmul.f32 %v1594, %v1626
        %v1659 = vmul.f32 %v1595, %v1627
        %v1660 = vmul.f32 %v1596, %v1628
        %v1661 = vmul.f32 %v1597, %v1629
        %v1662 = vmul.f32 %v1598, %v1630
        %v1663 = vmul.f32 %v1599, %v1631
        %v1664 = vmul.f32 %v1600, %v1632
        %v1665 = vmul.f32 %v1601, %v1633
        %v1666 = vmul.f32 %v1602, %v1634
        %v1667 = vmul.f32 %v1603, %v1635
        %v1668 = vmul.f32 %v1604, %v1636
        %v1669 = vmul.f32 %v1605, %v1637
        %v1670 = vmul.f32 %v1606, %v1638
        %v1671 = vmul.f32 %v1607, %v1639
        %v1672 = vmul.f32 %v1608, %v1640
        %v1673 = vmul.f32 %v1609, %v1641
        %v1674 = vmul.f32 %v1610, %v1642
        %v1675 = vmul.f32 %v1611, %v1643
        %v1676 = vmul.f32 %v1612, %v1644
        %v1677 = vmul.f32 %v1613, %v1645
        %v1678 = vmul.f32 %v1614, %v1646
        %v1679 = vmul.f32 %v1615, %v1647
        %v1680 = vmul.f32 %v1616, %v1648
        %v1681 = vmul.f32 %v1617, %v1649
        %v1682 = vmul.f32 %v1618, %v1650
        %v1683 = vmul.f32 %v1619, %v1651
        %v1684 = vmul.f32 %v1620, %v1652
        %v1685 = vmul.f32 %v1621, %v1653
        %v1686 = vmul.f32 %v1622, %v1654
        %v1687 = vmul.f32 %v1623, %v1655
        %v1688 = vmul.f32 %v1624, %v1656
        %v1689 = vmul.f32 %v1561, %v1529
        %v1690 = vmul.f32 %v1562, %v1530
        %v1691 = vmul.f32 %v1563, %v1531
        %v1692 = vmul.f32 %v1564, %v1532
        %v1693 = vmul.f32 %v1565, %v1533
        %v1694 = vmul.f32 %v1566, %v1534
        %v1695 = vmul.f32 %v1567, %v1535
        %v1696 = vmul.f32 %v1568, %v1536
        %v1697 = vmul.f32 %v1569, %v1537
        %v1698 = vmul.f32 %v1570, %v1538
        %v1699 = vmul.f32 %v1571, %v1539
        %v1700 = vmul.f32 %v1572, %v1540
        %v1701 = vmul.f32 %v1573, %v1541
        %v1702 = vmul.f32 %v1574, %v1542
        %v1703 = vmul.f32 %v1575, %v1543
        %v1704 = vmul.f32 %v1576, %v1544
        %v1705 = vmul.f32 %v1577, %v1545
        %v1706 = vmul.f32 %v1578, %v1546
        %v1707 = vmul.f32 %v1579, %v1547
        %v1708 = vmul.f32 %v1580, %v1548
        %v1709 = vmul.f32 %v1581, %v1549
        %v1710 = vmul.f32 %v1582, %v1550
        %v1711 = vmul.f32 %v1583, %v1551
        %v1712 = vmul.f32 %v1584, %v1552
        %v1713 = vmul.f32 %v1585, %v1553
        %v1714 = vmul.f32 %v1586, %v1554
        %v1715 = vmul.f32 %v1587, %v1555
        %v1716 = vmul.f32 %v1588, %v1556
        %v1717 = vmul.f32 %v1589, %v1557
        %v1718 = vmul.f32 %v1590, %v1558
        %v1719 = vmul.f32 %v1591, %v1559
        %v1720 = vmul.f32 %v1592, %v1560
        %v1721 = vadd.f32 %v1657, %v1689
        %v1722 = vadd.f32 %v1658, %v1690
        %v1723 = vadd.f32 %v1659, %v1691
        %v1724 = vadd.f32 %v1660, %v1692
        %v1725 = vadd.f32 %v1661, %v1693
        %v1726 = vadd.f32 %v1662, %v1694
        %v1727 = vadd.f32 %v1663, %v1695
        %v1728 = vadd.f32 %v1664, %v1696
        %v1729 = vadd.f32 %v1665, %v1697
        %v1730 = vadd.f32 %v1666, %v1698
        %v1731 = vadd.f32 %v1667, %v1699
        %v1732 = vadd.f32 %v1668, %v1700
        %v1733 = vadd.f32 %v1669, %v1701
        %v1734 = vadd.f32 %v1670, %v1702
        %v1735 = vadd.f32 %v1671, %v1703
        %v1736 = vadd.f32 %v1672, %v1704
        %v1737 = vadd.f32 %v1673, %v1705
        %v1738 = vadd.f32 %v1674, %v1706
        %v1739 = vadd.f32 %v1675, %v1707
        %v1740 = vadd.f32 %v1676, %v1708
        %v1741 = vadd.f32 %v1677, %v1709
        %v1742 = vadd.f32 %v1678, %v1710
        %v1743 = vadd.f32 %v1679, %v1711
        %v1744 = vadd.f32 %v1680, %v1712
        %v1745 = vadd.f32 %v1681, %v1713
        %v1746 = vadd.f32 %v1682, %v1714
        %v1747 = vadd.f32 %v1683, %v1715
        %v1748 = vadd.f32 %v1684, %v1716
        %v1749 = vadd.f32 %v1685, %v1717
        %v1750 = vadd.f32 %v1686, %v1718
        %v1751 = vadd.f32 %v1687, %v1719
        %v1752 = vadd.f32 %v1688, %v1720
        %1753 = vst [vmem:[%s389] sm:$0xff] %v1721
        %1754 = vst [vmem:[%s389 + $0x8] sm:$0xff] %v1722
        %1755 = vst [vmem:[%s389 + $0x10] sm:$0xff] %v1723
        %1756 = vst [vmem:[%s389 + $0x18] sm:$0xff] %v1724
        %1757 = vst [vmem:[%s389 + $0x20] sm:$0xff] %v1725
        %1758 = vst [vmem:[%s389 + $0x28] sm:$0xff] %v1726
        %1759 = vst [vmem:[%s389 + $0x30] sm:$0xff] %v1727
        %1760 = vst [vmem:[%s389 + $0x38] sm:$0xff] %v1728
        %1761 = vst [vmem:[%s389 + $0x40] sm:$0xff] %v1729
        %1762 = vst [vmem:[%s389 + $0x48] sm:$0xff] %v1730
        %1763 = vst [vmem:[%s389 + $0x50] sm:$0xff] %v1731
        %1764 = vst [vmem:[%s389 + $0x58] sm:$0xff] %v1732
        %1765 = vst [vmem:[%s389 + $0x60] sm:$0xff] %v1733
        %1766 = vst [vmem:[%s389 + $0x68] sm:$0xff] %v1734
        %1767 = vst [vmem:[%s389 + $0x70] sm:$0xff] %v1735
        %1768 = vst [vmem:[%s389 + $0x78] sm:$0xff] %v1736
        %1769 = vst [vmem:[%s389 + $0x80] sm:$0xff] %v1737
        %1770 = vst [vmem:[%s389 + $0x88] sm:$0xff] %v1738
        %1771 = vst [vmem:[%s389 + $0x90] sm:$0xff] %v1739
        %1772 = vst [vmem:[%s389 + $0x98] sm:$0xff] %v1740
        %1773 = vst [vmem:[%s389 + $0xa0] sm:$0xff] %v1741
        %1774 = vst [vmem:[%s389 + $0xa8] sm:$0xff] %v1742
        %1775 = vst [vmem:[%s389 + $0xb0] sm:$0xff] %v1743
        %1776 = vst [vmem:[%s389 + $0xb8] sm:$0xff] %v1744
        %1777 = vst [vmem:[%s389 + $0xc0] sm:$0xff] %v1745
        %1778 = vst [vmem:[%s389 + $0xc8] sm:$0xff] %v1746
        %1779 = vst [vmem:[%s389 + $0xd0] sm:$0xff] %v1747
        %1780 = vst [vmem:[%s389 + $0xd8] sm:$0xff] %v1748
        %1781 = vst [vmem:[%s389 + $0xe0] sm:$0xff] %v1749
        %1782 = vst [vmem:[%s389 + $0xe8] sm:$0xff] %v1750
        %1783 = vst [vmem:[%s389 + $0xf0] sm:$0xff] %v1751
        %1784 = vst [vmem:[%s389 + $0xf8] sm:$0xff] %v1752
        %s1785 = sand.u32 %s229, 1
        %s1786 = scalar_lea.sflag [#allocation3], %s1785
        %s1787 = sand.u32 %s229, 1
        %s1788 = smul.addr %s1787, 256
        %s1789 = scalar_lea.vmem [#allocation2], %s1788
        // Predicated region
        $region49: #{biconvgru_cell.3} parent=47 // pred_check
          %p1790 = pneg %p239
        $region50: #{biconvgru_cell.3} parent=47 // pred_check_branch
          %1792 = sbr.rel (%p1790) target = $region52
        $region51: #{biconvgru_cell.3} parent=47 // pred_region
          %s1793 = smul.u32 32, %s25
          %1795 = vsyncadd %s1786, 0
          %s1796 = sadd.s32 %s26, %s1793
          %s1797 = smul.addr %s1796, 8
          %s1798 = scalar_lea.hbm %s7, %s1797
          %s1799 = sshll.u32 %s1789, 4
          %s1800 = int_to_ptr.vmem [resolvable:$true] %s1799
          %s1801 = sshll.u32 %s1798, 4
          %s1802 = int_to_ptr.hbm [resolvable:$true] %s1801
          %1807 = dma.vmem_to_hbm [thread:$0]  %s1800, 4096, %s1802, %s1786, 128, 128, 8
        $region52: #{biconvgru_cell.3} parent=47 // pred_fallthru
          _
      $region48: #{biconvgru_cell.3} parent=5 // pred_fallthru
        _
      %p1808 = scmp.le.s32.totalorder 2, %s16
      // Predicated region
      $region53: #{biconvgru_cell.3} parent=5 // pred_check
        %p1809 = pneg %p1808
      $region54: #{biconvgru_cell.3} parent=5 // pred_check_branch
        %1811 = sbr.rel (%p1809) target = $region56
      $region55: #{biconvgru_cell.3} parent=5 // pred_region
        %s1812 = ssub.s32 %s16, 2
        // Predicated region
        $region57: #{biconvgru_cell.3} parent=55 // pred_check
          %p1813 = pneg %p245
        $region58: #{biconvgru_cell.3} parent=55 // pred_check_branch
          %1815 = sbr.rel (%p1813) target = $region60
        $region59: #{biconvgru_cell.3} parent=55 // pred_region
          %s1816 = sand.u32 %s230, 1
          %s1817 = scalar_lea.sflag [#allocation3], %s1816
          %s1818 = sand.u32 %s230, 1
          %s1819 = smul.addr %s1818, 256
          %s1820 = scalar_lea.vmem [#allocation2], %s1819
          %1822 = dma.done %s1817, 4096
        $region60: #{biconvgru_cell.3} parent=55 // pred_fallthru
          _
      $region56: #{biconvgru_cell.3} parent=5 // pred_fallthru
        _
    $region6: #{biconvgru_cell.3} parent=1 // loop_footer
      %s20 = sadd.s32 1, %s16
    $region7: #{biconvgru_cell.3} parent=1 // loop_footer_branch
      %15 = sbr.rel target = $region3
    $region8: #{biconvgru_cell.3} parent=1 // loop_exit
      _
    %1823 = vsyncpa [#allocation3], 1
    %s1824 = scalar_lea.sflag [#allocation3], 1
    %1825 = vsyncpa %s1824, 1

</llo_original>
